<compile_context>
chip_gen: v6e
topology: v6e:2x2x1
jax: 0.10.0
libtpu: 0.0.40
codegen_flags: <defaults>
</compile_context>

<pallas_src>
import functools

import jax
import jax.numpy as jnp
from jax.experimental import pallas as pl
from jax.experimental.pallas import tpu as pltpu


def _round_up(v, m):
    return (v + m - 1) // m * m


# --------------------------- fused forward kernel ----------------------------
def _fused_dqn_kernel(p1_ref, w1_ref, b1_ref, w2_ref, b2_ref, w3_ref, b3_ref,
                      fw1_ref, fb1_ref, fw2_ref, fb2_ref, out_ref, *,
                      batch, h1p, h2, h3):
    """Whole SimpleDQN forward on VMEM-resident operands.

    p1:  (m1_pad, 4*8*8*C) bf16  per-row = concat over the 4 stride-2 phases
         (p,q) of that row's 8x8xC conv1 patch; rows ordered (b, oh', ow').
    w1:  (4*8*8*C, 128) bf16 block-diagonal: phase pq patch -> lanes [32pq,32pq+32).
    w2:  (4*128, 64)  bf16, 4 offset blocks, rows ordered (p, q, cin).
    w3:  (9*64, 64)   bf16, 9 offset blocks, rows ordered cin.
    fw1: (h3*h3*64, 512) bf16, rows ordered (oh, ow, cin) (NCHW flatten folded in).
    fw2: (512, 128)   f32, lane-padded from (512, n_actions).
    biases: (1, N) f32.
    """
    f32, bf16 = jnp.float32, jnp.bfloat16
    C1, C2, C3, NH = 32, 64, 64, 512
    n_phase = batch * h1p * h1p

    # ---- conv1 + bias + ReLU: one block-diagonal MXU matmul -----------------
    a1 = jnp.dot(p1_ref[...], w1_ref[...], preferred_element_type=f32)
    a1 = jnp.maximum(a1 + b1_ref[...], 0.0)                  # (m1_pad, 128)
    # Space-to-depth conv1 activation: lanes ordered (phase_p, phase_q, c).
    a1s2d = a1[:n_phase, :].astype(bf16).reshape(batch, h1p, h1p, 4 * C1)

    # ---- conv2 (k=4, s=2) as 4 offset matmuls with K=128 --------------------
    m2 = batch * h2 * h2
    acc2 = jnp.broadcast_to(b2_ref[...], (m2, C2))
    for i in range(2):
        for j in range(2):
            slab = a1s2d[:, i:i + h2, j:j + h2, :].reshape(m2, 4 * C1)
            blk = i * 2 + j
            acc2 = acc2 + jnp.dot(slab,
                                  w2_ref[blk * 4 * C1:(blk + 1) * 4 * C1, :],
                                  preferred_element_type=f32)
    a2 = jnp.maximum(acc2, 0.0).astype(bf16).reshape(batch, h2, h2, C2)

    # ---- conv3 (k=3, s=1) as 9 grid-wide offset matmuls ----------------------
    m3 = batch * h3 * h3
    acc3 = jnp.broadcast_to(b3_ref[...], (m3, C3))
    for i in range(3):
        for j in range(3):
            slab = a2[:, i:i + h3, j:j + h3, :].reshape(m3, C2)
            blk = i * 3 + j
            acc3 = acc3 + jnp.dot(slab,
                                  w3_ref[blk * C2:(blk + 1) * C2, :],
                                  preferred_element_type=f32)
    a3 = jnp.maximum(acc3, 0.0).astype(bf16).reshape(batch, h3, h3, C3)

    # ---- fc1 (+ReLU): h3*h3 per-position dots --------------------------------
    hacc = jnp.broadcast_to(fb1_ref[...], (batch, NH))
    for u in range(h3):
        for v in range(h3):
            pos = a3[:, u:u + 1, v:v + 1, :].reshape(batch, C3)
            posi = u * h3 + v
            hacc = hacc + jnp.dot(pos,
                                  fw1_ref[posi * C3:(posi + 1) * C3, :],
                                  preferred_element_type=f32)
    h = jnp.maximum(hacc, 0.0)                               # (batch, 512) f32

    # ---- fc2 in f32 (output lane-padded to 128; sliced in the wrapper) -------
    q = jnp.dot(h, fw2_ref[...], preferred_element_type=f32) + fb2_ref[...]
    out_ref[...] = q.astype(out_ref.dtype)


# -------- conv1 patch build via per-phase space-to-depth (runs under jit) -----
def _build_conv1_patches(x, *, h1p, m1_pad):
    """x: (B, C, H, W) f32 NCHW -> (m1_pad, 4*8*8*C) bf16.

    Per stride-2 output phase (p,q), conv1 windows don't overlap (stride within
    a phase = 8 = kernel), so a contiguous crop + reshape + transpose IS the
    im2col.  The 4 phase patch blocks are concatenated along features to match
    the block-diagonal w1.
    """
    B, C, H, W = x.shape
    xn = jnp.transpose(x, (0, 2, 3, 1))                      # NHWC
    span = 8 * h1p
    n_phase = B * h1p * h1p
    feats = []
    for p in range(2):
        for q in range(2):
            crop = xn[:, 4 * p:4 * p + span, 4 * q:4 * q + span, :]
            crop = crop.reshape(B, h1p, 8, h1p, 8, C)
            crop = jnp.transpose(crop, (0, 1, 3, 2, 4, 5))   # (B,h1p,h1p,8,8,C)
            feats.append(crop.reshape(n_phase, 8 * 8 * C))
    p1 = jnp.concatenate(feats, axis=-1)                     # (n_phase, 4*64*C)
    p1 = jnp.pad(p1, ((0, m1_pad - n_phase), (0, 0)))
    return p1.astype(jnp.bfloat16)


# ------------------------------- forward --------------------------------------
def simple_dqn_forward(x, kparams, dims):
    """x: (B, C, H, W) f32 (PyTorch NCHW). Returns (B, n_actions) f32."""
    (w1m, b1m, w2m, b2m, w3m, b3m, fw1m, fb1m, fw2m, fb2m) = kparams
    B = x.shape[0]
    h1p, h2, h3 = dims["h1p"], dims["h2"], dims["h3"]
    n_pad = fw2m.shape[1]
    m1_pad = _round_up(B * h1p * h1p, 8)

    p1 = _build_conv1_patches(x, h1p=h1p, m1_pad=m1_pad)
    kernel = functools.partial(_fused_dqn_kernel, batch=B, h1p=h1p, h2=h2, h3=h3)
    operands = (p1, w1m, b1m, w2m, b2m, w3m, b3m, fw1m, fb1m, fw2m, fb2m)

    m2, m3 = B * h2 * h2, B * h3 * h3
    flops = 2 * (m1_pad * w1m.shape[0] * 128 + m2 * 4 * 128 * 64
                 + m3 * 9 * 64 * 64 + B * h3 * h3 * 64 * 512 + B * 512 * 128)
    bytes_accessed = sum(int(op.size) * op.dtype.itemsize for op in operands) \
        + B * n_pad * 4

    # Single grid-less invocation; all operands are full-array VMEM blocks
    # (~1.2 MiB total, fits any generation's VMEM including v7x's 64 MiB).
    q_pad = pl.pallas_call(
        kernel,
        out_shape=jax.ShapeDtypeStruct((B, n_pad), jnp.float32),
        in_specs=[pl.BlockSpec(op.shape, lambda: (0, 0)) for op in operands],
        out_specs=pl.BlockSpec((B, n_pad), lambda: (0, 0)),
        cost_estimate=pl.CostEstimate(flops=flops, transcendentals=0,
                                      bytes_accessed=bytes_accessed),
        compiler_params=pltpu.CompilerParams(vmem_limit_bytes=32 * 1024 * 1024),
    )(*operands)
    return q_pad[:, :dims["n_actions"]]


# -------------------- one-time parameter layout preparation -------------------
def prepare_params(params, input_shape, n_actions):
    (w1, b1, w2, b2, w3, b3, fw1, fb1, fw2, fb2) = params
    C, H, W = input_shape
    assert H == W, "square inputs expected"
    h1 = (H - 8) // 4 + 1
    assert h1 % 2 == 0, "conv1 output size must be even for the stride-2 phase split"
    h2 = (h1 - 4) // 2 + 1
    h3 = (h2 - 3) // 1 + 1
    assert h3 >= 1

    bf16, f32 = jnp.bfloat16, jnp.float32
    K1 = 8 * 8 * C

    # conv1: (OC, Cin, kh, kw) -> rows (kh, kw, cin); block-diagonal over the 4
    # stride-2 phases so one matmul emits the space-to-depth activation.
    w1r = jnp.transpose(w1, (2, 3, 1, 0)).reshape(K1, 32).astype(f32)
    w1m = jnp.zeros((4 * K1, 128), f32)
    for pq in range(4):
        w1m = w1m.at[pq * K1:(pq + 1) * K1, pq * 32:(pq + 1) * 32].set(w1r)
    w1m = w1m.astype(bf16)
    b1m = jnp.tile(b1.astype(f32), 4).reshape(1, 128)

    # conv2: pack per s2d-offset (i,j); rows ordered (p, q, cin) to match the
    # conv1 s2d lane order; kernel position (kh,kw) = (2i+p, 2j+q).
    w2r = jnp.transpose(w2, (2, 3, 1, 0))                    # (kh, kw, cin, oc)
    w2_blocks = []
    for i in range(2):
        for j in range(2):
            blk = w2r[2 * i:2 * i + 2, 2 * j:2 * j + 2, :, :]   # (p, q, cin, oc)
            w2_blocks.append(blk.reshape(2 * 2 * 32, 64))
    w2m = jnp.concatenate(w2_blocks, axis=0).astype(bf16)    # (512, 64)
    b2m = b2.reshape(1, 64).astype(f32)

    # conv3: rows (kh, kw, cin).
    w3m = jnp.transpose(w3, (2, 3, 1, 0)).reshape(3 * 3 * 64, 64).astype(bf16)
    b3m = b3.reshape(1, 64).astype(f32)

    # fc1: fold the PyTorch NCHW flatten into the weight (rows (oh, ow, cin)).
    fw1m = jnp.transpose(fw1.reshape(512, 64, h3, h3), (2, 3, 1, 0))
    fw1m = fw1m.reshape(h3 * h3 * 64, 512).astype(bf16)
    fb1m = fb1.reshape(1, 512).astype(f32)

    # fc2: keep f32, lane-pad n_actions to 128 for a lane-dense output store.
    n_pad = _round_up(max(n_actions, 1), 128)
    fw2m = jnp.zeros((512, n_pad), f32).at[:, :n_actions].set(fw2.T.astype(f32))
    fb2m = jnp.zeros((1, n_pad), f32).at[0, :n_actions].set(fb2.astype(f32))

    kparams = (w1m, b1m, w2m, b2m, w3m, b3m, fw1m, fb1m, fw2m, fb2m)
    dims = {"h1": h1, "h1p": h1 // 2, "h2": h2, "h3": h3, "n_actions": n_actions}
    return kparams, dims


# ------------------------------ reference (XLA) --------------------------------
def _reference_forward(x, params):
    (w1, b1, w2, b2, w3, b3, fw1, fb1, fw2, fb2) = params
    dn = ("NCHW", "OIHW", "NCHW")
    h = jax.lax.conv_general_dilated(x, w1, (4, 4), "VALID", dimension_numbers=dn)
    h = jax.nn.relu(h + b1[None, :, None, None])
    h = jax.lax.conv_general_dilated(h, w2, (2, 2), "VALID", dimension_numbers=dn)
    h = jax.nn.relu(h + b2[None, :, None, None])
    h = jax.lax.conv_general_dilated(h, w3, (1, 1), "VALID", dimension_numbers=dn)
    h = jax.nn.relu(h + b3[None, :, None, None])
    flat = h.reshape(h.shape[0], -1)
    h = jax.nn.relu(flat @ fw1.T + fb1)
    return h @ fw2.T + fb2


# --------------------------------- main ----------------------------------------
if __name__ == "__main__":
    B, C, H, W = 2, 4, 44, 44      # small input consistent with the conv stack
    n_actions = 6

    def _osz(h, k, s):
        return (h - k) // s + 1

    h1 = _osz(H, 8, 4)
    h2 = _osz(h1, 4, 2)
    h3 = _osz(h2, 3, 1)
    conv_out_size = 64 * h3 * h3   # matches SimpleDQN._get_conv_output_size

    key = jax.random.PRNGKey(0)
    keys = jax.random.split(key, 11)

    def u(k, shape, fan_in):
        bound = 1.0 / float(fan_in) ** 0.5
        return jax.random.uniform(k, shape, jnp.float32, -bound, bound)

    # Deterministic PyTorch-style init (uniform +/- 1/sqrt(fan_in)).
    w1 = u(keys[0], (32, C, 8, 8), C * 8 * 8)
    b1 = u(keys[1], (32,), C * 8 * 8)
    w2 = u(keys[2], (64, 32, 4, 4), 32 * 4 * 4)
    b2 = u(keys[3], (64,), 32 * 4 * 4)
    w3 = u(keys[4], (64, 64, 3, 3), 64 * 3 * 3)
    b3 = u(keys[5], (64,), 64 * 3 * 3)
    fw1 = u(keys[6], (512, conv_out_size), conv_out_size)
    fb1 = u(keys[7], (512,), conv_out_size)
    fw2 = u(keys[8], (n_actions, 512), 512)
    fb2 = u(keys[9], (n_actions,), 512)
    params = (w1, b1, w2, b2, w3, b3, fw1, fb1, fw2, fb2)

    x = jax.random.normal(keys[10], (B, C, H, W), jnp.float32)

    # One-time layout prep + jitted fused forward.
    kparams, dims = prepare_params(params, (C, H, W), n_actions)
    forward = jax.jit(functools.partial(simple_dqn_forward, dims=dims))

    out = forward(x, kparams)
    jax.block_until_ready(out)
    assert out.shape == (B, n_actions), out.shape
    assert out.dtype == jnp.float32

    # Numerical check vs. a pure-XLA reference (loose tol: bf16 MXU operands).
    ref = _reference_forward(x, params)
    assert jnp.allclose(out, ref, rtol=5e-2, atol=5e-2), (
        float(jnp.max(jnp.abs(out - ref))))
    print("KERNEL_OK")
</pallas_src>

<mosaic_0001>
module attributes {stable_mosaic.version = 11 : i64} {
  func.func @_fused_dqn_kernel(%arg0: memref<56x1024xbf16, #tpu.memory_space<vmem>>, %arg1: memref<1024x128xbf16, #tpu.memory_space<vmem>>, %arg2: memref<1x128xf32, #tpu.memory_space<vmem>>, %arg3: memref<512x64xbf16, #tpu.memory_space<vmem>>, %arg4: memref<1x64xf32, #tpu.memory_space<vmem>>, %arg5: memref<576x64xbf16, #tpu.memory_space<vmem>>, %arg6: memref<1x64xf32, #tpu.memory_space<vmem>>, %arg7: memref<256x512xbf16, #tpu.memory_space<vmem>>, %arg8: memref<1x512xf32, #tpu.memory_space<vmem>>, %arg9: memref<512x128xf32, #tpu.memory_space<vmem>>, %arg10: memref<1x128xf32, #tpu.memory_space<vmem>>, %arg11: memref<2x128xf32, #tpu.memory_space<vmem>>) attributes {dimension_semantics = [], scalar_prefetch = 0 : i64, scratch_operands = 0 : i64, tpu.core_type = #tpu.core_type<tc>} {
    %c0 = arith.constant 0 : index
    %c0_0 = arith.constant 0 : index
    %0 = vector.load %arg0[%c0, %c0_0] : memref<56x1024xbf16, #tpu.memory_space<vmem>>, vector<56x1024xbf16>
    %c0_1 = arith.constant 0 : index
    %c0_2 = arith.constant 0 : index
    %1 = vector.load %arg1[%c0_1, %c0_2] : memref<1024x128xbf16, #tpu.memory_space<vmem>>, vector<1024x128xbf16>
    %cst = arith.constant dense<0.000000e+00> : vector<56x128xf32>
    %2 = tpu.matmul %0, %1, %cst {dimension_numbers = #tpu.dot_dimension_numbers<[1], [0], [0], [1], [0, 0, 1, 1], [], []>} : vector<56x1024xbf16>, vector<1024x128xbf16>, vector<56x128xf32> -> vector<56x128xf32>
    %c0_3 = arith.constant 0 : index
    %c0_4 = arith.constant 0 : index
    %3 = vector.load %arg2[%c0_3, %c0_4] : memref<1x128xf32, #tpu.memory_space<vmem>>, vector<1x128xf32>
    %4 = vector.broadcast %3 : vector<1x128xf32> to vector<56x128xf32>
    %5 = arith.addf %2, %4 : vector<56x128xf32>
    %cst_5 = arith.constant 0.000000e+00 : f32
    %6 = vector.broadcast %cst_5 : f32 to vector<56x128xf32>
    %7 = arith.maximumf %5, %6 : vector<56x128xf32>
    %8 = vector.extract_strided_slice %7 {offsets = [0, 0], sizes = [50, 128], strides = [1, 1]} : vector<56x128xf32> to vector<50x128xf32>
    %9 = arith.truncf %8 : vector<50x128xf32> to vector<50x128xbf16>
    %10 = vector.shape_cast %9 : vector<50x128xbf16> to vector<2x5x5x128xbf16>
    %c0_6 = arith.constant 0 : index
    %c0_7 = arith.constant 0 : index
    %11 = vector.load %arg4[%c0_6, %c0_7] : memref<1x64xf32, #tpu.memory_space<vmem>>, vector<1x64xf32>
    %12 = vector.shape_cast %11 : vector<1x64xf32> to vector<1x64xf32>
    %13 = vector.broadcast %12 : vector<1x64xf32> to vector<32x64xf32>
    %14 = vector.extract_strided_slice %10 {offsets = [0, 0, 0, 0], sizes = [2, 4, 4, 128], strides = [1, 1, 1, 1]} : vector<2x5x5x128xbf16> to vector<2x4x4x128xbf16>
    %15 = vector.shape_cast %14 : vector<2x4x4x128xbf16> to vector<32x128xbf16>
    %c0_8 = arith.constant 0 : index
    %c0_9 = arith.constant 0 : index
    %16 = vector.load %arg3[%c0_8, %c0_9] : memref<512x64xbf16, #tpu.memory_space<vmem>>, vector<128x64xbf16>
    %cst_10 = arith.constant dense<0.000000e+00> : vector<32x64xf32>
    %17 = tpu.matmul %15, %16, %cst_10 {dimension_numbers = #tpu.dot_dimension_numbers<[1], [0], [0], [1], [0, 0, 1, 1], [], []>} : vector<32x128xbf16>, vector<128x64xbf16>, vector<32x64xf32> -> vector<32x64xf32>
    %18 = arith.addf %13, %17 : vector<32x64xf32>
    %19 = vector.extract_strided_slice %10 {offsets = [0, 0, 1, 0], sizes = [2, 4, 4, 128], strides = [1, 1, 1, 1]} : vector<2x5x5x128xbf16> to vector<2x4x4x128xbf16>
    %20 = vector.shape_cast %19 : vector<2x4x4x128xbf16> to vector<32x128xbf16>
    %c128 = arith.constant 128 : index
    %c0_11 = arith.constant 0 : index
    %21 = vector.load %arg3[%c128, %c0_11] : memref<512x64xbf16, #tpu.memory_space<vmem>>, vector<128x64xbf16>
    %cst_12 = arith.constant dense<0.000000e+00> : vector<32x64xf32>
    %22 = tpu.matmul %20, %21, %cst_12 {dimension_numbers = #tpu.dot_dimension_numbers<[1], [0], [0], [1], [0, 0, 1, 1], [], []>} : vector<32x128xbf16>, vector<128x64xbf16>, vector<32x64xf32> -> vector<32x64xf32>
    %23 = arith.addf %18, %22 : vector<32x64xf32>
    %24 = vector.extract_strided_slice %10 {offsets = [0, 1, 0, 0], sizes = [2, 4, 4, 128], strides = [1, 1, 1, 1]} : vector<2x5x5x128xbf16> to vector<2x4x4x128xbf16>
    %25 = vector.shape_cast %24 : vector<2x4x4x128xbf16> to vector<32x128xbf16>
    %c256 = arith.constant 256 : index
    %c0_13 = arith.constant 0 : index
    %26 = vector.load %arg3[%c256, %c0_13] : memref<512x64xbf16, #tpu.memory_space<vmem>>, vector<128x64xbf16>
    %cst_14 = arith.constant dense<0.000000e+00> : vector<32x64xf32>
    %27 = tpu.matmul %25, %26, %cst_14 {dimension_numbers = #tpu.dot_dimension_numbers<[1], [0], [0], [1], [0, 0, 1, 1], [], []>} : vector<32x128xbf16>, vector<128x64xbf16>, vector<32x64xf32> -> vector<32x64xf32>
    %28 = arith.addf %23, %27 : vector<32x64xf32>
    %29 = vector.extract_strided_slice %10 {offsets = [0, 1, 1, 0], sizes = [2, 4, 4, 128], strides = [1, 1, 1, 1]} : vector<2x5x5x128xbf16> to vector<2x4x4x128xbf16>
    %30 = vector.shape_cast %29 : vector<2x4x4x128xbf16> to vector<32x128xbf16>
    %c384 = arith.constant 384 : index
    %c0_15 = arith.constant 0 : index
    %31 = vector.load %arg3[%c384, %c0_15] : memref<512x64xbf16, #tpu.memory_space<vmem>>, vector<128x64xbf16>
    %cst_16 = arith.constant dense<0.000000e+00> : vector<32x64xf32>
    %32 = tpu.matmul %30, %31, %cst_16 {dimension_numbers = #tpu.dot_dimension_numbers<[1], [0], [0], [1], [0, 0, 1, 1], [], []>} : vector<32x128xbf16>, vector<128x64xbf16>, vector<32x64xf32> -> vector<32x64xf32>
    %33 = arith.addf %28, %32 : vector<32x64xf32>
    %cst_17 = arith.constant 0.000000e+00 : f32
    %34 = vector.broadcast %cst_17 : f32 to vector<32x64xf32>
    %35 = arith.maximumf %33, %34 : vector<32x64xf32>
    %36 = arith.truncf %35 : vector<32x64xf32> to vector<32x64xbf16>
    %37 = vector.shape_cast %36 : vector<32x64xbf16> to vector<2x4x4x64xbf16>
    %c0_18 = arith.constant 0 : index
    %c0_19 = arith.constant 0 : index
    %38 = vector.load %arg6[%c0_18, %c0_19] : memref<1x64xf32, #tpu.memory_space<vmem>>, vector<1x64xf32>
    %39 = vector.shape_cast %38 : vector<1x64xf32> to vector<1x64xf32>
    %40 = vector.broadcast %39 : vector<1x64xf32> to vector<8x64xf32>
    %41 = vector.extract_strided_slice %37 {offsets = [0, 0, 0, 0], sizes = [2, 2, 2, 64], strides = [1, 1, 1, 1]} : vector<2x4x4x64xbf16> to vector<2x2x2x64xbf16>
    %42 = vector.shape_cast %41 : vector<2x2x2x64xbf16> to vector<8x64xbf16>
    %c0_20 = arith.constant 0 : index
    %c0_21 = arith.constant 0 : index
    %43 = vector.load %arg5[%c0_20, %c0_21] : memref<576x64xbf16, #tpu.memory_space<vmem>>, vector<64x64xbf16>
    %cst_22 = arith.constant dense<0.000000e+00> : vector<8x64xf32>
    %44 = tpu.matmul %42, %43, %cst_22 {dimension_numbers = #tpu.dot_dimension_numbers<[1], [0], [0], [1], [0, 0, 1, 1], [], []>} : vector<8x64xbf16>, vector<64x64xbf16>, vector<8x64xf32> -> vector<8x64xf32>
    %45 = arith.addf %40, %44 : vector<8x64xf32>
    %46 = vector.extract_strided_slice %37 {offsets = [0, 0, 1, 0], sizes = [2, 2, 2, 64], strides = [1, 1, 1, 1]} : vector<2x4x4x64xbf16> to vector<2x2x2x64xbf16>
    %47 = vector.shape_cast %46 : vector<2x2x2x64xbf16> to vector<8x64xbf16>
    %c64 = arith.constant 64 : index
    %c0_23 = arith.constant 0 : index
    %48 = vector.load %arg5[%c64, %c0_23] : memref<576x64xbf16, #tpu.memory_space<vmem>>, vector<64x64xbf16>
    %cst_24 = arith.constant dense<0.000000e+00> : vector<8x64xf32>
    %49 = tpu.matmul %47, %48, %cst_24 {dimension_numbers = #tpu.dot_dimension_numbers<[1], [0], [0], [1], [0, 0, 1, 1], [], []>} : vector<8x64xbf16>, vector<64x64xbf16>, vector<8x64xf32> -> vector<8x64xf32>
    %50 = arith.addf %45, %49 : vector<8x64xf32>
    %51 = vector.extract_strided_slice %37 {offsets = [0, 0, 2, 0], sizes = [2, 2, 2, 64], strides = [1, 1, 1, 1]} : vector<2x4x4x64xbf16> to vector<2x2x2x64xbf16>
    %52 = vector.shape_cast %51 : vector<2x2x2x64xbf16> to vector<8x64xbf16>
    %c128_25 = arith.constant 128 : index
    %c0_26 = arith.constant 0 : index
    %53 = vector.load %arg5[%c128_25, %c0_26] : memref<576x64xbf16, #tpu.memory_space<vmem>>, vector<64x64xbf16>
    %cst_27 = arith.constant dense<0.000000e+00> : vector<8x64xf32>
    %54 = tpu.matmul %52, %53, %cst_27 {dimension_numbers = #tpu.dot_dimension_numbers<[1], [0], [0], [1], [0, 0, 1, 1], [], []>} : vector<8x64xbf16>, vector<64x64xbf16>, vector<8x64xf32> -> vector<8x64xf32>
    %55 = arith.addf %50, %54 : vector<8x64xf32>
    %56 = vector.extract_strided_slice %37 {offsets = [0, 1, 0, 0], sizes = [2, 2, 2, 64], strides = [1, 1, 1, 1]} : vector<2x4x4x64xbf16> to vector<2x2x2x64xbf16>
    %57 = vector.shape_cast %56 : vector<2x2x2x64xbf16> to vector<8x64xbf16>
    %c192 = arith.constant 192 : index
    %c0_28 = arith.constant 0 : index
    %58 = vector.load %arg5[%c192, %c0_28] : memref<576x64xbf16, #tpu.memory_space<vmem>>, vector<64x64xbf16>
    %cst_29 = arith.constant dense<0.000000e+00> : vector<8x64xf32>
    %59 = tpu.matmul %57, %58, %cst_29 {dimension_numbers = #tpu.dot_dimension_numbers<[1], [0], [0], [1], [0, 0, 1, 1], [], []>} : vector<8x64xbf16>, vector<64x64xbf16>, vector<8x64xf32> -> vector<8x64xf32>
    %60 = arith.addf %55, %59 : vector<8x64xf32>
    %61 = vector.extract_strided_slice %37 {offsets = [0, 1, 1, 0], sizes = [2, 2, 2, 64], strides = [1, 1, 1, 1]} : vector<2x4x4x64xbf16> to vector<2x2x2x64xbf16>
    %62 = vector.shape_cast %61 : vector<2x2x2x64xbf16> to vector<8x64xbf16>
    %c256_30 = arith.constant 256 : index
    %c0_31 = arith.constant 0 : index
    %63 = vector.load %arg5[%c256_30, %c0_31] : memref<576x64xbf16, #tpu.memory_space<vmem>>, vector<64x64xbf16>
    %cst_32 = arith.constant dense<0.000000e+00> : vector<8x64xf32>
    %64 = tpu.matmul %62, %63, %cst_32 {dimension_numbers = #tpu.dot_dimension_numbers<[1], [0], [0], [1], [0, 0, 1, 1], [], []>} : vector<8x64xbf16>, vector<64x64xbf16>, vector<8x64xf32> -> vector<8x64xf32>
    %65 = arith.addf %60, %64 : vector<8x64xf32>
    %66 = vector.extract_strided_slice %37 {offsets = [0, 1, 2, 0], sizes = [2, 2, 2, 64], strides = [1, 1, 1, 1]} : vector<2x4x4x64xbf16> to vector<2x2x2x64xbf16>
    %67 = vector.shape_cast %66 : vector<2x2x2x64xbf16> to vector<8x64xbf16>
    %c320 = arith.constant 320 : index
    %c0_33 = arith.constant 0 : index
    %68 = vector.load %arg5[%c320, %c0_33] : memref<576x64xbf16, #tpu.memory_space<vmem>>, vector<64x64xbf16>
    %cst_34 = arith.constant dense<0.000000e+00> : vector<8x64xf32>
    %69 = tpu.matmul %67, %68, %cst_34 {dimension_numbers = #tpu.dot_dimension_numbers<[1], [0], [0], [1], [0, 0, 1, 1], [], []>} : vector<8x64xbf16>, vector<64x64xbf16>, vector<8x64xf32> -> vector<8x64xf32>
    %70 = arith.addf %65, %69 : vector<8x64xf32>
    %71 = vector.extract_strided_slice %37 {offsets = [0, 2, 0, 0], sizes = [2, 2, 2, 64], strides = [1, 1, 1, 1]} : vector<2x4x4x64xbf16> to vector<2x2x2x64xbf16>
    %72 = vector.shape_cast %71 : vector<2x2x2x64xbf16> to vector<8x64xbf16>
    %c384_35 = arith.constant 384 : index
    %c0_36 = arith.constant 0 : index
    %73 = vector.load %arg5[%c384_35, %c0_36] : memref<576x64xbf16, #tpu.memory_space<vmem>>, vector<64x64xbf16>
    %cst_37 = arith.constant dense<0.000000e+00> : vector<8x64xf32>
    %74 = tpu.matmul %72, %73, %cst_37 {dimension_numbers = #tpu.dot_dimension_numbers<[1], [0], [0], [1], [0, 0, 1, 1], [], []>} : vector<8x64xbf16>, vector<64x64xbf16>, vector<8x64xf32> -> vector<8x64xf32>
    %75 = arith.addf %70, %74 : vector<8x64xf32>
    %76 = vector.extract_strided_slice %37 {offsets = [0, 2, 1, 0], sizes = [2, 2, 2, 64], strides = [1, 1, 1, 1]} : vector<2x4x4x64xbf16> to vector<2x2x2x64xbf16>
    %77 = vector.shape_cast %76 : vector<2x2x2x64xbf16> to vector<8x64xbf16>
    %c448 = arith.constant 448 : index
    %c0_38 = arith.constant 0 : index
    %78 = vector.load %arg5[%c448, %c0_38] : memref<576x64xbf16, #tpu.memory_space<vmem>>, vector<64x64xbf16>
    %cst_39 = arith.constant dense<0.000000e+00> : vector<8x64xf32>
    %79 = tpu.matmul %77, %78, %cst_39 {dimension_numbers = #tpu.dot_dimension_numbers<[1], [0], [0], [1], [0, 0, 1, 1], [], []>} : vector<8x64xbf16>, vector<64x64xbf16>, vector<8x64xf32> -> vector<8x64xf32>
    %80 = arith.addf %75, %79 : vector<8x64xf32>
    %81 = vector.extract_strided_slice %37 {offsets = [0, 2, 2, 0], sizes = [2, 2, 2, 64], strides = [1, 1, 1, 1]} : vector<2x4x4x64xbf16> to vector<2x2x2x64xbf16>
    %82 = vector.shape_cast %81 : vector<2x2x2x64xbf16> to vector<8x64xbf16>
    %c512 = arith.constant 512 : index
    %c0_40 = arith.constant 0 : index
    %83 = vector.load %arg5[%c512, %c0_40] : memref<576x64xbf16, #tpu.memory_space<vmem>>, vector<64x64xbf16>
    %cst_41 = arith.constant dense<0.000000e+00> : vector<8x64xf32>
    %84 = tpu.matmul %82, %83, %cst_41 {dimension_numbers = #tpu.dot_dimension_numbers<[1], [0], [0], [1], [0, 0, 1, 1], [], []>} : vector<8x64xbf16>, vector<64x64xbf16>, vector<8x64xf32> -> vector<8x64xf32>
    %85 = arith.addf %80, %84 : vector<8x64xf32>
    %cst_42 = arith.constant 0.000000e+00 : f32
    %86 = vector.broadcast %cst_42 : f32 to vector<8x64xf32>
    %87 = arith.maximumf %85, %86 : vector<8x64xf32>
    %88 = arith.truncf %87 : vector<8x64xf32> to vector<8x64xbf16>
    %89 = vector.shape_cast %88 : vector<8x64xbf16> to vector<2x2x2x64xbf16>
    %c0_43 = arith.constant 0 : index
    %c0_44 = arith.constant 0 : index
    %90 = vector.load %arg8[%c0_43, %c0_44] : memref<1x512xf32, #tpu.memory_space<vmem>>, vector<1x512xf32>
    %91 = vector.shape_cast %90 : vector<1x512xf32> to vector<1x512xf32>
    %92 = vector.broadcast %91 : vector<1x512xf32> to vector<2x512xf32>
    %93 = vector.extract_strided_slice %89 {offsets = [0, 0, 0, 0], sizes = [2, 1, 1, 64], strides = [1, 1, 1, 1]} : vector<2x2x2x64xbf16> to vector<2x1x1x64xbf16>
    %94 = vector.shape_cast %93 : vector<2x1x1x64xbf16> to vector<2x64xbf16>
    %c0_45 = arith.constant 0 : index
    %c0_46 = arith.constant 0 : index
    %95 = vector.load %arg7[%c0_45, %c0_46] : memref<256x512xbf16, #tpu.memory_space<vmem>>, vector<64x512xbf16>
    %cst_47 = arith.constant dense<0.000000e+00> : vector<2x512xf32>
    %96 = tpu.matmul %94, %95, %cst_47 {dimension_numbers = #tpu.dot_dimension_numbers<[1], [0], [0], [1], [0, 0, 1, 1], [], []>} : vector<2x64xbf16>, vector<64x512xbf16>, vector<2x512xf32> -> vector<2x512xf32>
    %97 = arith.addf %92, %96 : vector<2x512xf32>
    %98 = vector.extract_strided_slice %89 {offsets = [0, 0, 1, 0], sizes = [2, 1, 1, 64], strides = [1, 1, 1, 1]} : vector<2x2x2x64xbf16> to vector<2x1x1x64xbf16>
    %99 = vector.shape_cast %98 : vector<2x1x1x64xbf16> to vector<2x64xbf16>
    %c64_48 = arith.constant 64 : index
    %c0_49 = arith.constant 0 : index
    %100 = vector.load %arg7[%c64_48, %c0_49] : memref<256x512xbf16, #tpu.memory_space<vmem>>, vector<64x512xbf16>
    %cst_50 = arith.constant dense<0.000000e+00> : vector<2x512xf32>
    %101 = tpu.matmul %99, %100, %cst_50 {dimension_numbers = #tpu.dot_dimension_numbers<[1], [0], [0], [1], [0, 0, 1, 1], [], []>} : vector<2x64xbf16>, vector<64x512xbf16>, vector<2x512xf32> -> vector<2x512xf32>
    %102 = arith.addf %97, %101 : vector<2x512xf32>
    %103 = vector.extract_strided_slice %89 {offsets = [0, 1, 0, 0], sizes = [2, 1, 1, 64], strides = [1, 1, 1, 1]} : vector<2x2x2x64xbf16> to vector<2x1x1x64xbf16>
    %104 = vector.shape_cast %103 : vector<2x1x1x64xbf16> to vector<2x64xbf16>
    %c128_51 = arith.constant 128 : index
    %c0_52 = arith.constant 0 : index
    %105 = vector.load %arg7[%c128_51, %c0_52] : memref<256x512xbf16, #tpu.memory_space<vmem>>, vector<64x512xbf16>
    %cst_53 = arith.constant dense<0.000000e+00> : vector<2x512xf32>
    %106 = tpu.matmul %104, %105, %cst_53 {dimension_numbers = #tpu.dot_dimension_numbers<[1], [0], [0], [1], [0, 0, 1, 1], [], []>} : vector<2x64xbf16>, vector<64x512xbf16>, vector<2x512xf32> -> vector<2x512xf32>
    %107 = arith.addf %102, %106 : vector<2x512xf32>
    %108 = vector.extract_strided_slice %89 {offsets = [0, 1, 1, 0], sizes = [2, 1, 1, 64], strides = [1, 1, 1, 1]} : vector<2x2x2x64xbf16> to vector<2x1x1x64xbf16>
    %109 = vector.shape_cast %108 : vector<2x1x1x64xbf16> to vector<2x64xbf16>
    %c192_54 = arith.constant 192 : index
    %c0_55 = arith.constant 0 : index
    %110 = vector.load %arg7[%c192_54, %c0_55] : memref<256x512xbf16, #tpu.memory_space<vmem>>, vector<64x512xbf16>
    %cst_56 = arith.constant dense<0.000000e+00> : vector<2x512xf32>
    %111 = tpu.matmul %109, %110, %cst_56 {dimension_numbers = #tpu.dot_dimension_numbers<[1], [0], [0], [1], [0, 0, 1, 1], [], []>} : vector<2x64xbf16>, vector<64x512xbf16>, vector<2x512xf32> -> vector<2x512xf32>
    %112 = arith.addf %107, %111 : vector<2x512xf32>
    %cst_57 = arith.constant 0.000000e+00 : f32
    %113 = vector.broadcast %cst_57 : f32 to vector<2x512xf32>
    %114 = arith.maximumf %112, %113 : vector<2x512xf32>
    %c0_58 = arith.constant 0 : index
    %c0_59 = arith.constant 0 : index
    %115 = vector.load %arg9[%c0_58, %c0_59] : memref<512x128xf32, #tpu.memory_space<vmem>>, vector<512x128xf32>
    %cst_60 = arith.constant dense<0.000000e+00> : vector<2x128xf32>
    %116 = tpu.matmul %114, %115, %cst_60 {dimension_numbers = #tpu.dot_dimension_numbers<[1], [0], [0], [1], [0, 0, 1, 1], [], []>} : vector<2x512xf32>, vector<512x128xf32>, vector<2x128xf32> -> vector<2x128xf32>
    %c0_61 = arith.constant 0 : index
    %c0_62 = arith.constant 0 : index
    %117 = vector.load %arg10[%c0_61, %c0_62] : memref<1x128xf32, #tpu.memory_space<vmem>>, vector<1x128xf32>
    %118 = vector.broadcast %117 : vector<1x128xf32> to vector<2x128xf32>
    %119 = arith.addf %116, %118 : vector<2x128xf32>
    %c0_63 = arith.constant 0 : index
    %c0_64 = arith.constant 0 : index
    %120 = vector.load %arg11[%c0_63, %c0_64] : memref<2x128xf32, #tpu.memory_space<vmem>>, vector<2x128xf32>
    tpu.vector_store %arg11[%c0_63, %c0_64], %119 {strides = array<i32>} : memref<2x128xf32, #tpu.memory_space<vmem>>, vector<2x128xf32>,
    return
  }
}

</mosaic_0001>

<llo_original>
// kernel: simple_dqn_forward.1
$region0: #{simple_dqn_forward.1}
  #allocation0 [shape = 'u32[]', space=smem, size = 0x4, offset = 0x4, fixed_abs, tag = 'smem constant byte address 0x4 - core index']
  #allocation1 [shape = 'u32[144,128]{1,0:T(1,128)}', space=vmem, size = 0x12000, scoped, tag = 'internal scratch']
  %s0 = inlined_call_operand.vmem [shape: bf16[56,1024], index: 0, kind: input, shape index: {}]
  %s1 = inlined_call_operand.vmem [shape: bf16[1024,128], index: 1, kind: input, shape index: {}]
  %s2 = inlined_call_operand.vmem [shape: f32[1,128], index: 2, kind: input, shape index: {}]
  %s3 = inlined_call_operand.vmem [shape: bf16[512,64], index: 3, kind: input, shape index: {}]
  %s4 = inlined_call_operand.vmem [shape: f32[1,64], index: 4, kind: input, shape index: {}]
  %s5 = inlined_call_operand.vmem [shape: bf16[576,64], index: 5, kind: input, shape index: {}]
  %s6 = inlined_call_operand.vmem [shape: f32[1,64], index: 6, kind: input, shape index: {}]
  %s7 = inlined_call_operand.vmem [shape: bf16[256,512], index: 7, kind: input, shape index: {}]
  %s8 = inlined_call_operand.vmem [shape: f32[1,512], index: 8, kind: input, shape index: {}]
  %s9 = inlined_call_operand.vmem [shape: f32[512,128], index: 9, kind: input, shape index: {}]
  %s10 = inlined_call_operand.vmem [shape: f32[1,128], index: 10, kind: input, shape index: {}]
  %s11 = inlined_call_operand.hbm [shape: f32[2,128], index: 11, kind: output, shape index: {}]
  %s12 = sld [smem:[#allocation0]]
  $region54: #{simple_dqn_forward.1} parent=0
    _
  %s14 = ssub.s32 1, %s12
  %s15 = scalar_select 0, %s14, %s12
  $region1: #{simple_dqn_forward.1} parent=0
    #allocation2 [shape = 'u8[1024]{0}', space=vmem, size = 0x400, scoped, tag = 'output window, operand 0, single buffered']
    #allocation3 [shape = 's32[1]{0}', space=sflag, size = 0x4, scoped, tag = 'scoped memory for simple_dqn_forward.1']
    %16 = vsyncpa [#allocation3], 0
    // Predicated region
    $region2: #{simple_dqn_forward.1} parent=1 // pred_check
      _
    $region3: #{simple_dqn_forward.1} parent=1 // pred_check_branch
      %18 = sbr.rel (0) target = $region5
    $region4: #{simple_dqn_forward.1} parent=1 // pred_region
      _
    $region5: #{simple_dqn_forward.1} parent=1 // pred_fallthru
      _
    // Predicated region
    $region6: #{simple_dqn_forward.1} parent=1 // pred_check
      _
    $region7: #{simple_dqn_forward.1} parent=1 // pred_check_branch
      %20 = sbr.rel (0) target = $region9
    $region8: #{simple_dqn_forward.1} parent=1 // pred_region
      _
    $region9: #{simple_dqn_forward.1} parent=1 // pred_fallthru
      _
    // Predicated region
    $region10: #{simple_dqn_forward.1} parent=1 // pred_check
      _
    $region11: #{simple_dqn_forward.1} parent=1 // pred_check_branch
      %22 = sbr.rel (0) target = $region13
    $region12: #{simple_dqn_forward.1} parent=1 // pred_region
      _
    $region13: #{simple_dqn_forward.1} parent=1 // pred_fallthru
      _
    // Predicated region
    $region14: #{simple_dqn_forward.1} parent=1 // pred_check
      _
    $region15: #{simple_dqn_forward.1} parent=1 // pred_check_branch
      %24 = sbr.rel (0) target = $region17
    $region16: #{simple_dqn_forward.1} parent=1 // pred_region
      _
    $region17: #{simple_dqn_forward.1} parent=1 // pred_fallthru
      _
    // Predicated region
    $region18: #{simple_dqn_forward.1} parent=1 // pred_check
      _
    $region19: #{simple_dqn_forward.1} parent=1 // pred_check_branch
      %26 = sbr.rel (0) target = $region21
    $region20: #{simple_dqn_forward.1} parent=1 // pred_region
      _
    $region21: #{simple_dqn_forward.1} parent=1 // pred_fallthru
      _
    // Predicated region
    $region22: #{simple_dqn_forward.1} parent=1 // pred_check
      _
    $region23: #{simple_dqn_forward.1} parent=1 // pred_check_branch
      %28 = sbr.rel (0) target = $region25
    $region24: #{simple_dqn_forward.1} parent=1 // pred_region
      _
    $region25: #{simple_dqn_forward.1} parent=1 // pred_fallthru
      _
    // Predicated region
    $region26: #{simple_dqn_forward.1} parent=1 // pred_check
      _
    $region27: #{simple_dqn_forward.1} parent=1 // pred_check_branch
      %30 = sbr.rel (0) target = $region29
    $region28: #{simple_dqn_forward.1} parent=1 // pred_region
      _
    $region29: #{simple_dqn_forward.1} parent=1 // pred_fallthru
      _
    // Predicated region
    $region30: #{simple_dqn_forward.1} parent=1 // pred_check
      _
    $region31: #{simple_dqn_forward.1} parent=1 // pred_check_branch
      %32 = sbr.rel (0) target = $region33
    $region32: #{simple_dqn_forward.1} parent=1 // pred_region
      _
    $region33: #{simple_dqn_forward.1} parent=1 // pred_fallthru
      _
    // Predicated region
    $region34: #{simple_dqn_forward.1} parent=1 // pred_check
      _
    $region35: #{simple_dqn_forward.1} parent=1 // pred_check_branch
      %34 = sbr.rel (0) target = $region37
    $region36: #{simple_dqn_forward.1} parent=1 // pred_region
      _
    $region37: #{simple_dqn_forward.1} parent=1 // pred_fallthru
      _
    // Predicated region
    $region38: #{simple_dqn_forward.1} parent=1 // pred_check
      _
    $region39: #{simple_dqn_forward.1} parent=1 // pred_check_branch
      %36 = sbr.rel (0) target = $region41
    $region40: #{simple_dqn_forward.1} parent=1 // pred_region
      _
    $region41: #{simple_dqn_forward.1} parent=1 // pred_fallthru
      _
    // Predicated region
    $region42: #{simple_dqn_forward.1} parent=1 // pred_check
      _
    $region43: #{simple_dqn_forward.1} parent=1 // pred_check_branch
      %38 = sbr.rel (0) target = $region45
    $region44: #{simple_dqn_forward.1} parent=1 // pred_region
      _
    $region45: #{simple_dqn_forward.1} parent=1 // pred_fallthru
      _
    %v40 = vld [vmem:[%s0] sm:$0xff]
    %v41 = vld [vmem:[%s0 + $0x8] sm:$0xff]
    %v42 = vld [vmem:[%s0 + $0x10] sm:$0xff]
    %v43 = vld [vmem:[%s0 + $0x18] sm:$0xff]
    %v44 = vld [vmem:[%s0 + $0x20] sm:$0xff]
    %v45 = vld [vmem:[%s0 + $0x28] sm:$0xff]
    %v46 = vld [vmem:[%s0 + $0x30] sm:$0xff]
    %v47 = vld [vmem:[%s0 + $0x38] sm:$0xff]
    %v48 = vld [vmem:[%s0 + $0x40] sm:$0xff]
    %v49 = vld [vmem:[%s0 + $0x48] sm:$0xff]
    %v50 = vld [vmem:[%s0 + $0x50] sm:$0xff]
    %v51 = vld [vmem:[%s0 + $0x58] sm:$0xff]
    %v52 = vld [vmem:[%s0 + $0x60] sm:$0xff]
    %v53 = vld [vmem:[%s0 + $0x68] sm:$0xff]
    %v54 = vld [vmem:[%s0 + $0x70] sm:$0xff]
    %v55 = vld [vmem:[%s0 + $0x78] sm:$0xff]
    %v56 = vld [vmem:[%s0 + $0x80] sm:$0xff]
    %v57 = vld [vmem:[%s0 + $0x88] sm:$0xff]
    %v58 = vld [vmem:[%s0 + $0x90] sm:$0xff]
    %v59 = vld [vmem:[%s0 + $0x98] sm:$0xff]
    %v60 = vld [vmem:[%s0 + $0xa0] sm:$0xff]
    %v61 = vld [vmem:[%s0 + $0xa8] sm:$0xff]
    %v62 = vld [vmem:[%s0 + $0xb0] sm:$0xff]
    %v63 = vld [vmem:[%s0 + $0xb8] sm:$0xff]
    %v64 = vld [vmem:[%s0 + $0xc0] sm:$0xff]
    %v65 = vld [vmem:[%s0 + $0xc8] sm:$0xff]
    %v66 = vld [vmem:[%s0 + $0xd0] sm:$0xff]
    %v67 = vld [vmem:[%s0 + $0xd8] sm:$0xff]
    %v68 = vld [vmem:[%s1] sm:$0xf]
    %v69 = vld [vmem:[%s1 + $0x4] sm:$0xf]
    %v70 = vld [vmem:[%s1 + $0x8] sm:$0xf]
    %v71 = vld [vmem:[%s1 + $0xc] sm:$0xf]
    %v72 = vld [vmem:[%s1 + $0x10] sm:$0xf]
    %v73 = vld [vmem:[%s1 + $0x14] sm:$0xf]
    %v74 = vld [vmem:[%s1 + $0x18] sm:$0xf]
    %v75 = vld [vmem:[%s1 + $0x1c] sm:$0xf]
    %v76 = vld [vmem:[%s1 + $0x20] sm:$0xf]
    %v77 = vld [vmem:[%s1 + $0x24] sm:$0xf]
    %v78 = vld [vmem:[%s1 + $0x28] sm:$0xf]
    %v79 = vld [vmem:[%s1 + $0x2c] sm:$0xf]
    %v80 = vld [vmem:[%s1 + $0x30] sm:$0xf]
    %v81 = vld [vmem:[%s1 + $0x34] sm:$0xf]
    %v82 = vld [vmem:[%s1 + $0x38] sm:$0xf]
    %v83 = vld [vmem:[%s1 + $0x3c] sm:$0xf]
    %v84 = vld [vmem:[%s1 + $0x40] sm:$0xf]
    %v85 = vld [vmem:[%s1 + $0x44] sm:$0xf]
    %v86 = vld [vmem:[%s1 + $0x48] sm:$0xf]
    %v87 = vld [vmem:[%s1 + $0x4c] sm:$0xf]
    %v88 = vld [vmem:[%s1 + $0x50] sm:$0xf]
    %v89 = vld [vmem:[%s1 + $0x54] sm:$0xf]
    %v90 = vld [vmem:[%s1 + $0x58] sm:$0xf]
    %v91 = vld [vmem:[%s1 + $0x5c] sm:$0xf]
    %v92 = vld [vmem:[%s1 + $0x60] sm:$0xf]
    %v93 = vld [vmem:[%s1 + $0x64] sm:$0xf]
    %v94 = vld [vmem:[%s1 + $0x68] sm:$0xf]
    %v95 = vld [vmem:[%s1 + $0x6c] sm:$0xf]
    %v96 = vld [vmem:[%s1 + $0x70] sm:$0xf]
    %v97 = vld [vmem:[%s1 + $0x74] sm:$0xf]
    %v98 = vld [vmem:[%s1 + $0x78] sm:$0xf]
    %v99 = vld [vmem:[%s1 + $0x7c] sm:$0xf]
    %v100 = vld [vmem:[%s1 + $0x80] sm:$0xf]
    %v101 = vld [vmem:[%s1 + $0x84] sm:$0xf]
    %v102 = vld [vmem:[%s1 + $0x88] sm:$0xf]
    %v103 = vld [vmem:[%s1 + $0x8c] sm:$0xf]
    %v104 = vld [vmem:[%s1 + $0x90] sm:$0xf]
    %v105 = vld [vmem:[%s1 + $0x94] sm:$0xf]
    %v106 = vld [vmem:[%s1 + $0x98] sm:$0xf]
    %v107 = vld [vmem:[%s1 + $0x9c] sm:$0xf]
    %v108 = vld [vmem:[%s1 + $0xa0] sm:$0xf]
    %v109 = vld [vmem:[%s1 + $0xa4] sm:$0xf]
    %v110 = vld [vmem:[%s1 + $0xa8] sm:$0xf]
    %v111 = vld [vmem:[%s1 + $0xac] sm:$0xf]
    %v112 = vld [vmem:[%s1 + $0xb0] sm:$0xf]
    %v113 = vld [vmem:[%s1 + $0xb4] sm:$0xf]
    %v114 = vld [vmem:[%s1 + $0xb8] sm:$0xf]
    %v115 = vld [vmem:[%s1 + $0xbc] sm:$0xf]
    %v116 = vld [vmem:[%s1 + $0xc0] sm:$0xf]
    %v117 = vld [vmem:[%s1 + $0xc4] sm:$0xf]
    %v118 = vld [vmem:[%s1 + $0xc8] sm:$0xf]
    %v119 = vld [vmem:[%s1 + $0xcc] sm:$0xf]
    %v120 = vld [vmem:[%s1 + $0xd0] sm:$0xf]
    %v121 = vld [vmem:[%s1 + $0xd4] sm:$0xf]
    %v122 = vld [vmem:[%s1 + $0xd8] sm:$0xf]
    %v123 = vld [vmem:[%s1 + $0xdc] sm:$0xf]
    %v124 = vld [vmem:[%s1 + $0xe0] sm:$0xf]
    %v125 = vld [vmem:[%s1 + $0xe4] sm:$0xf]
    %v126 = vld [vmem:[%s1 + $0xe8] sm:$0xf]
    %v127 = vld [vmem:[%s1 + $0xec] sm:$0xf]
    %v128 = vld [vmem:[%s1 + $0xf0] sm:$0xf]
    %v129 = vld [vmem:[%s1 + $0xf4] sm:$0xf]
    %v130 = vld [vmem:[%s1 + $0xf8] sm:$0xf]
    %v131 = vld [vmem:[%s1 + $0xfc] sm:$0xf]
    %v132 = vld [vmem:[%s1 + $0x100] sm:$0xf]
    %v133 = vld [vmem:[%s1 + $0x104] sm:$0xf]
    %v134 = vld [vmem:[%s1 + $0x108] sm:$0xf]
    %v135 = vld [vmem:[%s1 + $0x10c] sm:$0xf]
    %v136 = vld [vmem:[%s1 + $0x110] sm:$0xf]
    %v137 = vld [vmem:[%s1 + $0x114] sm:$0xf]
    %v138 = vld [vmem:[%s1 + $0x118] sm:$0xf]
    %v139 = vld [vmem:[%s1 + $0x11c] sm:$0xf]
    %v140 = vld [vmem:[%s1 + $0x120] sm:$0xf]
    %v141 = vld [vmem:[%s1 + $0x124] sm:$0xf]
    %v142 = vld [vmem:[%s1 + $0x128] sm:$0xf]
    %v143 = vld [vmem:[%s1 + $0x12c] sm:$0xf]
    %v144 = vld [vmem:[%s1 + $0x130] sm:$0xf]
    %v145 = vld [vmem:[%s1 + $0x134] sm:$0xf]
    %v146 = vld [vmem:[%s1 + $0x138] sm:$0xf]
    %v147 = vld [vmem:[%s1 + $0x13c] sm:$0xf]
    %v148 = vld [vmem:[%s1 + $0x140] sm:$0xf]
    %v149 = vld [vmem:[%s1 + $0x144] sm:$0xf]
    %v150 = vld [vmem:[%s1 + $0x148] sm:$0xf]
    %v151 = vld [vmem:[%s1 + $0x14c] sm:$0xf]
    %v152 = vld [vmem:[%s1 + $0x150] sm:$0xf]
    %v153 = vld [vmem:[%s1 + $0x154] sm:$0xf]
    %v154 = vld [vmem:[%s1 + $0x158] sm:$0xf]
    %v155 = vld [vmem:[%s1 + $0x15c] sm:$0xf]
    %v156 = vld [vmem:[%s1 + $0x160] sm:$0xf]
    %v157 = vld [vmem:[%s1 + $0x164] sm:$0xf]
    %v158 = vld [vmem:[%s1 + $0x168] sm:$0xf]
    %v159 = vld [vmem:[%s1 + $0x16c] sm:$0xf]
    %v160 = vld [vmem:[%s1 + $0x170] sm:$0xf]
    %v161 = vld [vmem:[%s1 + $0x174] sm:$0xf]
    %v162 = vld [vmem:[%s1 + $0x178] sm:$0xf]
    %v163 = vld [vmem:[%s1 + $0x17c] sm:$0xf]
    %v164 = vld [vmem:[%s1 + $0x180] sm:$0xf]
    %v165 = vld [vmem:[%s1 + $0x184] sm:$0xf]
    %v166 = vld [vmem:[%s1 + $0x188] sm:$0xf]
    %v167 = vld [vmem:[%s1 + $0x18c] sm:$0xf]
    %v168 = vld [vmem:[%s1 + $0x190] sm:$0xf]
    %v169 = vld [vmem:[%s1 + $0x194] sm:$0xf]
    %v170 = vld [vmem:[%s1 + $0x198] sm:$0xf]
    %v171 = vld [vmem:[%s1 + $0x19c] sm:$0xf]
    %v172 = vld [vmem:[%s1 + $0x1a0] sm:$0xf]
    %v173 = vld [vmem:[%s1 + $0x1a4] sm:$0xf]
    %v174 = vld [vmem:[%s1 + $0x1a8] sm:$0xf]
    %v175 = vld [vmem:[%s1 + $0x1ac] sm:$0xf]
    %v176 = vld [vmem:[%s1 + $0x1b0] sm:$0xf]
    %v177 = vld [vmem:[%s1 + $0x1b4] sm:$0xf]
    %v178 = vld [vmem:[%s1 + $0x1b8] sm:$0xf]
    %v179 = vld [vmem:[%s1 + $0x1bc] sm:$0xf]
    %v180 = vld [vmem:[%s1 + $0x1c0] sm:$0xf]
    %v181 = vld [vmem:[%s1 + $0x1c4] sm:$0xf]
    %v182 = vld [vmem:[%s1 + $0x1c8] sm:$0xf]
    %v183 = vld [vmem:[%s1 + $0x1cc] sm:$0xf]
    %v184 = vld [vmem:[%s1 + $0x1d0] sm:$0xf]
    %v185 = vld [vmem:[%s1 + $0x1d4] sm:$0xf]
    %v186 = vld [vmem:[%s1 + $0x1d8] sm:$0xf]
    %v187 = vld [vmem:[%s1 + $0x1dc] sm:$0xf]
    %v188 = vld [vmem:[%s1 + $0x1e0] sm:$0xf]
    %v189 = vld [vmem:[%s1 + $0x1e4] sm:$0xf]
    %v190 = vld [vmem:[%s1 + $0x1e8] sm:$0xf]
    %v191 = vld [vmem:[%s1 + $0x1ec] sm:$0xf]
    %v192 = vld [vmem:[%s1 + $0x1f0] sm:$0xf]
    %v193 = vld [vmem:[%s1 + $0x1f4] sm:$0xf]
    %v194 = vld [vmem:[%s1 + $0x1f8] sm:$0xf]
    %v195 = vld [vmem:[%s1 + $0x1fc] sm:$0xf]
    %v196 = vld [vmem:[%s2] sm:$0x1]
    %v198 = vlaneseq
    %v199 = vshrl.u32 %v198, 7
    %v200 = vsub.s32 0, %v199
    %v201 = vrot.slane %v196, %v200
    %v231 = vunpack.c.l.b16 %v40
    %v232 = vunpack.c.h.b16 %v40
    %v233 = vunpack.c.l.b16 %v41
    %v234 = vunpack.c.h.b16 %v41
    %v235 = vunpack.c.l.b16 %v42
    %v236 = vunpack.c.h.b16 %v42
    %v237 = vunpack.c.l.b16 %v43
    %v238 = vunpack.c.h.b16 %v43
    %v239 = vunpack.c.l.b16 %v44
    %v240 = vunpack.c.h.b16 %v44
    %v241 = vunpack.c.l.b16 %v45
    %v242 = vunpack.c.h.b16 %v45
    %v243 = vunpack.c.l.b16 %v46
    %v244 = vunpack.c.h.b16 %v46
    %v245 = vunpack.c.l.b16 %v47
    %v246 = vunpack.c.h.b16 %v47
    %v247 = vunpack.c.l.b16 %v48
    %v248 = vunpack.c.h.b16 %v48
    %v249 = vunpack.c.l.b16 %v49
    %v250 = vunpack.c.h.b16 %v49
    %v251 = vunpack.c.l.b16 %v50
    %v252 = vunpack.c.h.b16 %v50
    %v253 = vunpack.c.l.b16 %v51
    %v254 = vunpack.c.h.b16 %v51
    %v255 = vunpack.c.l.b16 %v52
    %v256 = vunpack.c.h.b16 %v52
    %v257 = vunpack.c.l.b16 %v53
    %v258 = vunpack.c.h.b16 %v53
    %v259 = vunpack.c.l.b16 %v54
    %v260 = vunpack.c.h.b16 %v54
    %v261 = vunpack.c.l.b16 %v55
    %v262 = vunpack.c.h.b16 %v55
    %v263 = vunpack.c.l.b16 %v56
    %v264 = vunpack.c.h.b16 %v56
    %v265 = vunpack.c.l.b16 %v57
    %v266 = vunpack.c.h.b16 %v57
    %v267 = vunpack.c.l.b16 %v58
    %v268 = vunpack.c.h.b16 %v58
    %v269 = vunpack.c.l.b16 %v59
    %v270 = vunpack.c.h.b16 %v59
    %v271 = vunpack.c.l.b16 %v60
    %v272 = vunpack.c.h.b16 %v60
    %v273 = vunpack.c.l.b16 %v61
    %v274 = vunpack.c.h.b16 %v61
    %v275 = vunpack.c.l.b16 %v62
    %v276 = vunpack.c.h.b16 %v62
    %v277 = vunpack.c.l.b16 %v63
    %v278 = vunpack.c.h.b16 %v63
    %v279 = vunpack.c.l.b16 %v64
    %v280 = vunpack.c.h.b16 %v64
    %v281 = vunpack.c.l.b16 %v65
    %v282 = vunpack.c.h.b16 %v65
    %v283 = vunpack.c.l.b16 %v66
    %v284 = vunpack.c.h.b16 %v66
    %v285 = vunpack.c.l.b16 %v67
    %v286 = vunpack.c.h.b16 %v67
    %v287 = vpack.c.b16 %v239, %v231
    %v288 = vpack.c.b16 %v240, %v232
    %v289 = vpack.c.b16 %v241, %v233
    %v290 = vpack.c.b16 %v242, %v234
    %v291 = vpack.c.b16 %v243, %v235
    %v292 = vpack.c.b16 %v244, %v236
    %v293 = vpack.c.b16 %v245, %v237
    %v294 = vpack.c.b16 %v246, %v238
    %v295 = vpack.c.b16 %v255, %v247
    %v296 = vpack.c.b16 %v256, %v248
    %v297 = vpack.c.b16 %v257, %v249
    %v298 = vpack.c.b16 %v258, %v250
    %v299 = vpack.c.b16 %v259, %v251
    %v300 = vpack.c.b16 %v260, %v252
    %v301 = vpack.c.b16 %v261, %v253
    %v302 = vpack.c.b16 %v262, %v254
    %v303 = vpack.c.b16 %v271, %v263
    %v304 = vpack.c.b16 %v272, %v264
    %v305 = vpack.c.b16 %v273, %v265
    %v306 = vpack.c.b16 %v274, %v266
    %v307 = vpack.c.b16 %v275, %v267
    %v308 = vpack.c.b16 %v276, %v268
    %v309 = vpack.c.b16 %v277, %v269
    %v310 = vpack.c.b16 %v278, %v270
    %v311 = vpack.c.b16 %v279, %v279
    %v312 = vpack.c.b16 %v280, %v280
    %v313 = vpack.c.b16 %v281, %v281
    %v314 = vpack.c.b16 %v282, %v282
    %v315 = vpack.c.b16 %v283, %v283
    %v316 = vpack.c.b16 %v284, %v284
    %v317 = vpack.c.b16 %v285, %v285
    %v318 = vpack.c.b16 %v286, %v286
    %v479 = vunpack.c.l.b16 %v68
    %v480 = vunpack.c.l.b16 %v69
    %v481 = vunpack.c.l.b16 %v70
    %v482 = vunpack.c.l.b16 %v71
    %v483 = vunpack.c.l.b16 %v72
    %v484 = vunpack.c.l.b16 %v73
    %v485 = vunpack.c.l.b16 %v74
    %v486 = vunpack.c.l.b16 %v75
    %v487 = vunpack.c.l.b16 %v76
    %v488 = vunpack.c.l.b16 %v77
    %v489 = vunpack.c.l.b16 %v78
    %v490 = vunpack.c.l.b16 %v79
    %v491 = vunpack.c.l.b16 %v80
    %v492 = vunpack.c.l.b16 %v81
    %v493 = vunpack.c.l.b16 %v82
    %v494 = vunpack.c.l.b16 %v83
    %v495 = vunpack.c.l.b16 %v84
    %v496 = vunpack.c.l.b16 %v85
    %v497 = vunpack.c.l.b16 %v86
    %v498 = vunpack.c.l.b16 %v87
    %v499 = vunpack.c.l.b16 %v88
    %v500 = vunpack.c.l.b16 %v89
    %v501 = vunpack.c.l.b16 %v90
    %v502 = vunpack.c.l.b16 %v91
    %v503 = vunpack.c.l.b16 %v92
    %v504 = vunpack.c.l.b16 %v93
    %v505 = vunpack.c.l.b16 %v94
    %v506 = vunpack.c.l.b16 %v95
    %v507 = vunpack.c.l.b16 %v96
    %v508 = vunpack.c.l.b16 %v97
    %v509 = vunpack.c.l.b16 %v98
    %v510 = vunpack.c.l.b16 %v99
    %v511 = vunpack.c.l.b16 %v100
    %v512 = vunpack.c.l.b16 %v101
    %v513 = vunpack.c.l.b16 %v102
    %v514 = vunpack.c.l.b16 %v103
    %v515 = vunpack.c.l.b16 %v104
    %v516 = vunpack.c.l.b16 %v105
    %v517 = vunpack.c.l.b16 %v106
    %v518 = vunpack.c.l.b16 %v107
    %v519 = vunpack.c.l.b16 %v108
    %v520 = vunpack.c.l.b16 %v109
    %v521 = vunpack.c.l.b16 %v110
    %v522 = vunpack.c.l.b16 %v111
    %v523 = vunpack.c.l.b16 %v112
    %v524 = vunpack.c.l.b16 %v113
    %v525 = vunpack.c.l.b16 %v114
    %v526 = vunpack.c.l.b16 %v115
    %v527 = vunpack.c.l.b16 %v116
    %v528 = vunpack.c.l.b16 %v117
    %v529 = vunpack.c.l.b16 %v118
    %v530 = vunpack.c.l.b16 %v119
    %v531 = vunpack.c.l.b16 %v120
    %v532 = vunpack.c.l.b16 %v121
    %v533 = vunpack.c.l.b16 %v122
    %v534 = vunpack.c.l.b16 %v123
    %v535 = vunpack.c.l.b16 %v124
    %v536 = vunpack.c.l.b16 %v125
    %v537 = vunpack.c.l.b16 %v126
    %v538 = vunpack.c.l.b16 %v127
    %v539 = vunpack.c.l.b16 %v128
    %v540 = vunpack.c.l.b16 %v129
    %v541 = vunpack.c.l.b16 %v130
    %v542 = vunpack.c.l.b16 %v131
    %v543 = vunpack.c.l.b16 %v132
    %v544 = vunpack.c.l.b16 %v133
    %v545 = vunpack.c.l.b16 %v134
    %v546 = vunpack.c.l.b16 %v135
    %v547 = vunpack.c.l.b16 %v136
    %v548 = vunpack.c.l.b16 %v137
    %v549 = vunpack.c.l.b16 %v138
    %v550 = vunpack.c.l.b16 %v139
    %v551 = vunpack.c.l.b16 %v140
    %v552 = vunpack.c.l.b16 %v141
    %v553 = vunpack.c.l.b16 %v142
    %v554 = vunpack.c.l.b16 %v143
    %v555 = vunpack.c.l.b16 %v144
    %v556 = vunpack.c.l.b16 %v145
    %v557 = vunpack.c.l.b16 %v146
    %v558 = vunpack.c.l.b16 %v147
    %v559 = vunpack.c.l.b16 %v148
    %v560 = vunpack.c.l.b16 %v149
    %v561 = vunpack.c.l.b16 %v150
    %v562 = vunpack.c.l.b16 %v151
    %v563 = vunpack.c.l.b16 %v152
    %v564 = vunpack.c.l.b16 %v153
    %v565 = vunpack.c.l.b16 %v154
    %v566 = vunpack.c.l.b16 %v155
    %v567 = vunpack.c.l.b16 %v156
    %v568 = vunpack.c.l.b16 %v157
    %v569 = vunpack.c.l.b16 %v158
    %v570 = vunpack.c.l.b16 %v159
    %v571 = vunpack.c.l.b16 %v160
    %v572 = vunpack.c.l.b16 %v161
    %v573 = vunpack.c.l.b16 %v162
    %v574 = vunpack.c.l.b16 %v163
    %v575 = vunpack.c.l.b16 %v164
    %v576 = vunpack.c.l.b16 %v165
    %v577 = vunpack.c.l.b16 %v166
    %v578 = vunpack.c.l.b16 %v167
    %v579 = vunpack.c.l.b16 %v168
    %v580 = vunpack.c.l.b16 %v169
    %v581 = vunpack.c.l.b16 %v170
    %v582 = vunpack.c.l.b16 %v171
    %v583 = vunpack.c.l.b16 %v172
    %v584 = vunpack.c.l.b16 %v173
    %v585 = vunpack.c.l.b16 %v174
    %v586 = vunpack.c.l.b16 %v175
    %v587 = vunpack.c.l.b16 %v176
    %v588 = vunpack.c.l.b16 %v177
    %v589 = vunpack.c.l.b16 %v178
    %v590 = vunpack.c.l.b16 %v179
    %v591 = vunpack.c.l.b16 %v180
    %v592 = vunpack.c.l.b16 %v181
    %v593 = vunpack.c.l.b16 %v182
    %v594 = vunpack.c.l.b16 %v183
    %v595 = vunpack.c.l.b16 %v184
    %v596 = vunpack.c.l.b16 %v185
    %v597 = vunpack.c.l.b16 %v186
    %v598 = vunpack.c.l.b16 %v187
    %v599 = vunpack.c.l.b16 %v188
    %v600 = vunpack.c.l.b16 %v189
    %v601 = vunpack.c.l.b16 %v190
    %v602 = vunpack.c.l.b16 %v191
    %v603 = vunpack.c.l.b16 %v192
    %v604 = vunpack.c.l.b16 %v193
    %v605 = vunpack.c.l.b16 %v194
    %v606 = vunpack.c.l.b16 %v195
    %v607 = vpack.c.b16 %v480, %v479
    %v608 = vpack.c.b16 %v482, %v481
    %v609 = vpack.c.b16 %v484, %v483
    %v610 = vpack.c.b16 %v486, %v485
    %v611 = vpack.c.b16 %v488, %v487
    %v612 = vpack.c.b16 %v490, %v489
    %v613 = vpack.c.b16 %v492, %v491
    %v614 = vpack.c.b16 %v494, %v493
    %v615 = vpack.c.b16 %v496, %v495
    %v616 = vpack.c.b16 %v498, %v497
    %v617 = vpack.c.b16 %v500, %v499
    %v618 = vpack.c.b16 %v502, %v501
    %v619 = vpack.c.b16 %v504, %v503
    %v620 = vpack.c.b16 %v506, %v505
    %v621 = vpack.c.b16 %v508, %v507
    %v622 = vpack.c.b16 %v510, %v509
    %v623 = vpack.c.b16 %v512, %v511
    %v624 = vpack.c.b16 %v514, %v513
    %v625 = vpack.c.b16 %v516, %v515
    %v626 = vpack.c.b16 %v518, %v517
    %v627 = vpack.c.b16 %v520, %v519
    %v628 = vpack.c.b16 %v522, %v521
    %v629 = vpack.c.b16 %v524, %v523
    %v630 = vpack.c.b16 %v526, %v525
    %v631 = vpack.c.b16 %v528, %v527
    %v632 = vpack.c.b16 %v530, %v529
    %v633 = vpack.c.b16 %v532, %v531
    %v634 = vpack.c.b16 %v534, %v533
    %v635 = vpack.c.b16 %v536, %v535
    %v636 = vpack.c.b16 %v538, %v537
    %v637 = vpack.c.b16 %v540, %v539
    %v638 = vpack.c.b16 %v542, %v541
    %v639 = vpack.c.b16 %v544, %v543
    %v640 = vpack.c.b16 %v546, %v545
    %v641 = vpack.c.b16 %v548, %v547
    %v642 = vpack.c.b16 %v550, %v549
    %v643 = vpack.c.b16 %v552, %v551
    %v644 = vpack.c.b16 %v554, %v553
    %v645 = vpack.c.b16 %v556, %v555
    %v646 = vpack.c.b16 %v558, %v557
    %v647 = vpack.c.b16 %v560, %v559
    %v648 = vpack.c.b16 %v562, %v561
    %v649 = vpack.c.b16 %v564, %v563
    %v650 = vpack.c.b16 %v566, %v565
    %v651 = vpack.c.b16 %v568, %v567
    %v652 = vpack.c.b16 %v570, %v569
    %v653 = vpack.c.b16 %v572, %v571
    %v654 = vpack.c.b16 %v574, %v573
    %v655 = vpack.c.b16 %v576, %v575
    %v656 = vpack.c.b16 %v578, %v577
    %v657 = vpack.c.b16 %v580, %v579
    %v658 = vpack.c.b16 %v582, %v581
    %v659 = vpack.c.b16 %v584, %v583
    %v660 = vpack.c.b16 %v586, %v585
    %v661 = vpack.c.b16 %v588, %v587
    %v662 = vpack.c.b16 %v590, %v589
    %v663 = vpack.c.b16 %v592, %v591
    %v664 = vpack.c.b16 %v594, %v593
    %v665 = vpack.c.b16 %v596, %v595
    %v666 = vpack.c.b16 %v598, %v597
    %v667 = vpack.c.b16 %v600, %v599
    %v668 = vpack.c.b16 %v602, %v601
    %v669 = vpack.c.b16 %v604, %v603
    %v670 = vpack.c.b16 %v606, %v605
    %735 = vmatprep.subr.bf16.mxu0 0
    %736 = vmatpush1.bf16.msra.mxu0 %v614
    %737 = vmatprep.subr.bf16.mxu0 0
    %738 = vmatpush1.bf16.msra.mxu0 %v613
    %739 = vmatprep.subr.bf16.mxu0 0
    %740 = vmatpush1.bf16.msra.mxu0 %v612
    %741 = vmatprep.subr.bf16.mxu0 0
    %742 = vmatpush1.bf16.msra.mxu0 %v611
    %743 = vmatprep.subr.bf16.mxu0 0
    %744 = vmatpush1.bf16.msra.mxu0 %v610
    %745 = vmatprep.subr.bf16.mxu0 0
    %746 = vmatpush1.bf16.msra.mxu0 %v609
    %747 = vmatprep.subr.bf16.mxu0 0
    %748 = vmatpush1.bf16.msra.mxu0 %v608
    %749 = vmatprep.subr.bf16.mxu0 0
    %750 = vmatpush1.bf16.msra.mxu0 %v607
    %751 = vmatprep.subr.bf16.mxu0 0
    %752 = vmatpush2.bf16.msra.mxu0 %v622
    %753 = vmatprep.subr.bf16.mxu0 0
    %754 = vmatpush2.bf16.msra.mxu0 %v621
    %755 = vmatprep.subr.bf16.mxu0 0
    %756 = vmatpush2.bf16.msra.mxu0 %v620
    %757 = vmatprep.subr.bf16.mxu0 0
    %758 = vmatpush2.bf16.msra.mxu0 %v619
    %759 = vmatprep.subr.bf16.mxu0 0
    %760 = vmatpush2.bf16.msra.mxu0 %v618
    %761 = vmatprep.subr.bf16.mxu0 0
    %762 = vmatpush2.bf16.msra.mxu0 %v617
    %763 = vmatprep.subr.bf16.mxu0 0
    %764 = vmatpush2.bf16.msra.mxu0 %v616
    %765 = vmatprep.subr.bf16.mxu0 0
    %766 = vmatpush2.bf16.msra.mxu0 %v615
    %767 = vmatprep.mubr.bf16.mxu0 %v288
    %768 = vmatmul.mubr.bf16.gmra.mxu0 %v287
    %v769 = vpop.f32.mrf.mxu0
    %v770 = vadd.f32 %v201, %v769
    %v771 = vpop.f32.mrf.mxu0
    %v772 = vpop.f32.mrf.mxu0
    %v773 = vadd.f32 %v201, %v772
    %v774 = vpop.f32.mrf.mxu0
    %775 = vmatprep.mubr.bf16.mxu0 %v296
    %776 = vmatmul.mubr.bf16.gmra.mxu0 %v295
    %v777 = vpop.f32.mrf.mxu0
    %v778 = vadd.f32 %v201, %v777
    %v779 = vpop.f32.mrf.mxu0
    %v780 = vpop.f32.mrf.mxu0
    %v781 = vadd.f32 %v201, %v780
    %v782 = vpop.f32.mrf.mxu0
    %783 = vmatprep.mubr.bf16.mxu0 %v304
    %784 = vmatmul.mubr.bf16.gmra.mxu0 %v303
    %v785 = vpop.f32.mrf.mxu0
    %v786 = vadd.f32 %v201, %v785
    %v787 = vpop.f32.mrf.mxu0
    %v788 = vpop.f32.mrf.mxu0
    %v789 = vadd.f32 %v201, %v788
    %v790 = vpop.f32.mrf.mxu0
    %791 = vmatprep.mubr.bf16.mxu0 %v312
    %792 = vmatmul.mubr.bf16.gmra.mxu0 %v311
    %v793 = vpop.f32.mrf.mxu0
    %v794 = vadd.f32 %v201, %v793
    %v795 = vpop.f32.mrf.mxu0
    %v796 = vpop.f32.mrf.mxu0
    %v797 = vpop.f32.mrf.mxu0
    %798 = vdwg.mxu0
    %799 = vmatprep.subr.bf16.mxu0 0
    %800 = vmatpush1.bf16.msra.mxu0 %v630
    %801 = vmatprep.subr.bf16.mxu0 0
    %802 = vmatpush1.bf16.msra.mxu0 %v629
    %803 = vmatprep.subr.bf16.mxu0 0
    %804 = vmatpush1.bf16.msra.mxu0 %v628
    %805 = vmatprep.subr.bf16.mxu0 0
    %806 = vmatpush1.bf16.msra.mxu0 %v627
    %807 = vmatprep.subr.bf16.mxu0 0
    %808 = vmatpush1.bf16.msra.mxu0 %v626
    %809 = vmatprep.subr.bf16.mxu0 0
    %810 = vmatpush1.bf16.msra.mxu0 %v625
    %811 = vmatprep.subr.bf16.mxu0 0
    %812 = vmatpush1.bf16.msra.mxu0 %v624
    %813 = vmatprep.subr.bf16.mxu0 0
    %814 = vmatpush1.bf16.msra.mxu0 %v623
    %815 = vmatprep.subr.bf16.mxu0 0
    %816 = vmatpush2.bf16.msra.mxu0 %v638
    %817 = vmatprep.subr.bf16.mxu0 0
    %818 = vmatpush2.bf16.msra.mxu0 %v637
    %819 = vmatprep.subr.bf16.mxu0 0
    %820 = vmatpush2.bf16.msra.mxu0 %v636
    %821 = vmatprep.subr.bf16.mxu0 0
    %822 = vmatpush2.bf16.msra.mxu0 %v635
    %823 = vmatprep.subr.bf16.mxu0 0
    %824 = vmatpush2.bf16.msra.mxu0 %v634
    %825 = vmatprep.subr.bf16.mxu0 0
    %826 = vmatpush2.bf16.msra.mxu0 %v633
    %827 = vmatprep.subr.bf16.mxu0 0
    %828 = vmatpush2.bf16.msra.mxu0 %v632
    %829 = vmatprep.subr.bf16.mxu0 0
    %830 = vmatpush2.bf16.msra.mxu0 %v631
    %831 = vmatprep.mubr.bf16.mxu0 %v290
    %832 = vmatmul.mubr.bf16.gmra.mxu0 %v289
    %v833 = vpop.f32.mrf.mxu0
    %v834 = vadd.f32 %v770, %v833
    %v835 = vpop.f32.mrf.mxu0
    %v836 = vpop.f32.mrf.mxu0
    %v837 = vadd.f32 %v773, %v836
    %v838 = vpop.f32.mrf.mxu0
    %839 = vmatprep.mubr.bf16.mxu0 %v298
    %840 = vmatmul.mubr.bf16.gmra.mxu0 %v297
    %v841 = vpop.f32.mrf.mxu0
    %v842 = vadd.f32 %v778, %v841
    %v843 = vpop.f32.mrf.mxu0
    %v844 = vpop.f32.mrf.mxu0
    %v845 = vadd.f32 %v781, %v844
    %v846 = vpop.f32.mrf.mxu0
    %847 = vmatprep.mubr.bf16.mxu0 %v306
    %848 = vmatmul.mubr.bf16.gmra.mxu0 %v305
    %v849 = vpop.f32.mrf.mxu0
    %v850 = vadd.f32 %v786, %v849
    %v851 = vpop.f32.mrf.mxu0
    %v852 = vpop.f32.mrf.mxu0
    %v853 = vadd.f32 %v789, %v852
    %v854 = vpop.f32.mrf.mxu0
    %855 = vmatprep.mubr.bf16.mxu0 %v314
    %856 = vmatmul.mubr.bf16.gmra.mxu0 %v313
    %v857 = vpop.f32.mrf.mxu0
    %v858 = vadd.f32 %v794, %v857
    %v859 = vpop.f32.mrf.mxu0
    %v860 = vpop.f32.mrf.mxu0
    %v861 = vpop.f32.mrf.mxu0
    %862 = vdwg.mxu0
    %863 = vmatprep.subr.bf16.mxu0 0
    %864 = vmatpush1.bf16.msra.mxu0 %v646
    %865 = vmatprep.subr.bf16.mxu0 0
    %866 = vmatpush1.bf16.msra.mxu0 %v645
    %867 = vmatprep.subr.bf16.mxu0 0
    %868 = vmatpush1.bf16.msra.mxu0 %v644
    %869 = vmatprep.subr.bf16.mxu0 0
    %870 = vmatpush1.bf16.msra.mxu0 %v643
    %871 = vmatprep.subr.bf16.mxu0 0
    %872 = vmatpush1.bf16.msra.mxu0 %v642
    %873 = vmatprep.subr.bf16.mxu0 0
    %874 = vmatpush1.bf16.msra.mxu0 %v641
    %875 = vmatprep.subr.bf16.mxu0 0
    %876 = vmatpush1.bf16.msra.mxu0 %v640
    %877 = vmatprep.subr.bf16.mxu0 0
    %878 = vmatpush1.bf16.msra.mxu0 %v639
    %879 = vmatprep.subr.bf16.mxu0 0
    %880 = vmatpush2.bf16.msra.mxu0 %v654
    %881 = vmatprep.subr.bf16.mxu0 0
    %882 = vmatpush2.bf16.msra.mxu0 %v653
    %883 = vmatprep.subr.bf16.mxu0 0
    %884 = vmatpush2.bf16.msra.mxu0 %v652
    %885 = vmatprep.subr.bf16.mxu0 0
    %886 = vmatpush2.bf16.msra.mxu0 %v651
    %887 = vmatprep.subr.bf16.mxu0 0
    %888 = vmatpush2.bf16.msra.mxu0 %v650
    %889 = vmatprep.subr.bf16.mxu0 0
    %890 = vmatpush2.bf16.msra.mxu0 %v649
    %891 = vmatprep.subr.bf16.mxu0 0
    %892 = vmatpush2.bf16.msra.mxu0 %v648
    %893 = vmatprep.subr.bf16.mxu0 0
    %894 = vmatpush2.bf16.msra.mxu0 %v647
    %895 = vmatprep.mubr.bf16.mxu0 %v292
    %896 = vmatmul.mubr.bf16.gmra.mxu0 %v291
    %v897 = vpop.f32.mrf.mxu0
    %v898 = vadd.f32 %v834, %v897
    %v899 = vpop.f32.mrf.mxu0
    %v900 = vpop.f32.mrf.mxu0
    %v901 = vadd.f32 %v837, %v900
    %v902 = vpop.f32.mrf.mxu0
    %903 = vmatprep.mubr.bf16.mxu0 %v300
    %904 = vmatmul.mubr.bf16.gmra.mxu0 %v299
    %v905 = vpop.f32.mrf.mxu0
    %v906 = vadd.f32 %v842, %v905
    %v907 = vpop.f32.mrf.mxu0
    %v908 = vpop.f32.mrf.mxu0
    %v909 = vadd.f32 %v845, %v908
    %v910 = vpop.f32.mrf.mxu0
    %911 = vmatprep.mubr.bf16.mxu0 %v308
    %912 = vmatmul.mubr.bf16.gmra.mxu0 %v307
    %v913 = vpop.f32.mrf.mxu0
    %v914 = vadd.f32 %v850, %v913
    %v915 = vpop.f32.mrf.mxu0
    %v916 = vpop.f32.mrf.mxu0
    %v917 = vadd.f32 %v853, %v916
    %v918 = vpop.f32.mrf.mxu0
    %919 = vmatprep.mubr.bf16.mxu0 %v316
    %920 = vmatmul.mubr.bf16.gmra.mxu0 %v315
    %v921 = vpop.f32.mrf.mxu0
    %v922 = vadd.f32 %v858, %v921
    %v923 = vpop.f32.mrf.mxu0
    %v924 = vpop.f32.mrf.mxu0
    %v925 = vpop.f32.mrf.mxu0
    %926 = vdwg.mxu0
    %927 = vmatprep.subr.bf16.mxu0 0
    %928 = vmatpush1.bf16.msra.mxu0 %v662
    %929 = vmatprep.subr.bf16.mxu0 0
    %930 = vmatpush1.bf16.msra.mxu0 %v661
    %931 = vmatprep.subr.bf16.mxu0 0
    %932 = vmatpush1.bf16.msra.mxu0 %v660
    %933 = vmatprep.subr.bf16.mxu0 0
    %934 = vmatpush1.bf16.msra.mxu0 %v659
    %935 = vmatprep.subr.bf16.mxu0 0
    %936 = vmatpush1.bf16.msra.mxu0 %v658
    %937 = vmatprep.subr.bf16.mxu0 0
    %938 = vmatpush1.bf16.msra.mxu0 %v657
    %939 = vmatprep.subr.bf16.mxu0 0
    %940 = vmatpush1.bf16.msra.mxu0 %v656
    %941 = vmatprep.subr.bf16.mxu0 0
    %942 = vmatpush1.bf16.msra.mxu0 %v655
    %943 = vmatprep.subr.bf16.mxu0 0
    %944 = vmatpush2.bf16.msra.mxu0 %v670
    %945 = vmatprep.subr.bf16.mxu0 0
    %946 = vmatpush2.bf16.msra.mxu0 %v669
    %947 = vmatprep.subr.bf16.mxu0 0
    %948 = vmatpush2.bf16.msra.mxu0 %v668
    %949 = vmatprep.subr.bf16.mxu0 0
    %950 = vmatpush2.bf16.msra.mxu0 %v667
    %951 = vmatprep.subr.bf16.mxu0 0
    %952 = vmatpush2.bf16.msra.mxu0 %v666
    %953 = vmatprep.subr.bf16.mxu0 0
    %954 = vmatpush2.bf16.msra.mxu0 %v665
    %955 = vmatprep.subr.bf16.mxu0 0
    %956 = vmatpush2.bf16.msra.mxu0 %v664
    %957 = vmatprep.subr.bf16.mxu0 0
    %958 = vmatpush2.bf16.msra.mxu0 %v663
    %959 = vmatprep.mubr.bf16.mxu0 %v294
    %960 = vmatmul.mubr.bf16.gmra.mxu0 %v293
    %v961 = vpop.f32.mrf.mxu0
    %v962 = vadd.f32 %v898, %v961
    %v963 = vpop.f32.mrf.mxu0
    %v964 = vpop.f32.mrf.mxu0
    %v965 = vadd.f32 %v901, %v964
    %v966 = vpop.f32.mrf.mxu0
    %967 = vmatprep.mubr.bf16.mxu0 %v302
    %968 = vmatmul.mubr.bf16.gmra.mxu0 %v301
    %v969 = vpop.f32.mrf.mxu0
    %v970 = vadd.f32 %v906, %v969
    %v971 = vpop.f32.mrf.mxu0
    %v972 = vpop.f32.mrf.mxu0
    %v973 = vadd.f32 %v909, %v972
    %v974 = vpop.f32.mrf.mxu0
    %975 = vmatprep.mubr.bf16.mxu0 %v310
    %976 = vmatmul.mubr.bf16.gmra.mxu0 %v309
    %v977 = vpop.f32.mrf.mxu0
    %v978 = vadd.f32 %v914, %v977
    %v979 = vpop.f32.mrf.mxu0
    %v980 = vpop.f32.mrf.mxu0
    %v981 = vadd.f32 %v917, %v980
    %v982 = vpop.f32.mrf.mxu0
    %983 = vmatprep.mubr.bf16.mxu0 %v318
    %984 = vmatmul.mubr.bf16.gmra.mxu0 %v317
    %v985 = vpop.f32.mrf.mxu0
    %v986 = vadd.f32 %v922, %v985
    %v987 = vpop.f32.mrf.mxu0
    %v988 = vpop.f32.mrf.mxu0
    %v989 = vpop.f32.mrf.mxu0
    %990 = vdwg.mxu0
    %v991 = vmax.f32 %v962, 0.0
    %v992 = vmax.f32 %v965, 0.0
    %v993 = vmax.f32 %v970, 0.0
    %v994 = vmax.f32 %v973, 0.0
    %v995 = vmax.f32 %v978, 0.0
    %v996 = vmax.f32 %v981, 0.0
    %v997 = vmax.f32 %v986, 0.0
    %v998 = vpack.c.bf16 %v992, %v991
    %v999 = vpack.c.bf16 %v994, %v993
    %v1000 = vpack.c.bf16 %v996, %v995
    %v1001 = vpack.c.bf16 %v997, %v997
    %v1006 = vcombine.high %v998, %v998
    %v1008 = vunpack.c.l.s4 1966171168
    %v1009 = vunpack.c.0.s8 %v1008
    %v1010 = vlaneseq
    %v1011 = vshrl.u32 %v1010, 7
    %v1012 = vsub.s32 %v1009, %v1011
    %v1013 = vrot.slane %v998, %v1012
    %v1015 = vunpack.c.l.s4 1966171168
    %v1016 = vunpack.c.0.s8 %v1015
    %v1017 = vlaneseq
    %v1018 = vshrl.u32 %v1017, 7
    %v1019 = vsub.s32 %v1016, %v1018
    %v1020 = vrot.slane %v1006, %v1019
    %v1021 = vcombine.high %v1013, %v1013
    %v1022 = vcombine.high %v1020, %v1020
    %v1024 = vunpack.c.l.s4 1966171168
    %v1025 = vunpack.c.0.s8 %v1024
    %v1026 = vlaneseq
    %v1027 = vshrl.u32 %v1026, 7
    %v1028 = vsub.s32 %v1025, %v1027
    %v1029 = vrot.slane %v1013, %v1028
    %v1031 = vunpack.c.l.s4 1966171168
    %v1032 = vunpack.c.0.s8 %v1031
    %v1033 = vlaneseq
    %v1034 = vshrl.u32 %v1033, 7
    %v1035 = vsub.s32 %v1032, %v1034
    %v1036 = vrot.slane %v1020, %v1035
    %v1038 = vunpack.c.l.s4 1966171168
    %v1039 = vunpack.c.0.s8 %v1038
    %v1040 = vlaneseq
    %v1041 = vshrl.u32 %v1040, 7
    %v1042 = vsub.s32 %v1039, %v1041
    %v1043 = vrot.slane %v1021, %v1042
    %v1045 = vunpack.c.l.s4 1966171168
    %v1046 = vunpack.c.0.s8 %v1045
    %v1047 = vlaneseq
    %v1048 = vshrl.u32 %v1047, 7
    %v1049 = vsub.s32 %v1046, %v1048
    %v1050 = vrot.slane %v1022, %v1049
    %v1051 = vcombine.high %v1029, %v1029
    %v1052 = vcombine.high %v1036, %v1036
    %v1053 = vcombine.high %v1043, %v1043
    %v1054 = vcombine.high %v1050, %v1050
    %v1055 = vcombine.high %v999, %v999
    %v1057 = vunpack.c.l.s4 1966171168
    %v1058 = vunpack.c.0.s8 %v1057
    %v1059 = vlaneseq
    %v1060 = vshrl.u32 %v1059, 7
    %v1061 = vsub.s32 %v1058, %v1060
    %v1062 = vrot.slane %v999, %v1061
    %v1064 = vunpack.c.l.s4 1966171168
    %v1065 = vunpack.c.0.s8 %v1064
    %v1066 = vlaneseq
    %v1067 = vshrl.u32 %v1066, 7
    %v1068 = vsub.s32 %v1065, %v1067
    %v1069 = vrot.slane %v1055, %v1068
    %v1070 = vcombine.high %v1062, %v1062
    %v1071 = vcombine.high %v1069, %v1069
    %v1073 = vunpack.c.l.s4 1966171168
    %v1074 = vunpack.c.0.s8 %v1073
    %v1075 = vlaneseq
    %v1076 = vshrl.u32 %v1075, 7
    %v1077 = vsub.s32 %v1074, %v1076
    %v1078 = vrot.slane %v1062, %v1077
    %v1080 = vunpack.c.l.s4 1966171168
    %v1081 = vunpack.c.0.s8 %v1080
    %v1082 = vlaneseq
    %v1083 = vshrl.u32 %v1082, 7
    %v1084 = vsub.s32 %v1081, %v1083
    %v1085 = vrot.slane %v1069, %v1084
    %v1087 = vunpack.c.l.s4 1966171168
    %v1088 = vunpack.c.0.s8 %v1087
    %v1089 = vlaneseq
    %v1090 = vshrl.u32 %v1089, 7
    %v1091 = vsub.s32 %v1088, %v1090
    %v1092 = vrot.slane %v1070, %v1091
    %v1094 = vunpack.c.l.s4 1966171168
    %v1095 = vunpack.c.0.s8 %v1094
    %v1096 = vlaneseq
    %v1097 = vshrl.u32 %v1096, 7
    %v1098 = vsub.s32 %v1095, %v1097
    %v1099 = vrot.slane %v1071, %v1098
    %v1100 = vcombine.high %v1078, %v1078
    %v1101 = vcombine.high %v1085, %v1085
    %v1102 = vcombine.high %v1092, %v1092
    %v1103 = vcombine.high %v1099, %v1099
    %v1104 = vcombine.high %v1000, %v1000
    %v1106 = vunpack.c.l.s4 1966171168
    %v1107 = vunpack.c.0.s8 %v1106
    %v1108 = vlaneseq
    %v1109 = vshrl.u32 %v1108, 7
    %v1110 = vsub.s32 %v1107, %v1109
    %v1111 = vrot.slane %v1000, %v1110
    %v1113 = vunpack.c.l.s4 1966171168
    %v1114 = vunpack.c.0.s8 %v1113
    %v1115 = vlaneseq
    %v1116 = vshrl.u32 %v1115, 7
    %v1117 = vsub.s32 %v1114, %v1116
    %v1118 = vrot.slane %v1104, %v1117
    %v1119 = vcombine.high %v1111, %v1111
    %v1120 = vcombine.high %v1118, %v1118
    %v1122 = vunpack.c.l.s4 1966171168
    %v1123 = vunpack.c.0.s8 %v1122
    %v1124 = vlaneseq
    %v1125 = vshrl.u32 %v1124, 7
    %v1126 = vsub.s32 %v1123, %v1125
    %v1127 = vrot.slane %v1111, %v1126
    %v1129 = vunpack.c.l.s4 1966171168
    %v1130 = vunpack.c.0.s8 %v1129
    %v1131 = vlaneseq
    %v1132 = vshrl.u32 %v1131, 7
    %v1133 = vsub.s32 %v1130, %v1132
    %v1134 = vrot.slane %v1118, %v1133
    %v1136 = vunpack.c.l.s4 1966171168
    %v1137 = vunpack.c.0.s8 %v1136
    %v1138 = vlaneseq
    %v1139 = vshrl.u32 %v1138, 7
    %v1140 = vsub.s32 %v1137, %v1139
    %v1141 = vrot.slane %v1119, %v1140
    %v1143 = vunpack.c.l.s4 1966171168
    %v1144 = vunpack.c.0.s8 %v1143
    %v1145 = vlaneseq
    %v1146 = vshrl.u32 %v1145, 7
    %v1147 = vsub.s32 %v1144, %v1146
    %v1148 = vrot.slane %v1120, %v1147
    %v1149 = vcombine.high %v1127, %v1127
    %v1150 = vcombine.high %v1134, %v1134
    %v1151 = vcombine.high %v1141, %v1141
    %v1152 = vcombine.high %v1148, %v1148
    %v1154 = vunpack.c.l.s4 1966171168
    %v1155 = vunpack.c.0.s8 %v1154
    %v1156 = vlaneseq
    %v1157 = vshrl.u32 %v1156, 7
    %v1158 = vsub.s32 %v1155, %v1157
    %v1159 = vrot.slane %v1001, %v1158
    %v1161 = vunpack.c.l.s4 1966171168
    %v1162 = vunpack.c.0.s8 %v1161
    %v1163 = vlaneseq
    %v1164 = vshrl.u32 %v1163, 7
    %v1165 = vsub.s32 %v1162, %v1164
    %v1166 = vrot.slane %v1159, %v1165
    %v1167 = vunpack.i.l.s16 %v1029
    %v1168 = vunpack.i.h.s16 %v1029
    %v1169 = vunpack.i.l.s16 %v1043
    %v1170 = vunpack.i.h.s16 %v1043
    %v1171 = vunpack.i.l.s16 %v1051
    %v1172 = vunpack.i.h.s16 %v1051
    %v1173 = vunpack.i.l.s16 %v1053
    %v1174 = vunpack.i.h.s16 %v1053
    %v1175 = vunpack.i.l.s16 %v1036
    %v1176 = vunpack.i.h.s16 %v1036
    %v1177 = vunpack.i.l.s16 %v1050
    %v1178 = vunpack.i.h.s16 %v1050
    %v1179 = vunpack.i.l.s16 %v1052
    %v1180 = vunpack.i.h.s16 %v1052
    %v1181 = vunpack.i.l.s16 %v1054
    %v1182 = vunpack.i.h.s16 %v1054
    %v1183 = vunpack.i.l.s16 %v1078
    %v1184 = vunpack.i.h.s16 %v1078
    %v1185 = vunpack.i.l.s16 %v1092
    %v1186 = vunpack.i.h.s16 %v1092
    %v1187 = vunpack.i.l.s16 %v1100
    %v1188 = vunpack.i.h.s16 %v1100
    %v1189 = vunpack.i.l.s16 %v1102
    %v1190 = vunpack.i.h.s16 %v1102
    %v1191 = vunpack.i.l.s16 %v1085
    %v1192 = vunpack.i.h.s16 %v1085
    %v1193 = vunpack.i.l.s16 %v1099
    %v1194 = vunpack.i.h.s16 %v1099
    %v1195 = vunpack.i.l.s16 %v1101
    %v1196 = vunpack.i.h.s16 %v1101
    %v1197 = vunpack.i.l.s16 %v1103
    %v1198 = vunpack.i.h.s16 %v1103
    %v1199 = vunpack.i.l.s16 %v1127
    %v1200 = vunpack.i.h.s16 %v1127
    %v1201 = vunpack.i.l.s16 %v1141
    %v1202 = vunpack.i.h.s16 %v1141
    %v1203 = vunpack.i.l.s16 %v1149
    %v1204 = vunpack.i.h.s16 %v1149
    %v1205 = vunpack.i.l.s16 %v1151
    %v1206 = vunpack.i.h.s16 %v1151
    %v1207 = vunpack.i.l.s16 %v1134
    %v1208 = vunpack.i.h.s16 %v1134
    %v1209 = vunpack.i.l.s16 %v1148
    %v1210 = vunpack.i.h.s16 %v1148
    %v1211 = vunpack.i.l.s16 %v1150
    %v1212 = vunpack.i.h.s16 %v1150
    %v1213 = vunpack.i.l.s16 %v1152
    %v1214 = vunpack.i.h.s16 %v1152
    %v1215 = vunpack.i.l.s16 %v1166
    %v1216 = vunpack.i.h.s16 %v1166
    %v1217 = vld [vmem:[%s4] sm:$0x1]
    %v1219 = vlaneseq
    %v1220 = vshrl.u32 %v1219, 7
    %v1221 = vsub.s32 0, %v1220
    %v1222 = vrot.slane %v1217, %v1221
    %v1224 = vld [vmem:[%s3] sm:$0xf]
    %v1225 = vld [vmem:[%s3 + $0x4] sm:$0xf]
    %v1226 = vld [vmem:[%s3 + $0x8] sm:$0xf]
    %v1227 = vld [vmem:[%s3 + $0xc] sm:$0xf]
    %v1228 = vld [vmem:[%s3 + $0x10] sm:$0xf]
    %v1229 = vld [vmem:[%s3 + $0x14] sm:$0xf]
    %v1230 = vld [vmem:[%s3 + $0x18] sm:$0xf]
    %v1231 = vld [vmem:[%s3 + $0x1c] sm:$0xf]
    %v1232 = vld [vmem:[%s3 + $0x20] sm:$0xf]
    %v1233 = vld [vmem:[%s3 + $0x24] sm:$0xf]
    %v1234 = vld [vmem:[%s3 + $0x28] sm:$0xf]
    %v1235 = vld [vmem:[%s3 + $0x2c] sm:$0xf]
    %v1236 = vld [vmem:[%s3 + $0x30] sm:$0xf]
    %v1237 = vld [vmem:[%s3 + $0x34] sm:$0xf]
    %v1238 = vld [vmem:[%s3 + $0x38] sm:$0xf]
    %v1239 = vld [vmem:[%s3 + $0x3c] sm:$0xf]
    %v1240 = vpack.i.b16 %v1168, %v1167
    %v1241 = vpack.i.b16 %v1170, %v1169
    %v1242 = vpack.i.b16 %v1173, %v1172
    %v1243 = vpack.i.b16 %v1175, %v1174
    %v1244 = vpack.i.b16 %v1178, %v1177
    %v1245 = vpack.i.b16 %v1180, %v1179
    %v1246 = vpack.i.b16 %v1183, %v1182
    %v1247 = vpack.i.b16 %v1185, %v1184
    %v1248 = vpack.i.b16 %v1193, %v1192
    %v1249 = vpack.i.b16 %v1195, %v1194
    %v1250 = vpack.i.b16 %v1198, %v1197
    %v1251 = vpack.i.b16 %v1200, %v1199
    %v1252 = vpack.i.b16 %v1203, %v1202
    %v1253 = vpack.i.b16 %v1205, %v1204
    %v1254 = vpack.i.b16 %v1208, %v1207
    %v1255 = vpack.i.b16 %v1210, %v1209
    %v1256 = vcombine.low %v1240, %v1241
    %v1257 = vcombine.low %v1242, %v1243
    %v1258 = vcombine.low %v1244, %v1245
    %v1259 = vcombine.low %v1246, %v1247
    %v1261 = vunpack.c.l.s4 1966171168
    %v1262 = vunpack.c.0.s8 %v1261
    %v1263 = vlaneseq
    %v1264 = vshrl.u32 %v1263, 7
    %v1265 = vsub.s32 %v1262, %v1264
    %v1266 = vrot.slane %v1256, %v1265
    %v1268 = vunpack.c.l.s4 1966171168
    %v1269 = vunpack.c.0.s8 %v1268
    %v1270 = vlaneseq
    %v1271 = vshrl.u32 %v1270, 7
    %v1272 = vsub.s32 %v1269, %v1271
    %v1273 = vrot.slane %v1257, %v1272
    %v1275 = vunpack.c.l.s4 1966171168
    %v1276 = vunpack.c.0.s8 %v1275
    %v1277 = vlaneseq
    %v1278 = vshrl.u32 %v1277, 7
    %v1279 = vsub.s32 %v1276, %v1278
    %v1280 = vrot.slane %v1258, %v1279
    %v1282 = vunpack.c.l.s4 1966171168
    %v1283 = vunpack.c.0.s8 %v1282
    %v1284 = vlaneseq
    %v1285 = vshrl.u32 %v1284, 7
    %v1286 = vsub.s32 %v1283, %v1285
    %v1287 = vrot.slane %v1259, %v1286
    %v1288 = vcombine.low %v1266, %v1273
    %v1289 = vcombine.low %v1280, %v1287
    %v1291 = vunpack.c.l.s4 1966171168
    %v1292 = vunpack.c.0.s8 %v1291
    %v1293 = vlaneseq
    %v1294 = vshrl.u32 %v1293, 7
    %v1295 = vsub.s32 %v1292, %v1294
    %v1296 = vrot.slane %v1288, %v1295
    %v1298 = vunpack.c.l.s4 1966171168
    %v1299 = vunpack.c.0.s8 %v1298
    %v1300 = vlaneseq
    %v1301 = vshrl.u32 %v1300, 7
    %v1302 = vsub.s32 %v1299, %v1301
    %v1303 = vrot.slane %v1289, %v1302
    %v1304 = vcombine.low %v1296, %v1303
    %v1305 = vcombine.low %v1248, %v1249
    %v1306 = vcombine.low %v1250, %v1251
    %v1307 = vcombine.low %v1252, %v1253
    %v1308 = vcombine.low %v1254, %v1255
    %v1310 = vunpack.c.l.s4 1966171168
    %v1311 = vunpack.c.0.s8 %v1310
    %v1312 = vlaneseq
    %v1313 = vshrl.u32 %v1312, 7
    %v1314 = vsub.s32 %v1311, %v1313
    %v1315 = vrot.slane %v1305, %v1314
    %v1317 = vunpack.c.l.s4 1966171168
    %v1318 = vunpack.c.0.s8 %v1317
    %v1319 = vlaneseq
    %v1320 = vshrl.u32 %v1319, 7
    %v1321 = vsub.s32 %v1318, %v1320
    %v1322 = vrot.slane %v1306, %v1321
    %v1324 = vunpack.c.l.s4 1966171168
    %v1325 = vunpack.c.0.s8 %v1324
    %v1326 = vlaneseq
    %v1327 = vshrl.u32 %v1326, 7
    %v1328 = vsub.s32 %v1325, %v1327
    %v1329 = vrot.slane %v1307, %v1328
    %v1331 = vunpack.c.l.s4 1966171168
    %v1332 = vunpack.c.0.s8 %v1331
    %v1333 = vlaneseq
    %v1334 = vshrl.u32 %v1333, 7
    %v1335 = vsub.s32 %v1332, %v1334
    %v1336 = vrot.slane %v1308, %v1335
    %v1337 = vcombine.low %v1315, %v1322
    %v1338 = vcombine.low %v1329, %v1336
    %v1340 = vunpack.c.l.s4 1966171168
    %v1341 = vunpack.c.0.s8 %v1340
    %v1342 = vlaneseq
    %v1343 = vshrl.u32 %v1342, 7
    %v1344 = vsub.s32 %v1341, %v1343
    %v1345 = vrot.slane %v1337, %v1344
    %v1347 = vunpack.c.l.s4 1966171168
    %v1348 = vunpack.c.0.s8 %v1347
    %v1349 = vlaneseq
    %v1350 = vshrl.u32 %v1349, 7
    %v1351 = vsub.s32 %v1348, %v1350
    %v1352 = vrot.slane %v1338, %v1351
    %v1353 = vcombine.low %v1345, %v1352
    %v1372 = vunpack.c.l.b16 %v1224
    %v1373 = vunpack.c.l.b16 %v1225
    %v1374 = vunpack.c.l.b16 %v1226
    %v1375 = vunpack.c.l.b16 %v1227
    %v1376 = vunpack.c.l.b16 %v1228
    %v1377 = vunpack.c.l.b16 %v1229
    %v1378 = vunpack.c.l.b16 %v1230
    %v1379 = vunpack.c.l.b16 %v1231
    %v1380 = vunpack.c.l.b16 %v1232
    %v1381 = vunpack.c.l.b16 %v1233
    %v1382 = vunpack.c.l.b16 %v1234
    %v1383 = vunpack.c.l.b16 %v1235
    %v1384 = vunpack.c.l.b16 %v1236
    %v1385 = vunpack.c.l.b16 %v1237
    %v1386 = vunpack.c.l.b16 %v1238
    %v1387 = vunpack.c.l.b16 %v1239
    %v1388 = vpack.c.b16 %v1373, %v1372
    %v1389 = vpack.c.b16 %v1375, %v1374
    %v1390 = vpack.c.b16 %v1377, %v1376
    %v1391 = vpack.c.b16 %v1379, %v1378
    %v1392 = vpack.c.b16 %v1381, %v1380
    %v1393 = vpack.c.b16 %v1383, %v1382
    %v1394 = vpack.c.b16 %v1385, %v1384
    %v1395 = vpack.c.b16 %v1387, %v1386
    %1404 = vmatprep.subr.bf16.mxu0 0
    %1405 = vmatpush1.bf16.msra.mxu0 %v1395
    %1406 = vmatprep.subr.bf16.mxu0 0
    %1407 = vmatpush1.bf16.msra.mxu0 %v1394
    %1408 = vmatprep.subr.bf16.mxu0 0
    %1409 = vmatpush1.bf16.msra.mxu0 %v1393
    %1410 = vmatprep.subr.bf16.mxu0 0
    %1411 = vmatpush1.bf16.msra.mxu0 %v1392
    %1412 = vmatprep.subr.bf16.mxu0 0
    %1413 = vmatpush1.bf16.msra.mxu0 %v1391
    %1414 = vmatprep.subr.bf16.mxu0 0
    %1415 = vmatpush1.bf16.msra.mxu0 %v1390
    %1416 = vmatprep.subr.bf16.mxu0 0
    %1417 = vmatpush1.bf16.msra.mxu0 %v1389
    %1418 = vmatprep.subr.bf16.mxu0 0
    %1419 = vmatpush1.bf16.msra.mxu0 %v1388
    %1420 = vmatprep.subr.bf16.mxu0 0
    %1421 = vmatpush2.bf16.msra.mxu0 0
    %1422 = vmatprep.subr.bf16.mxu0 0
    %1423 = vmatpush2.bf16.msra.mxu0 0
    %1424 = vmatprep.subr.bf16.mxu0 0
    %1425 = vmatpush2.bf16.msra.mxu0 0
    %1426 = vmatprep.subr.bf16.mxu0 0
    %1427 = vmatpush2.bf16.msra.mxu0 0
    %1428 = vmatprep.subr.bf16.mxu0 0
    %1429 = vmatpush2.bf16.msra.mxu0 0
    %1430 = vmatprep.subr.bf16.mxu0 0
    %1431 = vmatpush2.bf16.msra.mxu0 0
    %1432 = vmatprep.subr.bf16.mxu0 0
    %1433 = vmatpush2.bf16.msra.mxu0 0
    %1434 = vmatprep.subr.bf16.mxu0 0
    %1435 = vmatpush2.bf16.msra.mxu0 0
    %1436 = vmatprep.mubr.bf16.mxu0 0
    %1437 = vmatmul.mubr.bf16.gmra.mxu0 %v1304
    %v1438 = vpop.f32.mrf.mxu0
    %v1439 = vadd.f32 0.0, %v1438
    %v1440 = vpop.f32.mrf.mxu0
    %v1441 = vpop.f32.mrf.mxu0
    %v1442 = vadd.f32 0.0, %v1441
    %v1443 = vpop.f32.mrf.mxu0
    %1444 = vmatprep.mubr.bf16.mxu0 0
    %1445 = vmatmul.mubr.bf16.gmra.mxu0 %v1353
    %v1446 = vpop.f32.mrf.mxu0
    %v1447 = vadd.f32 0.0, %v1446
    %v1448 = vpop.f32.mrf.mxu0
    %v1449 = vpop.f32.mrf.mxu0
    %v1450 = vadd.f32 0.0, %v1449
    %v1451 = vpop.f32.mrf.mxu0
    %1452 = vdwg.mxu0
    %v1453 = vadd.f32 %v1222, %v1439
    %v1454 = vadd.f32 %v1222, %v1442
    %v1455 = vadd.f32 %v1222, %v1447
    %v1456 = vadd.f32 %v1222, %v1450
    %v1457 = vld [vmem:[%s3 + $0x40] sm:$0xf]
    %v1458 = vld [vmem:[%s3 + $0x44] sm:$0xf]
    %v1459 = vld [vmem:[%s3 + $0x48] sm:$0xf]
    %v1460 = vld [vmem:[%s3 + $0x4c] sm:$0xf]
    %v1461 = vld [vmem:[%s3 + $0x50] sm:$0xf]
    %v1462 = vld [vmem:[%s3 + $0x54] sm:$0xf]
    %v1463 = vld [vmem:[%s3 + $0x58] sm:$0xf]
    %v1464 = vld [vmem:[%s3 + $0x5c] sm:$0xf]
    %v1465 = vld [vmem:[%s3 + $0x60] sm:$0xf]
    %v1466 = vld [vmem:[%s3 + $0x64] sm:$0xf]
    %v1467 = vld [vmem:[%s3 + $0x68] sm:$0xf]
    %v1468 = vld [vmem:[%s3 + $0x6c] sm:$0xf]
    %v1469 = vld [vmem:[%s3 + $0x70] sm:$0xf]
    %v1470 = vld [vmem:[%s3 + $0x74] sm:$0xf]
    %v1471 = vld [vmem:[%s3 + $0x78] sm:$0xf]
    %v1472 = vld [vmem:[%s3 + $0x7c] sm:$0xf]
    %v1473 = vpack.i.b16 %v1169, %v1168
    %v1474 = vpack.i.b16 %v1171, %v1170
    %v1475 = vpack.i.b16 %v1174, %v1173
    %v1476 = vpack.i.b16 %v1176, %v1175
    %v1477 = vpack.i.b16 %v1179, %v1178
    %v1478 = vpack.i.b16 %v1181, %v1180
    %v1479 = vpack.i.b16 %v1184, %v1183
    %v1480 = vpack.i.b16 %v1186, %v1185
    %v1481 = vpack.i.b16 %v1194, %v1193
    %v1482 = vpack.i.b16 %v1196, %v1195
    %v1483 = vpack.i.b16 %v1199, %v1198
    %v1484 = vpack.i.b16 %v1201, %v1200
    %v1485 = vpack.i.b16 %v1204, %v1203
    %v1486 = vpack.i.b16 %v1206, %v1205
    %v1487 = vpack.i.b16 %v1209, %v1208
    %v1488 = vpack.i.b16 %v1211, %v1210
    %v1489 = vcombine.low %v1473, %v1474
    %v1490 = vcombine.low %v1475, %v1476
    %v1491 = vcombine.low %v1477, %v1478
    %v1492 = vcombine.low %v1479, %v1480
    %v1494 = vunpack.c.l.s4 1966171168
    %v1495 = vunpack.c.0.s8 %v1494
    %v1496 = vlaneseq
    %v1497 = vshrl.u32 %v1496, 7
    %v1498 = vsub.s32 %v1495, %v1497
    %v1499 = vrot.slane %v1489, %v1498
    %v1501 = vunpack.c.l.s4 1966171168
    %v1502 = vunpack.c.0.s8 %v1501
    %v1503 = vlaneseq
    %v1504 = vshrl.u32 %v1503, 7
    %v1505 = vsub.s32 %v1502, %v1504
    %v1506 = vrot.slane %v1490, %v1505
    %v1508 = vunpack.c.l.s4 1966171168
    %v1509 = vunpack.c.0.s8 %v1508
    %v1510 = vlaneseq
    %v1511 = vshrl.u32 %v1510, 7
    %v1512 = vsub.s32 %v1509, %v1511
    %v1513 = vrot.slane %v1491, %v1512
    %v1515 = vunpack.c.l.s4 1966171168
    %v1516 = vunpack.c.0.s8 %v1515
    %v1517 = vlaneseq
    %v1518 = vshrl.u32 %v1517, 7
    %v1519 = vsub.s32 %v1516, %v1518
    %v1520 = vrot.slane %v1492, %v1519
    %v1521 = vcombine.low %v1499, %v1506
    %v1522 = vcombine.low %v1513, %v1520
    %v1524 = vunpack.c.l.s4 1966171168
    %v1525 = vunpack.c.0.s8 %v1524
    %v1526 = vlaneseq
    %v1527 = vshrl.u32 %v1526, 7
    %v1528 = vsub.s32 %v1525, %v1527
    %v1529 = vrot.slane %v1521, %v1528
    %v1531 = vunpack.c.l.s4 1966171168
    %v1532 = vunpack.c.0.s8 %v1531
    %v1533 = vlaneseq
    %v1534 = vshrl.u32 %v1533, 7
    %v1535 = vsub.s32 %v1532, %v1534
    %v1536 = vrot.slane %v1522, %v1535
    %v1537 = vcombine.low %v1529, %v1536
    %v1538 = vcombine.low %v1481, %v1482
    %v1539 = vcombine.low %v1483, %v1484
    %v1540 = vcombine.low %v1485, %v1486
    %v1541 = vcombine.low %v1487, %v1488
    %v1543 = vunpack.c.l.s4 1966171168
    %v1544 = vunpack.c.0.s8 %v1543
    %v1545 = vlaneseq
    %v1546 = vshrl.u32 %v1545, 7
    %v1547 = vsub.s32 %v1544, %v1546
    %v1548 = vrot.slane %v1538, %v1547
    %v1550 = vunpack.c.l.s4 1966171168
    %v1551 = vunpack.c.0.s8 %v1550
    %v1552 = vlaneseq
    %v1553 = vshrl.u32 %v1552, 7
    %v1554 = vsub.s32 %v1551, %v1553
    %v1555 = vrot.slane %v1539, %v1554
    %v1557 = vunpack.c.l.s4 1966171168
    %v1558 = vunpack.c.0.s8 %v1557
    %v1559 = vlaneseq
    %v1560 = vshrl.u32 %v1559, 7
    %v1561 = vsub.s32 %v1558, %v1560
    %v1562 = vrot.slane %v1540, %v1561
    %v1564 = vunpack.c.l.s4 1966171168
    %v1565 = vunpack.c.0.s8 %v1564
    %v1566 = vlaneseq
    %v1567 = vshrl.u32 %v1566, 7
    %v1568 = vsub.s32 %v1565, %v1567
    %v1569 = vrot.slane %v1541, %v1568
    %v1570 = vcombine.low %v1548, %v1555
    %v1571 = vcombine.low %v1562, %v1569
    %v1573 = vunpack.c.l.s4 1966171168
    %v1574 = vunpack.c.0.s8 %v1573
    %v1575 = vlaneseq
    %v1576 = vshrl.u32 %v1575, 7
    %v1577 = vsub.s32 %v1574, %v1576
    %v1578 = vrot.slane %v1570, %v1577
    %v1580 = vunpack.c.l.s4 1966171168
    %v1581 = vunpack.c.0.s8 %v1580
    %v1582 = vlaneseq
    %v1583 = vshrl.u32 %v1582, 7
    %v1584 = vsub.s32 %v1581, %v1583
    %v1585 = vrot.slane %v1571, %v1584
    %v1586 = vcombine.low %v1578, %v1585
    %v1605 = vunpack.c.l.b16 %v1457
    %v1606 = vunpack.c.l.b16 %v1458
    %v1607 = vunpack.c.l.b16 %v1459
    %v1608 = vunpack.c.l.b16 %v1460
    %v1609 = vunpack.c.l.b16 %v1461
    %v1610 = vunpack.c.l.b16 %v1462
    %v1611 = vunpack.c.l.b16 %v1463
    %v1612 = vunpack.c.l.b16 %v1464
    %v1613 = vunpack.c.l.b16 %v1465
    %v1614 = vunpack.c.l.b16 %v1466
    %v1615 = vunpack.c.l.b16 %v1467
    %v1616 = vunpack.c.l.b16 %v1468
    %v1617 = vunpack.c.l.b16 %v1469
    %v1618 = vunpack.c.l.b16 %v1470
    %v1619 = vunpack.c.l.b16 %v1471
    %v1620 = vunpack.c.l.b16 %v1472
    %v1621 = vpack.c.b16 %v1606, %v1605
    %v1622 = vpack.c.b16 %v1608, %v1607
    %v1623 = vpack.c.b16 %v1610, %v1609
    %v1624 = vpack.c.b16 %v1612, %v1611
    %v1625 = vpack.c.b16 %v1614, %v1613
    %v1626 = vpack.c.b16 %v1616, %v1615
    %v1627 = vpack.c.b16 %v1618, %v1617
    %v1628 = vpack.c.b16 %v1620, %v1619
    %1637 = vmatprep.subr.bf16.mxu0 0
    %1638 = vmatpush1.bf16.msra.mxu0 %v1628
    %1639 = vmatprep.subr.bf16.mxu0 0
    %1640 = vmatpush1.bf16.msra.mxu0 %v1627
    %1641 = vmatprep.subr.bf16.mxu0 0
    %1642 = vmatpush1.bf16.msra.mxu0 %v1626
    %1643 = vmatprep.subr.bf16.mxu0 0
    %1644 = vmatpush1.bf16.msra.mxu0 %v1625
    %1645 = vmatprep.subr.bf16.mxu0 0
    %1646 = vmatpush1.bf16.msra.mxu0 %v1624
    %1647 = vmatprep.subr.bf16.mxu0 0
    %1648 = vmatpush1.bf16.msra.mxu0 %v1623
    %1649 = vmatprep.subr.bf16.mxu0 0
    %1650 = vmatpush1.bf16.msra.mxu0 %v1622
    %1651 = vmatprep.subr.bf16.mxu0 0
    %1652 = vmatpush1.bf16.msra.mxu0 %v1621
    %1653 = vmatprep.subr.bf16.mxu0 0
    %1654 = vmatpush2.bf16.msra.mxu0 0
    %1655 = vmatprep.subr.bf16.mxu0 0
    %1656 = vmatpush2.bf16.msra.mxu0 0
    %1657 = vmatprep.subr.bf16.mxu0 0
    %1658 = vmatpush2.bf16.msra.mxu0 0
    %1659 = vmatprep.subr.bf16.mxu0 0
    %1660 = vmatpush2.bf16.msra.mxu0 0
    %1661 = vmatprep.subr.bf16.mxu0 0
    %1662 = vmatpush2.bf16.msra.mxu0 0
    %1663 = vmatprep.subr.bf16.mxu0 0
    %1664 = vmatpush2.bf16.msra.mxu0 0
    %1665 = vmatprep.subr.bf16.mxu0 0
    %1666 = vmatpush2.bf16.msra.mxu0 0
    %1667 = vmatprep.subr.bf16.mxu0 0
    %1668 = vmatpush2.bf16.msra.mxu0 0
    %1669 = vmatprep.mubr.bf16.mxu0 0
    %1670 = vmatmul.mubr.bf16.gmra.mxu0 %v1537
    %v1671 = vpop.f32.mrf.mxu0
    %v1672 = vadd.f32 0.0, %v1671
    %v1673 = vpop.f32.mrf.mxu0
    %v1674 = vpop.f32.mrf.mxu0
    %v1675 = vadd.f32 0.0, %v1674
    %v1676 = vpop.f32.mrf.mxu0
    %1677 = vmatprep.mubr.bf16.mxu0 0
    %1678 = vmatmul.mubr.bf16.gmra.mxu0 %v1586
    %v1679 = vpop.f32.mrf.mxu0
    %v1680 = vadd.f32 0.0, %v1679
    %v1681 = vpop.f32.mrf.mxu0
    %v1682 = vpop.f32.mrf.mxu0
    %v1683 = vadd.f32 0.0, %v1682
    %v1684 = vpop.f32.mrf.mxu0
    %1685 = vdwg.mxu0
    %v1686 = vadd.f32 %v1453, %v1672
    %v1687 = vadd.f32 %v1454, %v1675
    %v1688 = vadd.f32 %v1455, %v1680
    %v1689 = vadd.f32 %v1456, %v1683
    %v1690 = vld [vmem:[%s3 + $0x80] sm:$0xf]
    %v1691 = vld [vmem:[%s3 + $0x84] sm:$0xf]
    %v1692 = vld [vmem:[%s3 + $0x88] sm:$0xf]
    %v1693 = vld [vmem:[%s3 + $0x8c] sm:$0xf]
    %v1694 = vld [vmem:[%s3 + $0x90] sm:$0xf]
    %v1695 = vld [vmem:[%s3 + $0x94] sm:$0xf]
    %v1696 = vld [vmem:[%s3 + $0x98] sm:$0xf]
    %v1697 = vld [vmem:[%s3 + $0x9c] sm:$0xf]
    %v1698 = vld [vmem:[%s3 + $0xa0] sm:$0xf]
    %v1699 = vld [vmem:[%s3 + $0xa4] sm:$0xf]
    %v1700 = vld [vmem:[%s3 + $0xa8] sm:$0xf]
    %v1701 = vld [vmem:[%s3 + $0xac] sm:$0xf]
    %v1702 = vld [vmem:[%s3 + $0xb0] sm:$0xf]
    %v1703 = vld [vmem:[%s3 + $0xb4] sm:$0xf]
    %v1704 = vld [vmem:[%s3 + $0xb8] sm:$0xf]
    %v1705 = vld [vmem:[%s3 + $0xbc] sm:$0xf]
    %v1706 = vpack.i.b16 %v1188, %v1187
    %v1707 = vpack.i.b16 %v1190, %v1189
    %v1708 = vpack.i.b16 %v1213, %v1212
    %v1709 = vpack.i.b16 %v1215, %v1214
    %v1710 = vcombine.low %v1706, %v1707
    %v1712 = vunpack.c.l.s4 1966171168
    %v1713 = vunpack.c.0.s8 %v1712
    %v1714 = vlaneseq
    %v1715 = vshrl.u32 %v1714, 7
    %v1716 = vsub.s32 %v1713, %v1715
    %v1717 = vrot.slane %v1710, %v1716
    %v1718 = vcombine.low %v1273, %v1280
    %v1719 = vcombine.low %v1287, %v1717
    %v1721 = vunpack.c.l.s4 1966171168
    %v1722 = vunpack.c.0.s8 %v1721
    %v1723 = vlaneseq
    %v1724 = vshrl.u32 %v1723, 7
    %v1725 = vsub.s32 %v1722, %v1724
    %v1726 = vrot.slane %v1718, %v1725
    %v1728 = vunpack.c.l.s4 1966171168
    %v1729 = vunpack.c.0.s8 %v1728
    %v1730 = vlaneseq
    %v1731 = vshrl.u32 %v1730, 7
    %v1732 = vsub.s32 %v1729, %v1731
    %v1733 = vrot.slane %v1719, %v1732
    %v1734 = vcombine.low %v1726, %v1733
    %v1735 = vcombine.low %v1708, %v1709
    %v1737 = vunpack.c.l.s4 1966171168
    %v1738 = vunpack.c.0.s8 %v1737
    %v1739 = vlaneseq
    %v1740 = vshrl.u32 %v1739, 7
    %v1741 = vsub.s32 %v1738, %v1740
    %v1742 = vrot.slane %v1735, %v1741
    %v1743 = vcombine.low %v1322, %v1329
    %v1744 = vcombine.low %v1336, %v1742
    %v1746 = vunpack.c.l.s4 1966171168
    %v1747 = vunpack.c.0.s8 %v1746
    %v1748 = vlaneseq
    %v1749 = vshrl.u32 %v1748, 7
    %v1750 = vsub.s32 %v1747, %v1749
    %v1751 = vrot.slane %v1743, %v1750
    %v1753 = vunpack.c.l.s4 1966171168
    %v1754 = vunpack.c.0.s8 %v1753
    %v1755 = vlaneseq
    %v1756 = vshrl.u32 %v1755, 7
    %v1757 = vsub.s32 %v1754, %v1756
    %v1758 = vrot.slane %v1744, %v1757
    %v1759 = vcombine.low %v1751, %v1758
    %v1778 = vunpack.c.l.b16 %v1690
    %v1779 = vunpack.c.l.b16 %v1691
    %v1780 = vunpack.c.l.b16 %v1692
    %v1781 = vunpack.c.l.b16 %v1693
    %v1782 = vunpack.c.l.b16 %v1694
    %v1783 = vunpack.c.l.b16 %v1695
    %v1784 = vunpack.c.l.b16 %v1696
    %v1785 = vunpack.c.l.b16 %v1697
    %v1786 = vunpack.c.l.b16 %v1698
    %v1787 = vunpack.c.l.b16 %v1699
    %v1788 = vunpack.c.l.b16 %v1700
    %v1789 = vunpack.c.l.b16 %v1701
    %v1790 = vunpack.c.l.b16 %v1702
    %v1791 = vunpack.c.l.b16 %v1703
    %v1792 = vunpack.c.l.b16 %v1704
    %v1793 = vunpack.c.l.b16 %v1705
    %v1794 = vpack.c.b16 %v1779, %v1778
    %v1795 = vpack.c.b16 %v1781, %v1780
    %v1796 = vpack.c.b16 %v1783, %v1782
    %v1797 = vpack.c.b16 %v1785, %v1784
    %v1798 = vpack.c.b16 %v1787, %v1786
    %v1799 = vpack.c.b16 %v1789, %v1788
    %v1800 = vpack.c.b16 %v1791, %v1790
    %v1801 = vpack.c.b16 %v1793, %v1792
    %1810 = vmatprep.subr.bf16.mxu0 0
    %1811 = vmatpush1.bf16.msra.mxu0 %v1801
    %1812 = vmatprep.subr.bf16.mxu0 0
    %1813 = vmatpush1.bf16.msra.mxu0 %v1800
    %1814 = vmatprep.subr.bf16.mxu0 0
    %1815 = vmatpush1.bf16.msra.mxu0 %v1799
    %1816 = vmatprep.subr.bf16.mxu0 0
    %1817 = vmatpush1.bf16.msra.mxu0 %v1798
    %1818 = vmatprep.subr.bf16.mxu0 0
    %1819 = vmatpush1.bf16.msra.mxu0 %v1797
    %1820 = vmatprep.subr.bf16.mxu0 0
    %1821 = vmatpush1.bf16.msra.mxu0 %v1796
    %1822 = vmatprep.subr.bf16.mxu0 0
    %1823 = vmatpush1.bf16.msra.mxu0 %v1795
    %1824 = vmatprep.subr.bf16.mxu0 0
    %1825 = vmatpush1.bf16.msra.mxu0 %v1794
    %1826 = vmatprep.subr.bf16.mxu0 0
    %1827 = vmatpush2.bf16.msra.mxu0 0
    %1828 = vmatprep.subr.bf16.mxu0 0
    %1829 = vmatpush2.bf16.msra.mxu0 0
    %1830 = vmatprep.subr.bf16.mxu0 0
    %1831 = vmatpush2.bf16.msra.mxu0 0
    %1832 = vmatprep.subr.bf16.mxu0 0
    %1833 = vmatpush2.bf16.msra.mxu0 0
    %1834 = vmatprep.subr.bf16.mxu0 0
    %1835 = vmatpush2.bf16.msra.mxu0 0
    %1836 = vmatprep.subr.bf16.mxu0 0
    %1837 = vmatpush2.bf16.msra.mxu0 0
    %1838 = vmatprep.subr.bf16.mxu0 0
    %1839 = vmatpush2.bf16.msra.mxu0 0
    %1840 = vmatprep.subr.bf16.mxu0 0
    %1841 = vmatpush2.bf16.msra.mxu0 0
    %1842 = vmatprep.mubr.bf16.mxu0 0
    %1843 = vmatmul.mubr.bf16.gmra.mxu0 %v1734
    %v1844 = vpop.f32.mrf.mxu0
    %v1845 = vadd.f32 0.0, %v1844
    %v1846 = vpop.f32.mrf.mxu0
    %v1847 = vpop.f32.mrf.mxu0
    %v1848 = vadd.f32 0.0, %v1847
    %v1849 = vpop.f32.mrf.mxu0
    %1850 = vmatprep.mubr.bf16.mxu0 0
    %1851 = vmatmul.mubr.bf16.gmra.mxu0 %v1759
    %v1852 = vpop.f32.mrf.mxu0
    %v1853 = vadd.f32 0.0, %v1852
    %v1854 = vpop.f32.mrf.mxu0
    %v1855 = vpop.f32.mrf.mxu0
    %v1856 = vadd.f32 0.0, %v1855
    %v1857 = vpop.f32.mrf.mxu0
    %1858 = vdwg.mxu0
    %v1859 = vadd.f32 %v1686, %v1845
    %v1860 = vadd.f32 %v1687, %v1848
    %v1861 = vadd.f32 %v1688, %v1853
    %v1862 = vadd.f32 %v1689, %v1856
    %v1863 = vld [vmem:[%s3 + $0xc0] sm:$0xf]
    %v1864 = vld [vmem:[%s3 + $0xc4] sm:$0xf]
    %v1865 = vld [vmem:[%s3 + $0xc8] sm:$0xf]
    %v1866 = vld [vmem:[%s3 + $0xcc] sm:$0xf]
    %v1867 = vld [vmem:[%s3 + $0xd0] sm:$0xf]
    %v1868 = vld [vmem:[%s3 + $0xd4] sm:$0xf]
    %v1869 = vld [vmem:[%s3 + $0xd8] sm:$0xf]
    %v1870 = vld [vmem:[%s3 + $0xdc] sm:$0xf]
    %v1871 = vld [vmem:[%s3 + $0xe0] sm:$0xf]
    %v1872 = vld [vmem:[%s3 + $0xe4] sm:$0xf]
    %v1873 = vld [vmem:[%s3 + $0xe8] sm:$0xf]
    %v1874 = vld [vmem:[%s3 + $0xec] sm:$0xf]
    %v1875 = vld [vmem:[%s3 + $0xf0] sm:$0xf]
    %v1876 = vld [vmem:[%s3 + $0xf4] sm:$0xf]
    %v1877 = vld [vmem:[%s3 + $0xf8] sm:$0xf]
    %v1878 = vld [vmem:[%s3 + $0xfc] sm:$0xf]
    %v1879 = vpack.i.b16 %v1189, %v1188
    %v1880 = vpack.i.b16 %v1191, %v1190
    %v1881 = vpack.i.b16 %v1214, %v1213
    %v1882 = vpack.i.b16 %v1216, %v1215
    %v1883 = vcombine.low %v1879, %v1880
    %v1885 = vunpack.c.l.s4 1966171168
    %v1886 = vunpack.c.0.s8 %v1885
    %v1887 = vlaneseq
    %v1888 = vshrl.u32 %v1887, 7
    %v1889 = vsub.s32 %v1886, %v1888
    %v1890 = vrot.slane %v1883, %v1889
    %v1891 = vcombine.low %v1506, %v1513
    %v1892 = vcombine.low %v1520, %v1890
    %v1894 = vunpack.c.l.s4 1966171168
    %v1895 = vunpack.c.0.s8 %v1894
    %v1896 = vlaneseq
    %v1897 = vshrl.u32 %v1896, 7
    %v1898 = vsub.s32 %v1895, %v1897
    %v1899 = vrot.slane %v1891, %v1898
    %v1901 = vunpack.c.l.s4 1966171168
    %v1902 = vunpack.c.0.s8 %v1901
    %v1903 = vlaneseq
    %v1904 = vshrl.u32 %v1903, 7
    %v1905 = vsub.s32 %v1902, %v1904
    %v1906 = vrot.slane %v1892, %v1905
    %v1907 = vcombine.low %v1899, %v1906
    %v1908 = vcombine.low %v1881, %v1882
    %v1910 = vunpack.c.l.s4 1966171168
    %v1911 = vunpack.c.0.s8 %v1910
    %v1912 = vlaneseq
    %v1913 = vshrl.u32 %v1912, 7
    %v1914 = vsub.s32 %v1911, %v1913
    %v1915 = vrot.slane %v1908, %v1914
    %v1916 = vcombine.low %v1555, %v1562
    %v1917 = vcombine.low %v1569, %v1915
    %v1919 = vunpack.c.l.s4 1966171168
    %v1920 = vunpack.c.0.s8 %v1919
    %v1921 = vlaneseq
    %v1922 = vshrl.u32 %v1921, 7
    %v1923 = vsub.s32 %v1920, %v1922
    %v1924 = vrot.slane %v1916, %v1923
    %v1926 = vunpack.c.l.s4 1966171168
    %v1927 = vunpack.c.0.s8 %v1926
    %v1928 = vlaneseq
    %v1929 = vshrl.u32 %v1928, 7
    %v1930 = vsub.s32 %v1927, %v1929
    %v1931 = vrot.slane %v1917, %v1930
    %v1932 = vcombine.low %v1924, %v1931
    %v1951 = vunpack.c.l.b16 %v1863
    %v1952 = vunpack.c.l.b16 %v1864
    %v1953 = vunpack.c.l.b16 %v1865
    %v1954 = vunpack.c.l.b16 %v1866
    %v1955 = vunpack.c.l.b16 %v1867
    %v1956 = vunpack.c.l.b16 %v1868
    %v1957 = vunpack.c.l.b16 %v1869
    %v1958 = vunpack.c.l.b16 %v1870
    %v1959 = vunpack.c.l.b16 %v1871
    %v1960 = vunpack.c.l.b16 %v1872
    %v1961 = vunpack.c.l.b16 %v1873
    %v1962 = vunpack.c.l.b16 %v1874
    %v1963 = vunpack.c.l.b16 %v1875
    %v1964 = vunpack.c.l.b16 %v1876
    %v1965 = vunpack.c.l.b16 %v1877
    %v1966 = vunpack.c.l.b16 %v1878
    %v1967 = vpack.c.b16 %v1952, %v1951
    %v1968 = vpack.c.b16 %v1954, %v1953
    %v1969 = vpack.c.b16 %v1956, %v1955
    %v1970 = vpack.c.b16 %v1958, %v1957
    %v1971 = vpack.c.b16 %v1960, %v1959
    %v1972 = vpack.c.b16 %v1962, %v1961
    %v1973 = vpack.c.b16 %v1964, %v1963
    %v1974 = vpack.c.b16 %v1966, %v1965
    %1983 = vmatprep.subr.bf16.mxu0 0
    %1984 = vmatpush1.bf16.msra.mxu0 %v1974
    %1985 = vmatprep.subr.bf16.mxu0 0
    %1986 = vmatpush1.bf16.msra.mxu0 %v1973
    %1987 = vmatprep.subr.bf16.mxu0 0
    %1988 = vmatpush1.bf16.msra.mxu0 %v1972
    %1989 = vmatprep.subr.bf16.mxu0 0
    %1990 = vmatpush1.bf16.msra.mxu0 %v1971
    %1991 = vmatprep.subr.bf16.mxu0 0
    %1992 = vmatpush1.bf16.msra.mxu0 %v1970
    %1993 = vmatprep.subr.bf16.mxu0 0
    %1994 = vmatpush1.bf16.msra.mxu0 %v1969
    %1995 = vmatprep.subr.bf16.mxu0 0
    %1996 = vmatpush1.bf16.msra.mxu0 %v1968
    %1997 = vmatprep.subr.bf16.mxu0 0
    %1998 = vmatpush1.bf16.msra.mxu0 %v1967
    %1999 = vmatprep.subr.bf16.mxu0 0
    %2000 = vmatpush2.bf16.msra.mxu0 0
    %2001 = vmatprep.subr.bf16.mxu0 0
    %2002 = vmatpush2.bf16.msra.mxu0 0
    %2003 = vmatprep.subr.bf16.mxu0 0
    %2004 = vmatpush2.bf16.msra.mxu0 0
    %2005 = vmatprep.subr.bf16.mxu0 0
    %2006 = vmatpush2.bf16.msra.mxu0 0
    %2007 = vmatprep.subr.bf16.mxu0 0
    %2008 = vmatpush2.bf16.msra.mxu0 0
    %2009 = vmatprep.subr.bf16.mxu0 0
    %2010 = vmatpush2.bf16.msra.mxu0 0
    %2011 = vmatprep.subr.bf16.mxu0 0
    %2012 = vmatpush2.bf16.msra.mxu0 0
    %2013 = vmatprep.subr.bf16.mxu0 0
    %2014 = vmatpush2.bf16.msra.mxu0 0
    %2015 = vmatprep.mubr.bf16.mxu0 0
    %2016 = vmatmul.mubr.bf16.gmra.mxu0 %v1907
    %v2017 = vpop.f32.mrf.mxu0
    %v2018 = vadd.f32 0.0, %v2017
    %v2019 = vpop.f32.mrf.mxu0
    %v2020 = vpop.f32.mrf.mxu0
    %v2021 = vadd.f32 0.0, %v2020
    %v2022 = vpop.f32.mrf.mxu0
    %2023 = vmatprep.mubr.bf16.mxu0 0
    %2024 = vmatmul.mubr.bf16.gmra.mxu0 %v1932
    %v2025 = vpop.f32.mrf.mxu0
    %v2026 = vadd.f32 0.0, %v2025
    %v2027 = vpop.f32.mrf.mxu0
    %v2028 = vpop.f32.mrf.mxu0
    %v2029 = vadd.f32 0.0, %v2028
    %v2030 = vpop.f32.mrf.mxu0
    %2031 = vdwg.mxu0
    %v2032 = vadd.f32 %v1859, %v2018
    %v2033 = vadd.f32 %v1860, %v2021
    %v2034 = vadd.f32 %v1861, %v2026
    %v2035 = vadd.f32 %v1862, %v2029
    %v2036 = vmax.f32 %v2032, 0.0
    %v2037 = vmax.f32 %v2033, 0.0
    %v2038 = vmax.f32 %v2034, 0.0
    %v2039 = vmax.f32 %v2035, 0.0
    %v2040 = vpack.c.bf16 %v2037, %v2036
    %v2041 = vpack.c.bf16 %v2039, %v2038
    %v2044 = vcombine.high %v2040, %v2040
    %v2046 = vunpack.c.l.s4 1983009808
    %v2047 = vunpack.c.0.s8 %v2046
    %v2048 = vlaneseq
    %v2049 = vshrl.u32 %v2048, 7
    %v2050 = vsub.s32 %v2047, %v2049
    %v2051 = vrot.slane %v2040, %v2050
    %v2053 = vunpack.c.l.s4 1983009808
    %v2054 = vunpack.c.0.s8 %v2053
    %v2055 = vlaneseq
    %v2056 = vshrl.u32 %v2055, 7
    %v2057 = vsub.s32 %v2054, %v2056
    %v2058 = vrot.slane %v2044, %v2057
    %v2059 = vcombine.high %v2051, %v2051
    %v2060 = vcombine.high %v2058, %v2058
    %v2061 = vcombine.high %v2041, %v2041
    %v2063 = vunpack.c.l.s4 1983009808
    %v2064 = vunpack.c.0.s8 %v2063
    %v2065 = vlaneseq
    %v2066 = vshrl.u32 %v2065, 7
    %v2067 = vsub.s32 %v2064, %v2066
    %v2068 = vrot.slane %v2041, %v2067
    %v2070 = vunpack.c.l.s4 1983009808
    %v2071 = vunpack.c.0.s8 %v2070
    %v2072 = vlaneseq
    %v2073 = vshrl.u32 %v2072, 7
    %v2074 = vsub.s32 %v2071, %v2073
    %v2075 = vrot.slane %v2061, %v2074
    %v2076 = vcombine.high %v2068, %v2068
    %v2077 = vcombine.high %v2075, %v2075
    %v2078 = vld [vmem:[%s6] sm:$0x1]
    %v2080 = vlaneseq
    %v2081 = vshrl.u32 %v2080, 7
    %v2082 = vsub.s32 0, %v2081
    %v2083 = vrot.slane %v2078, %v2082
    %v2085 = vld [vmem:[%s5] sm:$0xf]
    %v2086 = vld [vmem:[%s5 + $0x4] sm:$0xf]
    %v2087 = vld [vmem:[%s5 + $0x8] sm:$0xf]
    %v2088 = vld [vmem:[%s5 + $0xc] sm:$0xf]
    %v2089 = vld [vmem:[%s5 + $0x10] sm:$0xf]
    %v2090 = vld [vmem:[%s5 + $0x14] sm:$0xf]
    %v2091 = vld [vmem:[%s5 + $0x18] sm:$0xf]
    %v2092 = vld [vmem:[%s5 + $0x1c] sm:$0xf]
    %v2093 = vcombine.low %v2051, %v2059
    %v2094 = vcombine.low %v2068, %v2076
    %v2096 = vunpack.c.l.s4 1966171168
    %v2097 = vunpack.c.0.s8 %v2096
    %v2098 = vlaneseq
    %v2099 = vshrl.u32 %v2098, 7
    %v2100 = vsub.s32 %v2097, %v2099
    %v2101 = vrot.slane %v2093, %v2100
    %v2103 = vunpack.c.l.s4 1966171168
    %v2104 = vunpack.c.0.s8 %v2103
    %v2105 = vlaneseq
    %v2106 = vshrl.u32 %v2105, 7
    %v2107 = vsub.s32 %v2104, %v2106
    %v2108 = vrot.slane %v2094, %v2107
    %v2109 = vcombine.low %v2101, %v2108
    %v2111 = vunpack.c.l.s4 1966171168
    %v2112 = vunpack.c.0.s8 %v2111
    %v2113 = vlaneseq
    %v2114 = vshrl.u32 %v2113, 7
    %v2115 = vsub.s32 %v2112, %v2114
    %v2116 = vrot.slane %v2109, %v2115
    %v2125 = vunpack.c.l.b16 %v2085
    %v2126 = vunpack.c.l.b16 %v2086
    %v2127 = vunpack.c.l.b16 %v2087
    %v2128 = vunpack.c.l.b16 %v2088
    %v2129 = vunpack.c.l.b16 %v2089
    %v2130 = vunpack.c.l.b16 %v2090
    %v2131 = vunpack.c.l.b16 %v2091
    %v2132 = vunpack.c.l.b16 %v2092
    %v2133 = vpack.c.b16 %v2126, %v2125
    %v2134 = vpack.c.b16 %v2128, %v2127
    %v2135 = vpack.c.b16 %v2130, %v2129
    %v2136 = vpack.c.b16 %v2132, %v2131
    %vm2141 = vcmask 523264
    %v2143 = vsel %vm2141, %v2116, 0
    %2145 = vmatprep.subr.bf16.mxu0 0
    %2146 = vmatpush1.bf16.msra.mxu0 0
    %2147 = vmatprep.subr.bf16.mxu0 0
    %2148 = vmatpush1.bf16.msra.mxu0 0
    %2149 = vmatprep.subr.bf16.mxu0 0
    %2150 = vmatpush1.bf16.msra.mxu0 0
    %2151 = vmatprep.subr.bf16.mxu0 0
    %2152 = vmatpush1.bf16.msra.mxu0 0
    %2153 = vmatprep.subr.bf16.mxu0 0
    %2154 = vmatpush1.bf16.msra.mxu0 %v2136
    %2155 = vmatprep.subr.bf16.mxu0 0
    %2156 = vmatpush1.bf16.msra.mxu0 %v2135
    %2157 = vmatprep.subr.bf16.mxu0 0
    %2158 = vmatpush1.bf16.msra.mxu0 %v2134
    %2159 = vmatprep.subr.bf16.mxu0 0
    %2160 = vmatpush1.bf16.msra.mxu0 %v2133
    %2161 = vmatprep.subr.bf16.mxu0 0
    %2162 = vmatpush2.bf16.msra.mxu0 0
    %2163 = vmatprep.subr.bf16.mxu0 0
    %2164 = vmatpush2.bf16.msra.mxu0 0
    %2165 = vmatprep.subr.bf16.mxu0 0
    %2166 = vmatpush2.bf16.msra.mxu0 0
    %2167 = vmatprep.subr.bf16.mxu0 0
    %2168 = vmatpush2.bf16.msra.mxu0 0
    %2169 = vmatprep.subr.bf16.mxu0 0
    %2170 = vmatpush2.bf16.msra.mxu0 0
    %2171 = vmatprep.subr.bf16.mxu0 0
    %2172 = vmatpush2.bf16.msra.mxu0 0
    %2173 = vmatprep.subr.bf16.mxu0 0
    %2174 = vmatpush2.bf16.msra.mxu0 0
    %2175 = vmatprep.subr.bf16.mxu0 0
    %2176 = vmatpush2.bf16.msra.mxu0 0
    %2177 = vmatprep.mubr.bf16.mxu0 0
    %2178 = vmatmul.mubr.bf16.gmra.mxu0 %v2143
    %v2179 = vpop.f32.mrf.mxu0
    %v2180 = vadd.f32 0.0, %v2179
    %v2181 = vpop.f32.mrf.mxu0
    %v2182 = vpop.f32.mrf.mxu0
    %v2183 = vpop.f32.mrf.mxu0
    %2184 = vdwg.mxu0
    %v2185 = vadd.f32 %v2083, %v2180
    %v2187 = vunpack.c.l.s4 1966171168
    %v2188 = vunpack.c.0.s8 %v2187
    %v2189 = vlaneseq
    %v2190 = vshrl.u32 %v2189, 7
    %v2191 = vsub.s32 %v2188, %v2190
    %v2192 = vrot.slane %v2051, %v2191
    %v2193 = vcombine.high %v2192, %v2192
    %v2195 = vunpack.c.l.s4 1966171168
    %v2196 = vunpack.c.0.s8 %v2195
    %v2197 = vlaneseq
    %v2198 = vshrl.u32 %v2197, 7
    %v2199 = vsub.s32 %v2196, %v2198
    %v2200 = vrot.slane %v2059, %v2199
    %v2201 = vcombine.high %v2200, %v2200
    %v2203 = vunpack.c.l.s4 1966171168
    %v2204 = vunpack.c.0.s8 %v2203
    %v2205 = vlaneseq
    %v2206 = vshrl.u32 %v2205, 7
    %v2207 = vsub.s32 %v2204, %v2206
    %v2208 = vrot.slane %v2068, %v2207
    %v2209 = vcombine.high %v2208, %v2208
    %v2211 = vunpack.c.l.s4 1966171168
    %v2212 = vunpack.c.0.s8 %v2211
    %v2213 = vlaneseq
    %v2214 = vshrl.u32 %v2213, 7
    %v2215 = vsub.s32 %v2212, %v2214
    %v2216 = vrot.slane %v2076, %v2215
    %v2217 = vcombine.high %v2216, %v2216
    %vm2218 = vsmask.f32 256
    %vm2219 = vsmask.f32 1284
    %vm2220 = vmor %vm2218, %vm2219
    %vm2221 = vsmask.f32 2312
    %vm2222 = vmor %vm2220, %vm2221
    %vm2223 = vsmask.f32 3340
    %vm2224 = vmor %vm2222, %vm2223
    %vm2225 = vsmask.f32 4368
    %vm2226 = vmor %vm2224, %vm2225
    %vm2227 = vsmask.f32 5396
    %vm2228 = vmor %vm2226, %vm2227
    %vm2229 = vsmask.f32 6424
    %vm2230 = vmor %vm2228, %vm2229
    %vm2231 = vsmask.f32 7452
    %vm2232 = vmor %vm2230, %vm2231
    %v2234 = vshrl.u32 %v2192, 16
    %v2236 = vrot.slane %v2234, 7
    %v2237 = vrot.slane %v2236, 1
    %v2239 = vshll.u32 %v2193, 16
    %v2241 = vsel %vm2232, %v2237, %v2239
    %v2243 = vshrl.u32 %v2200, 16
    %v2245 = vrot.slane %v2243, 7
    %v2246 = vrot.slane %v2245, 1
    %v2248 = vshll.u32 %v2201, 16
    %v2250 = vsel %vm2232, %v2246, %v2248
    %v2252 = vshrl.u32 %v2208, 16
    %v2254 = vrot.slane %v2252, 7
    %v2255 = vrot.slane %v2254, 1
    %v2257 = vshll.u32 %v2209, 16
    %v2259 = vsel %vm2232, %v2255, %v2257
    %v2261 = vshrl.u32 %v2216, 16
    %v2263 = vrot.slane %v2261, 7
    %v2264 = vrot.slane %v2263, 1
    %v2266 = vshll.u32 %v2217, 16
    %v2268 = vsel %vm2232, %v2264, %v2266
    %v2269 = vld [vmem:[%s5 + $0x20] sm:$0xf]
    %v2270 = vld [vmem:[%s5 + $0x24] sm:$0xf]
    %v2271 = vld [vmem:[%s5 + $0x28] sm:$0xf]
    %v2272 = vld [vmem:[%s5 + $0x2c] sm:$0xf]
    %v2273 = vld [vmem:[%s5 + $0x30] sm:$0xf]
    %v2274 = vld [vmem:[%s5 + $0x34] sm:$0xf]
    %v2275 = vld [vmem:[%s5 + $0x38] sm:$0xf]
    %v2276 = vld [vmem:[%s5 + $0x3c] sm:$0xf]
    %v2277 = vcombine.low %v2241, %v2250
    %v2278 = vcombine.low %v2259, %v2268
    %v2280 = vunpack.c.l.s4 1966171168
    %v2281 = vunpack.c.0.s8 %v2280
    %v2282 = vlaneseq
    %v2283 = vshrl.u32 %v2282, 7
    %v2284 = vsub.s32 %v2281, %v2283
    %v2285 = vrot.slane %v2277, %v2284
    %v2287 = vunpack.c.l.s4 1966171168
    %v2288 = vunpack.c.0.s8 %v2287
    %v2289 = vlaneseq
    %v2290 = vshrl.u32 %v2289, 7
    %v2291 = vsub.s32 %v2288, %v2290
    %v2292 = vrot.slane %v2278, %v2291
    %v2293 = vcombine.low %v2285, %v2292
    %v2295 = vunpack.c.l.s4 1966171168
    %v2296 = vunpack.c.0.s8 %v2295
    %v2297 = vlaneseq
    %v2298 = vshrl.u32 %v2297, 7
    %v2299 = vsub.s32 %v2296, %v2298
    %v2300 = vrot.slane %v2293, %v2299
    %v2309 = vunpack.c.l.b16 %v2269
    %v2310 = vunpack.c.l.b16 %v2270
    %v2311 = vunpack.c.l.b16 %v2271
    %v2312 = vunpack.c.l.b16 %v2272
    %v2313 = vunpack.c.l.b16 %v2273
    %v2314 = vunpack.c.l.b16 %v2274
    %v2315 = vunpack.c.l.b16 %v2275
    %v2316 = vunpack.c.l.b16 %v2276
    %v2317 = vpack.c.b16 %v2310, %v2309
    %v2318 = vpack.c.b16 %v2312, %v2311
    %v2319 = vpack.c.b16 %v2314, %v2313
    %v2320 = vpack.c.b16 %v2316, %v2315
    %v2326 = vsel %vm2141, %v2300, 0
    %2328 = vmatprep.subr.bf16.mxu0 0
    %2329 = vmatpush1.bf16.msra.mxu0 0
    %2330 = vmatprep.subr.bf16.mxu0 0
    %2331 = vmatpush1.bf16.msra.mxu0 0
    %2332 = vmatprep.subr.bf16.mxu0 0
    %2333 = vmatpush1.bf16.msra.mxu0 0
    %2334 = vmatprep.subr.bf16.mxu0 0
    %2335 = vmatpush1.bf16.msra.mxu0 0
    %2336 = vmatprep.subr.bf16.mxu0 0
    %2337 = vmatpush1.bf16.msra.mxu0 %v2320
    %2338 = vmatprep.subr.bf16.mxu0 0
    %2339 = vmatpush1.bf16.msra.mxu0 %v2319
    %2340 = vmatprep.subr.bf16.mxu0 0
    %2341 = vmatpush1.bf16.msra.mxu0 %v2318
    %2342 = vmatprep.subr.bf16.mxu0 0
    %2343 = vmatpush1.bf16.msra.mxu0 %v2317
    %2344 = vmatprep.subr.bf16.mxu0 0
    %2345 = vmatpush2.bf16.msra.mxu0 0
    %2346 = vmatprep.subr.bf16.mxu0 0
    %2347 = vmatpush2.bf16.msra.mxu0 0
    %2348 = vmatprep.subr.bf16.mxu0 0
    %2349 = vmatpush2.bf16.msra.mxu0 0
    %2350 = vmatprep.subr.bf16.mxu0 0
    %2351 = vmatpush2.bf16.msra.mxu0 0
    %2352 = vmatprep.subr.bf16.mxu0 0
    %2353 = vmatpush2.bf16.msra.mxu0 0
    %2354 = vmatprep.subr.bf16.mxu0 0
    %2355 = vmatpush2.bf16.msra.mxu0 0
    %2356 = vmatprep.subr.bf16.mxu0 0
    %2357 = vmatpush2.bf16.msra.mxu0 0
    %2358 = vmatprep.subr.bf16.mxu0 0
    %2359 = vmatpush2.bf16.msra.mxu0 0
    %2360 = vmatprep.mubr.bf16.mxu0 0
    %2361 = vmatmul.mubr.bf16.gmra.mxu0 %v2326
    %v2362 = vpop.f32.mrf.mxu0
    %v2363 = vadd.f32 0.0, %v2362
    %v2364 = vpop.f32.mrf.mxu0
    %v2365 = vpop.f32.mrf.mxu0
    %v2366 = vpop.f32.mrf.mxu0
    %2367 = vdwg.mxu0
    %v2368 = vadd.f32 %v2185, %v2363
    %v2369 = vld [vmem:[%s5 + $0x40] sm:$0xf]
    %v2370 = vld [vmem:[%s5 + $0x44] sm:$0xf]
    %v2371 = vld [vmem:[%s5 + $0x48] sm:$0xf]
    %v2372 = vld [vmem:[%s5 + $0x4c] sm:$0xf]
    %v2373 = vld [vmem:[%s5 + $0x50] sm:$0xf]
    %v2374 = vld [vmem:[%s5 + $0x54] sm:$0xf]
    %v2375 = vld [vmem:[%s5 + $0x58] sm:$0xf]
    %v2376 = vld [vmem:[%s5 + $0x5c] sm:$0xf]
    %v2377 = vcombine.low %v2193, %v2201
    %v2378 = vcombine.low %v2209, %v2217
    %v2380 = vunpack.c.l.s4 1966171168
    %v2381 = vunpack.c.0.s8 %v2380
    %v2382 = vlaneseq
    %v2383 = vshrl.u32 %v2382, 7
    %v2384 = vsub.s32 %v2381, %v2383
    %v2385 = vrot.slane %v2377, %v2384
    %v2387 = vunpack.c.l.s4 1966171168
    %v2388 = vunpack.c.0.s8 %v2387
    %v2389 = vlaneseq
    %v2390 = vshrl.u32 %v2389, 7
    %v2391 = vsub.s32 %v2388, %v2390
    %v2392 = vrot.slane %v2378, %v2391
    %v2393 = vcombine.low %v2385, %v2392
    %v2395 = vunpack.c.l.s4 1966171168
    %v2396 = vunpack.c.0.s8 %v2395
    %v2397 = vlaneseq
    %v2398 = vshrl.u32 %v2397, 7
    %v2399 = vsub.s32 %v2396, %v2398
    %v2400 = vrot.slane %v2393, %v2399
    %v2409 = vunpack.c.l.b16 %v2369
    %v2410 = vunpack.c.l.b16 %v2370
    %v2411 = vunpack.c.l.b16 %v2371
    %v2412 = vunpack.c.l.b16 %v2372
    %v2413 = vunpack.c.l.b16 %v2373
    %v2414 = vunpack.c.l.b16 %v2374
    %v2415 = vunpack.c.l.b16 %v2375
    %v2416 = vunpack.c.l.b16 %v2376
    %v2417 = vpack.c.b16 %v2410, %v2409
    %v2418 = vpack.c.b16 %v2412, %v2411
    %v2419 = vpack.c.b16 %v2414, %v2413
    %v2420 = vpack.c.b16 %v2416, %v2415
    %v2426 = vsel %vm2141, %v2400, 0
    %2428 = vmatprep.subr.bf16.mxu0 0
    %2429 = vmatpush1.bf16.msra.mxu0 0
    %2430 = vmatprep.subr.bf16.mxu0 0
    %2431 = vmatpush1.bf16.msra.mxu0 0
    %2432 = vmatprep.subr.bf16.mxu0 0
    %2433 = vmatpush1.bf16.msra.mxu0 0
    %2434 = vmatprep.subr.bf16.mxu0 0
    %2435 = vmatpush1.bf16.msra.mxu0 0
    %2436 = vmatprep.subr.bf16.mxu0 0
    %2437 = vmatpush1.bf16.msra.mxu0 %v2420
    %2438 = vmatprep.subr.bf16.mxu0 0
    %2439 = vmatpush1.bf16.msra.mxu0 %v2419
    %2440 = vmatprep.subr.bf16.mxu0 0
    %2441 = vmatpush1.bf16.msra.mxu0 %v2418
    %2442 = vmatprep.subr.bf16.mxu0 0
    %2443 = vmatpush1.bf16.msra.mxu0 %v2417
    %2444 = vmatprep.subr.bf16.mxu0 0
    %2445 = vmatpush2.bf16.msra.mxu0 0
    %2446 = vmatprep.subr.bf16.mxu0 0
    %2447 = vmatpush2.bf16.msra.mxu0 0
    %2448 = vmatprep.subr.bf16.mxu0 0
    %2449 = vmatpush2.bf16.msra.mxu0 0
    %2450 = vmatprep.subr.bf16.mxu0 0
    %2451 = vmatpush2.bf16.msra.mxu0 0
    %2452 = vmatprep.subr.bf16.mxu0 0
    %2453 = vmatpush2.bf16.msra.mxu0 0
    %2454 = vmatprep.subr.bf16.mxu0 0
    %2455 = vmatpush2.bf16.msra.mxu0 0
    %2456 = vmatprep.subr.bf16.mxu0 0
    %2457 = vmatpush2.bf16.msra.mxu0 0
    %2458 = vmatprep.subr.bf16.mxu0 0
    %2459 = vmatpush2.bf16.msra.mxu0 0
    %2460 = vmatprep.mubr.bf16.mxu0 0
    %2461 = vmatmul.mubr.bf16.gmra.mxu0 %v2426
    %v2462 = vpop.f32.mrf.mxu0
    %v2463 = vadd.f32 0.0, %v2462
    %v2464 = vpop.f32.mrf.mxu0
    %v2465 = vpop.f32.mrf.mxu0
    %v2466 = vpop.f32.mrf.mxu0
    %2467 = vdwg.mxu0
    %v2468 = vadd.f32 %v2368, %v2463
    %v2469 = vld [vmem:[%s5 + $0x60] sm:$0xf]
    %v2470 = vld [vmem:[%s5 + $0x64] sm:$0xf]
    %v2471 = vld [vmem:[%s5 + $0x68] sm:$0xf]
    %v2472 = vld [vmem:[%s5 + $0x6c] sm:$0xf]
    %v2473 = vld [vmem:[%s5 + $0x70] sm:$0xf]
    %v2474 = vld [vmem:[%s5 + $0x74] sm:$0xf]
    %v2475 = vld [vmem:[%s5 + $0x78] sm:$0xf]
    %v2476 = vld [vmem:[%s5 + $0x7c] sm:$0xf]
    %v2477 = vcombine.low %v2059, %v2058
    %v2478 = vcombine.low %v2076, %v2075
    %v2480 = vunpack.c.l.s4 1966171168
    %v2481 = vunpack.c.0.s8 %v2480
    %v2482 = vlaneseq
    %v2483 = vshrl.u32 %v2482, 7
    %v2484 = vsub.s32 %v2481, %v2483
    %v2485 = vrot.slane %v2477, %v2484
    %v2487 = vunpack.c.l.s4 1966171168
    %v2488 = vunpack.c.0.s8 %v2487
    %v2489 = vlaneseq
    %v2490 = vshrl.u32 %v2489, 7
    %v2491 = vsub.s32 %v2488, %v2490
    %v2492 = vrot.slane %v2478, %v2491
    %v2493 = vcombine.low %v2485, %v2492
    %v2495 = vunpack.c.l.s4 1966171168
    %v2496 = vunpack.c.0.s8 %v2495
    %v2497 = vlaneseq
    %v2498 = vshrl.u32 %v2497, 7
    %v2499 = vsub.s32 %v2496, %v2498
    %v2500 = vrot.slane %v2493, %v2499
    %v2509 = vunpack.c.l.b16 %v2469
    %v2510 = vunpack.c.l.b16 %v2470
    %v2511 = vunpack.c.l.b16 %v2471
    %v2512 = vunpack.c.l.b16 %v2472
    %v2513 = vunpack.c.l.b16 %v2473
    %v2514 = vunpack.c.l.b16 %v2474
    %v2515 = vunpack.c.l.b16 %v2475
    %v2516 = vunpack.c.l.b16 %v2476
    %v2517 = vpack.c.b16 %v2510, %v2509
    %v2518 = vpack.c.b16 %v2512, %v2511
    %v2519 = vpack.c.b16 %v2514, %v2513
    %v2520 = vpack.c.b16 %v2516, %v2515
    %v2526 = vsel %vm2141, %v2500, 0
    %2528 = vmatprep.subr.bf16.mxu0 0
    %2529 = vmatpush1.bf16.msra.mxu0 0
    %2530 = vmatprep.subr.bf16.mxu0 0
    %2531 = vmatpush1.bf16.msra.mxu0 0
    %2532 = vmatprep.subr.bf16.mxu0 0
    %2533 = vmatpush1.bf16.msra.mxu0 0
    %2534 = vmatprep.subr.bf16.mxu0 0
    %2535 = vmatpush1.bf16.msra.mxu0 0
    %2536 = vmatprep.subr.bf16.mxu0 0
    %2537 = vmatpush1.bf16.msra.mxu0 %v2520
    %2538 = vmatprep.subr.bf16.mxu0 0
    %2539 = vmatpush1.bf16.msra.mxu0 %v2519
    %2540 = vmatprep.subr.bf16.mxu0 0
    %2541 = vmatpush1.bf16.msra.mxu0 %v2518
    %2542 = vmatprep.subr.bf16.mxu0 0
    %2543 = vmatpush1.bf16.msra.mxu0 %v2517
    %2544 = vmatprep.subr.bf16.mxu0 0
    %2545 = vmatpush2.bf16.msra.mxu0 0
    %2546 = vmatprep.subr.bf16.mxu0 0
    %2547 = vmatpush2.bf16.msra.mxu0 0
    %2548 = vmatprep.subr.bf16.mxu0 0
    %2549 = vmatpush2.bf16.msra.mxu0 0
    %2550 = vmatprep.subr.bf16.mxu0 0
    %2551 = vmatpush2.bf16.msra.mxu0 0
    %2552 = vmatprep.subr.bf16.mxu0 0
    %2553 = vmatpush2.bf16.msra.mxu0 0
    %2554 = vmatprep.subr.bf16.mxu0 0
    %2555 = vmatpush2.bf16.msra.mxu0 0
    %2556 = vmatprep.subr.bf16.mxu0 0
    %2557 = vmatpush2.bf16.msra.mxu0 0
    %2558 = vmatprep.subr.bf16.mxu0 0
    %2559 = vmatpush2.bf16.msra.mxu0 0
    %2560 = vmatprep.mubr.bf16.mxu0 0
    %2561 = vmatmul.mubr.bf16.gmra.mxu0 %v2526
    %v2562 = vpop.f32.mrf.mxu0
    %v2563 = vadd.f32 0.0, %v2562
    %v2564 = vpop.f32.mrf.mxu0
    %v2565 = vpop.f32.mrf.mxu0
    %v2566 = vpop.f32.mrf.mxu0
    %2567 = vdwg.mxu0
    %v2568 = vadd.f32 %v2468, %v2563
    %v2570 = vunpack.c.l.s4 1966171168
    %v2571 = vunpack.c.0.s8 %v2570
    %v2572 = vlaneseq
    %v2573 = vshrl.u32 %v2572, 7
    %v2574 = vsub.s32 %v2571, %v2573
    %v2575 = vrot.slane %v2058, %v2574
    %v2576 = vcombine.high %v2575, %v2575
    %v2578 = vunpack.c.l.s4 1966171168
    %v2579 = vunpack.c.0.s8 %v2578
    %v2580 = vlaneseq
    %v2581 = vshrl.u32 %v2580, 7
    %v2582 = vsub.s32 %v2579, %v2581
    %v2583 = vrot.slane %v2075, %v2582
    %v2584 = vcombine.high %v2583, %v2583
    %v2586 = vshrl.u32 %v2575, 16
    %v2588 = vrot.slane %v2586, 7
    %v2589 = vrot.slane %v2588, 1
    %v2591 = vshll.u32 %v2576, 16
    %v2593 = vsel %vm2232, %v2589, %v2591
    %v2595 = vshrl.u32 %v2583, 16
    %v2597 = vrot.slane %v2595, 7
    %v2598 = vrot.slane %v2597, 1
    %v2600 = vshll.u32 %v2584, 16
    %v2602 = vsel %vm2232, %v2598, %v2600
    %v2603 = vld [vmem:[%s5 + $0x80] sm:$0xf]
    %v2604 = vld [vmem:[%s5 + $0x84] sm:$0xf]
    %v2605 = vld [vmem:[%s5 + $0x88] sm:$0xf]
    %v2606 = vld [vmem:[%s5 + $0x8c] sm:$0xf]
    %v2607 = vld [vmem:[%s5 + $0x90] sm:$0xf]
    %v2608 = vld [vmem:[%s5 + $0x94] sm:$0xf]
    %v2609 = vld [vmem:[%s5 + $0x98] sm:$0xf]
    %v2610 = vld [vmem:[%s5 + $0x9c] sm:$0xf]
    %v2611 = vcombine.low %v2250, %v2593
    %v2612 = vcombine.low %v2268, %v2602
    %v2614 = vunpack.c.l.s4 1966171168
    %v2615 = vunpack.c.0.s8 %v2614
    %v2616 = vlaneseq
    %v2617 = vshrl.u32 %v2616, 7
    %v2618 = vsub.s32 %v2615, %v2617
    %v2619 = vrot.slane %v2611, %v2618
    %v2621 = vunpack.c.l.s4 1966171168
    %v2622 = vunpack.c.0.s8 %v2621
    %v2623 = vlaneseq
    %v2624 = vshrl.u32 %v2623, 7
    %v2625 = vsub.s32 %v2622, %v2624
    %v2626 = vrot.slane %v2612, %v2625
    %v2627 = vcombine.low %v2619, %v2626
    %v2629 = vunpack.c.l.s4 1966171168
    %v2630 = vunpack.c.0.s8 %v2629
    %v2631 = vlaneseq
    %v2632 = vshrl.u32 %v2631, 7
    %v2633 = vsub.s32 %v2630, %v2632
    %v2634 = vrot.slane %v2627, %v2633
    %v2643 = vunpack.c.l.b16 %v2603
    %v2644 = vunpack.c.l.b16 %v2604
    %v2645 = vunpack.c.l.b16 %v2605
    %v2646 = vunpack.c.l.b16 %v2606
    %v2647 = vunpack.c.l.b16 %v2607
    %v2648 = vunpack.c.l.b16 %v2608
    %v2649 = vunpack.c.l.b16 %v2609
    %v2650 = vunpack.c.l.b16 %v2610
    %v2651 = vpack.c.b16 %v2644, %v2643
    %v2652 = vpack.c.b16 %v2646, %v2645
    %v2653 = vpack.c.b16 %v2648, %v2647
    %v2654 = vpack.c.b16 %v2650, %v2649
    %v2660 = vsel %vm2141, %v2634, 0
    %2662 = vmatprep.subr.bf16.mxu0 0
    %2663 = vmatpush1.bf16.msra.mxu0 0
    %2664 = vmatprep.subr.bf16.mxu0 0
    %2665 = vmatpush1.bf16.msra.mxu0 0
    %2666 = vmatprep.subr.bf16.mxu0 0
    %2667 = vmatpush1.bf16.msra.mxu0 0
    %2668 = vmatprep.subr.bf16.mxu0 0
    %2669 = vmatpush1.bf16.msra.mxu0 0
    %2670 = vmatprep.subr.bf16.mxu0 0
    %2671 = vmatpush1.bf16.msra.mxu0 %v2654
    %2672 = vmatprep.subr.bf16.mxu0 0
    %2673 = vmatpush1.bf16.msra.mxu0 %v2653
    %2674 = vmatprep.subr.bf16.mxu0 0
    %2675 = vmatpush1.bf16.msra.mxu0 %v2652
    %2676 = vmatprep.subr.bf16.mxu0 0
    %2677 = vmatpush1.bf16.msra.mxu0 %v2651
    %2678 = vmatprep.subr.bf16.mxu0 0
    %2679 = vmatpush2.bf16.msra.mxu0 0
    %2680 = vmatprep.subr.bf16.mxu0 0
    %2681 = vmatpush2.bf16.msra.mxu0 0
    %2682 = vmatprep.subr.bf16.mxu0 0
    %2683 = vmatpush2.bf16.msra.mxu0 0
    %2684 = vmatprep.subr.bf16.mxu0 0
    %2685 = vmatpush2.bf16.msra.mxu0 0
    %2686 = vmatprep.subr.bf16.mxu0 0
    %2687 = vmatpush2.bf16.msra.mxu0 0
    %2688 = vmatprep.subr.bf16.mxu0 0
    %2689 = vmatpush2.bf16.msra.mxu0 0
    %2690 = vmatprep.subr.bf16.mxu0 0
    %2691 = vmatpush2.bf16.msra.mxu0 0
    %2692 = vmatprep.subr.bf16.mxu0 0
    %2693 = vmatpush2.bf16.msra.mxu0 0
    %2694 = vmatprep.mubr.bf16.mxu0 0
    %2695 = vmatmul.mubr.bf16.gmra.mxu0 %v2660
    %v2696 = vpop.f32.mrf.mxu0
    %v2697 = vadd.f32 0.0, %v2696
    %v2698 = vpop.f32.mrf.mxu0
    %v2699 = vpop.f32.mrf.mxu0
    %v2700 = vpop.f32.mrf.mxu0
    %2701 = vdwg.mxu0
    %v2702 = vadd.f32 %v2568, %v2697
    %v2703 = vld [vmem:[%s5 + $0xa0] sm:$0xf]
    %v2704 = vld [vmem:[%s5 + $0xa4] sm:$0xf]
    %v2705 = vld [vmem:[%s5 + $0xa8] sm:$0xf]
    %v2706 = vld [vmem:[%s5 + $0xac] sm:$0xf]
    %v2707 = vld [vmem:[%s5 + $0xb0] sm:$0xf]
    %v2708 = vld [vmem:[%s5 + $0xb4] sm:$0xf]
    %v2709 = vld [vmem:[%s5 + $0xb8] sm:$0xf]
    %v2710 = vld [vmem:[%s5 + $0xbc] sm:$0xf]
    %v2711 = vcombine.low %v2201, %v2576
    %v2712 = vcombine.low %v2217, %v2584
    %v2714 = vunpack.c.l.s4 1966171168
    %v2715 = vunpack.c.0.s8 %v2714
    %v2716 = vlaneseq
    %v2717 = vshrl.u32 %v2716, 7
    %v2718 = vsub.s32 %v2715, %v2717
    %v2719 = vrot.slane %v2711, %v2718
    %v2721 = vunpack.c.l.s4 1966171168
    %v2722 = vunpack.c.0.s8 %v2721
    %v2723 = vlaneseq
    %v2724 = vshrl.u32 %v2723, 7
    %v2725 = vsub.s32 %v2722, %v2724
    %v2726 = vrot.slane %v2712, %v2725
    %v2727 = vcombine.low %v2719, %v2726
    %v2729 = vunpack.c.l.s4 1966171168
    %v2730 = vunpack.c.0.s8 %v2729
    %v2731 = vlaneseq
    %v2732 = vshrl.u32 %v2731, 7
    %v2733 = vsub.s32 %v2730, %v2732
    %v2734 = vrot.slane %v2727, %v2733
    %v2743 = vunpack.c.l.b16 %v2703
    %v2744 = vunpack.c.l.b16 %v2704
    %v2745 = vunpack.c.l.b16 %v2705
    %v2746 = vunpack.c.l.b16 %v2706
    %v2747 = vunpack.c.l.b16 %v2707
    %v2748 = vunpack.c.l.b16 %v2708
    %v2749 = vunpack.c.l.b16 %v2709
    %v2750 = vunpack.c.l.b16 %v2710
    %v2751 = vpack.c.b16 %v2744, %v2743
    %v2752 = vpack.c.b16 %v2746, %v2745
    %v2753 = vpack.c.b16 %v2748, %v2747
    %v2754 = vpack.c.b16 %v2750, %v2749
    %v2760 = vsel %vm2141, %v2734, 0
    %2762 = vmatprep.subr.bf16.mxu0 0
    %2763 = vmatpush1.bf16.msra.mxu0 0
    %2764 = vmatprep.subr.bf16.mxu0 0
    %2765 = vmatpush1.bf16.msra.mxu0 0
    %2766 = vmatprep.subr.bf16.mxu0 0
    %2767 = vmatpush1.bf16.msra.mxu0 0
    %2768 = vmatprep.subr.bf16.mxu0 0
    %2769 = vmatpush1.bf16.msra.mxu0 0
    %2770 = vmatprep.subr.bf16.mxu0 0
    %2771 = vmatpush1.bf16.msra.mxu0 %v2754
    %2772 = vmatprep.subr.bf16.mxu0 0
    %2773 = vmatpush1.bf16.msra.mxu0 %v2753
    %2774 = vmatprep.subr.bf16.mxu0 0
    %2775 = vmatpush1.bf16.msra.mxu0 %v2752
    %2776 = vmatprep.subr.bf16.mxu0 0
    %2777 = vmatpush1.bf16.msra.mxu0 %v2751
    %2778 = vmatprep.subr.bf16.mxu0 0
    %2779 = vmatpush2.bf16.msra.mxu0 0
    %2780 = vmatprep.subr.bf16.mxu0 0
    %2781 = vmatpush2.bf16.msra.mxu0 0
    %2782 = vmatprep.subr.bf16.mxu0 0
    %2783 = vmatpush2.bf16.msra.mxu0 0
    %2784 = vmatprep.subr.bf16.mxu0 0
    %2785 = vmatpush2.bf16.msra.mxu0 0
    %2786 = vmatprep.subr.bf16.mxu0 0
    %2787 = vmatpush2.bf16.msra.mxu0 0
    %2788 = vmatprep.subr.bf16.mxu0 0
    %2789 = vmatpush2.bf16.msra.mxu0 0
    %2790 = vmatprep.subr.bf16.mxu0 0
    %2791 = vmatpush2.bf16.msra.mxu0 0
    %2792 = vmatprep.subr.bf16.mxu0 0
    %2793 = vmatpush2.bf16.msra.mxu0 0
    %2794 = vmatprep.mubr.bf16.mxu0 0
    %2795 = vmatmul.mubr.bf16.gmra.mxu0 %v2760
    %v2796 = vpop.f32.mrf.mxu0
    %v2797 = vadd.f32 0.0, %v2796
    %v2798 = vpop.f32.mrf.mxu0
    %v2799 = vpop.f32.mrf.mxu0
    %v2800 = vpop.f32.mrf.mxu0
    %2801 = vdwg.mxu0
    %v2802 = vadd.f32 %v2702, %v2797
    %v2803 = vld [vmem:[%s5 + $0xc0] sm:$0xf]
    %v2804 = vld [vmem:[%s5 + $0xc4] sm:$0xf]
    %v2805 = vld [vmem:[%s5 + $0xc8] sm:$0xf]
    %v2806 = vld [vmem:[%s5 + $0xcc] sm:$0xf]
    %v2807 = vld [vmem:[%s5 + $0xd0] sm:$0xf]
    %v2808 = vld [vmem:[%s5 + $0xd4] sm:$0xf]
    %v2809 = vld [vmem:[%s5 + $0xd8] sm:$0xf]
    %v2810 = vld [vmem:[%s5 + $0xdc] sm:$0xf]
    %v2811 = vcombine.low %v2058, %v2060
    %v2812 = vcombine.low %v2075, %v2077
    %v2814 = vunpack.c.l.s4 1966171168
    %v2815 = vunpack.c.0.s8 %v2814
    %v2816 = vlaneseq
    %v2817 = vshrl.u32 %v2816, 7
    %v2818 = vsub.s32 %v2815, %v2817
    %v2819 = vrot.slane %v2811, %v2818
    %v2821 = vunpack.c.l.s4 1966171168
    %v2822 = vunpack.c.0.s8 %v2821
    %v2823 = vlaneseq
    %v2824 = vshrl.u32 %v2823, 7
    %v2825 = vsub.s32 %v2822, %v2824
    %v2826 = vrot.slane %v2812, %v2825
    %v2827 = vcombine.low %v2819, %v2826
    %v2829 = vunpack.c.l.s4 1966171168
    %v2830 = vunpack.c.0.s8 %v2829
    %v2831 = vlaneseq
    %v2832 = vshrl.u32 %v2831, 7
    %v2833 = vsub.s32 %v2830, %v2832
    %v2834 = vrot.slane %v2827, %v2833
    %v2843 = vunpack.c.l.b16 %v2803
    %v2844 = vunpack.c.l.b16 %v2804
    %v2845 = vunpack.c.l.b16 %v2805
    %v2846 = vunpack.c.l.b16 %v2806
    %v2847 = vunpack.c.l.b16 %v2807
    %v2848 = vunpack.c.l.b16 %v2808
    %v2849 = vunpack.c.l.b16 %v2809
    %v2850 = vunpack.c.l.b16 %v2810
    %v2851 = vpack.c.b16 %v2844, %v2843
    %v2852 = vpack.c.b16 %v2846, %v2845
    %v2853 = vpack.c.b16 %v2848, %v2847
    %v2854 = vpack.c.b16 %v2850, %v2849
    %v2860 = vsel %vm2141, %v2834, 0
    %2862 = vmatprep.subr.bf16.mxu0 0
    %2863 = vmatpush1.bf16.msra.mxu0 0
    %2864 = vmatprep.subr.bf16.mxu0 0
    %2865 = vmatpush1.bf16.msra.mxu0 0
    %2866 = vmatprep.subr.bf16.mxu0 0
    %2867 = vmatpush1.bf16.msra.mxu0 0
    %2868 = vmatprep.subr.bf16.mxu0 0
    %2869 = vmatpush1.bf16.msra.mxu0 0
    %2870 = vmatprep.subr.bf16.mxu0 0
    %2871 = vmatpush1.bf16.msra.mxu0 %v2854
    %2872 = vmatprep.subr.bf16.mxu0 0
    %2873 = vmatpush1.bf16.msra.mxu0 %v2853
    %2874 = vmatprep.subr.bf16.mxu0 0
    %2875 = vmatpush1.bf16.msra.mxu0 %v2852
    %2876 = vmatprep.subr.bf16.mxu0 0
    %2877 = vmatpush1.bf16.msra.mxu0 %v2851
    %2878 = vmatprep.subr.bf16.mxu0 0
    %2879 = vmatpush2.bf16.msra.mxu0 0
    %2880 = vmatprep.subr.bf16.mxu0 0
    %2881 = vmatpush2.bf16.msra.mxu0 0
    %2882 = vmatprep.subr.bf16.mxu0 0
    %2883 = vmatpush2.bf16.msra.mxu0 0
    %2884 = vmatprep.subr.bf16.mxu0 0
    %2885 = vmatpush2.bf16.msra.mxu0 0
    %2886 = vmatprep.subr.bf16.mxu0 0
    %2887 = vmatpush2.bf16.msra.mxu0 0
    %2888 = vmatprep.subr.bf16.mxu0 0
    %2889 = vmatpush2.bf16.msra.mxu0 0
    %2890 = vmatprep.subr.bf16.mxu0 0
    %2891 = vmatpush2.bf16.msra.mxu0 0
    %2892 = vmatprep.subr.bf16.mxu0 0
    %2893 = vmatpush2.bf16.msra.mxu0 0
    %2894 = vmatprep.mubr.bf16.mxu0 0
    %2895 = vmatmul.mubr.bf16.gmra.mxu0 %v2860
    %v2896 = vpop.f32.mrf.mxu0
    %v2897 = vadd.f32 0.0, %v2896
    %v2898 = vpop.f32.mrf.mxu0
    %v2899 = vpop.f32.mrf.mxu0
    %v2900 = vpop.f32.mrf.mxu0
    %2901 = vdwg.mxu0
    %v2902 = vadd.f32 %v2802, %v2897
    %v2904 = vunpack.c.l.s4 1966171168
    %v2905 = vunpack.c.0.s8 %v2904
    %v2906 = vlaneseq
    %v2907 = vshrl.u32 %v2906, 7
    %v2908 = vsub.s32 %v2905, %v2907
    %v2909 = vrot.slane %v2060, %v2908
    %v2910 = vcombine.high %v2909, %v2909
    %v2912 = vunpack.c.l.s4 1966171168
    %v2913 = vunpack.c.0.s8 %v2912
    %v2914 = vlaneseq
    %v2915 = vshrl.u32 %v2914, 7
    %v2916 = vsub.s32 %v2913, %v2915
    %v2917 = vrot.slane %v2077, %v2916
    %v2918 = vcombine.high %v2917, %v2917
    %v2920 = vshrl.u32 %v2909, 16
    %v2922 = vrot.slane %v2920, 7
    %v2923 = vrot.slane %v2922, 1
    %v2925 = vshll.u32 %v2910, 16
    %v2927 = vsel %vm2232, %v2923, %v2925
    %v2929 = vshrl.u32 %v2917, 16
    %v2931 = vrot.slane %v2929, 7
    %v2932 = vrot.slane %v2931, 1
    %v2934 = vshll.u32 %v2918, 16
    %v2936 = vsel %vm2232, %v2932, %v2934
    %v2937 = vld [vmem:[%s5 + $0xe0] sm:$0xf]
    %v2938 = vld [vmem:[%s5 + $0xe4] sm:$0xf]
    %v2939 = vld [vmem:[%s5 + $0xe8] sm:$0xf]
    %v2940 = vld [vmem:[%s5 + $0xec] sm:$0xf]
    %v2941 = vld [vmem:[%s5 + $0xf0] sm:$0xf]
    %v2942 = vld [vmem:[%s5 + $0xf4] sm:$0xf]
    %v2943 = vld [vmem:[%s5 + $0xf8] sm:$0xf]
    %v2944 = vld [vmem:[%s5 + $0xfc] sm:$0xf]
    %v2945 = vcombine.low %v2593, %v2927
    %v2946 = vcombine.low %v2602, %v2936
    %v2948 = vunpack.c.l.s4 1966171168
    %v2949 = vunpack.c.0.s8 %v2948
    %v2950 = vlaneseq
    %v2951 = vshrl.u32 %v2950, 7
    %v2952 = vsub.s32 %v2949, %v2951
    %v2953 = vrot.slane %v2945, %v2952
    %v2955 = vunpack.c.l.s4 1966171168
    %v2956 = vunpack.c.0.s8 %v2955
    %v2957 = vlaneseq
    %v2958 = vshrl.u32 %v2957, 7
    %v2959 = vsub.s32 %v2956, %v2958
    %v2960 = vrot.slane %v2946, %v2959
    %v2961 = vcombine.low %v2953, %v2960
    %v2963 = vunpack.c.l.s4 1966171168
    %v2964 = vunpack.c.0.s8 %v2963
    %v2965 = vlaneseq
    %v2966 = vshrl.u32 %v2965, 7
    %v2967 = vsub.s32 %v2964, %v2966
    %v2968 = vrot.slane %v2961, %v2967
    %v2977 = vunpack.c.l.b16 %v2937
    %v2978 = vunpack.c.l.b16 %v2938
    %v2979 = vunpack.c.l.b16 %v2939
    %v2980 = vunpack.c.l.b16 %v2940
    %v2981 = vunpack.c.l.b16 %v2941
    %v2982 = vunpack.c.l.b16 %v2942
    %v2983 = vunpack.c.l.b16 %v2943
    %v2984 = vunpack.c.l.b16 %v2944
    %v2985 = vpack.c.b16 %v2978, %v2977
    %v2986 = vpack.c.b16 %v2980, %v2979
    %v2987 = vpack.c.b16 %v2982, %v2981
    %v2988 = vpack.c.b16 %v2984, %v2983
    %v2994 = vsel %vm2141, %v2968, 0
    %2996 = vmatprep.subr.bf16.mxu0 0
    %2997 = vmatpush1.bf16.msra.mxu0 0
    %2998 = vmatprep.subr.bf16.mxu0 0
    %2999 = vmatpush1.bf16.msra.mxu0 0
    %3000 = vmatprep.subr.bf16.mxu0 0
    %3001 = vmatpush1.bf16.msra.mxu0 0
    %3002 = vmatprep.subr.bf16.mxu0 0
    %3003 = vmatpush1.bf16.msra.mxu0 0
    %3004 = vmatprep.subr.bf16.mxu0 0
    %3005 = vmatpush1.bf16.msra.mxu0 %v2988
    %3006 = vmatprep.subr.bf16.mxu0 0
    %3007 = vmatpush1.bf16.msra.mxu0 %v2987
    %3008 = vmatprep.subr.bf16.mxu0 0
    %3009 = vmatpush1.bf16.msra.mxu0 %v2986
    %3010 = vmatprep.subr.bf16.mxu0 0
    %3011 = vmatpush1.bf16.msra.mxu0 %v2985
    %3012 = vmatprep.subr.bf16.mxu0 0
    %3013 = vmatpush2.bf16.msra.mxu0 0
    %3014 = vmatprep.subr.bf16.mxu0 0
    %3015 = vmatpush2.bf16.msra.mxu0 0
    %3016 = vmatprep.subr.bf16.mxu0 0
    %3017 = vmatpush2.bf16.msra.mxu0 0
    %3018 = vmatprep.subr.bf16.mxu0 0
    %3019 = vmatpush2.bf16.msra.mxu0 0
    %3020 = vmatprep.subr.bf16.mxu0 0
    %3021 = vmatpush2.bf16.msra.mxu0 0
    %3022 = vmatprep.subr.bf16.mxu0 0
    %3023 = vmatpush2.bf16.msra.mxu0 0
    %3024 = vmatprep.subr.bf16.mxu0 0
    %3025 = vmatpush2.bf16.msra.mxu0 0
    %3026 = vmatprep.subr.bf16.mxu0 0
    %3027 = vmatpush2.bf16.msra.mxu0 0
    %3028 = vmatprep.mubr.bf16.mxu0 0
    %3029 = vmatmul.mubr.bf16.gmra.mxu0 %v2994
    %v3030 = vpop.f32.mrf.mxu0
    %v3031 = vadd.f32 0.0, %v3030
    %v3032 = vpop.f32.mrf.mxu0
    %v3033 = vpop.f32.mrf.mxu0
    %v3034 = vpop.f32.mrf.mxu0
    %3035 = vdwg.mxu0
    %v3036 = vadd.f32 %v2902, %v3031
    %v3037 = vld [vmem:[%s5 + $0x100] sm:$0xf]
    %v3038 = vld [vmem:[%s5 + $0x104] sm:$0xf]
    %v3039 = vld [vmem:[%s5 + $0x108] sm:$0xf]
    %v3040 = vld [vmem:[%s5 + $0x10c] sm:$0xf]
    %v3041 = vld [vmem:[%s5 + $0x110] sm:$0xf]
    %v3042 = vld [vmem:[%s5 + $0x114] sm:$0xf]
    %v3043 = vld [vmem:[%s5 + $0x118] sm:$0xf]
    %v3044 = vld [vmem:[%s5 + $0x11c] sm:$0xf]
    %v3045 = vcombine.low %v2576, %v2910
    %v3046 = vcombine.low %v2584, %v2918
    %v3048 = vunpack.c.l.s4 1966171168
    %v3049 = vunpack.c.0.s8 %v3048
    %v3050 = vlaneseq
    %v3051 = vshrl.u32 %v3050, 7
    %v3052 = vsub.s32 %v3049, %v3051
    %v3053 = vrot.slane %v3045, %v3052
    %v3055 = vunpack.c.l.s4 1966171168
    %v3056 = vunpack.c.0.s8 %v3055
    %v3057 = vlaneseq
    %v3058 = vshrl.u32 %v3057, 7
    %v3059 = vsub.s32 %v3056, %v3058
    %v3060 = vrot.slane %v3046, %v3059
    %v3061 = vcombine.low %v3053, %v3060
    %v3063 = vunpack.c.l.s4 1966171168
    %v3064 = vunpack.c.0.s8 %v3063
    %v3065 = vlaneseq
    %v3066 = vshrl.u32 %v3065, 7
    %v3067 = vsub.s32 %v3064, %v3066
    %v3068 = vrot.slane %v3061, %v3067
    %v3077 = vunpack.c.l.b16 %v3037
    %v3078 = vunpack.c.l.b16 %v3038
    %v3079 = vunpack.c.l.b16 %v3039
    %v3080 = vunpack.c.l.b16 %v3040
    %v3081 = vunpack.c.l.b16 %v3041
    %v3082 = vunpack.c.l.b16 %v3042
    %v3083 = vunpack.c.l.b16 %v3043
    %v3084 = vunpack.c.l.b16 %v3044
    %v3085 = vpack.c.b16 %v3078, %v3077
    %v3086 = vpack.c.b16 %v3080, %v3079
    %v3087 = vpack.c.b16 %v3082, %v3081
    %v3088 = vpack.c.b16 %v3084, %v3083
    %v3094 = vsel %vm2141, %v3068, 0
    %3096 = vmatprep.subr.bf16.mxu0 0
    %3097 = vmatpush1.bf16.msra.mxu0 0
    %3098 = vmatprep.subr.bf16.mxu0 0
    %3099 = vmatpush1.bf16.msra.mxu0 0
    %3100 = vmatprep.subr.bf16.mxu0 0
    %3101 = vmatpush1.bf16.msra.mxu0 0
    %3102 = vmatprep.subr.bf16.mxu0 0
    %3103 = vmatpush1.bf16.msra.mxu0 0
    %3104 = vmatprep.subr.bf16.mxu0 0
    %3105 = vmatpush1.bf16.msra.mxu0 %v3088
    %3106 = vmatprep.subr.bf16.mxu0 0
    %3107 = vmatpush1.bf16.msra.mxu0 %v3087
    %3108 = vmatprep.subr.bf16.mxu0 0
    %3109 = vmatpush1.bf16.msra.mxu0 %v3086
    %3110 = vmatprep.subr.bf16.mxu0 0
    %3111 = vmatpush1.bf16.msra.mxu0 %v3085
    %3112 = vmatprep.subr.bf16.mxu0 0
    %3113 = vmatpush2.bf16.msra.mxu0 0
    %3114 = vmatprep.subr.bf16.mxu0 0
    %3115 = vmatpush2.bf16.msra.mxu0 0
    %3116 = vmatprep.subr.bf16.mxu0 0
    %3117 = vmatpush2.bf16.msra.mxu0 0
    %3118 = vmatprep.subr.bf16.mxu0 0
    %3119 = vmatpush2.bf16.msra.mxu0 0
    %3120 = vmatprep.subr.bf16.mxu0 0
    %3121 = vmatpush2.bf16.msra.mxu0 0
    %3122 = vmatprep.subr.bf16.mxu0 0
    %3123 = vmatpush2.bf16.msra.mxu0 0
    %3124 = vmatprep.subr.bf16.mxu0 0
    %3125 = vmatpush2.bf16.msra.mxu0 0
    %3126 = vmatprep.subr.bf16.mxu0 0
    %3127 = vmatpush2.bf16.msra.mxu0 0
    %3128 = vmatprep.mubr.bf16.mxu0 0
    %3129 = vmatmul.mubr.bf16.gmra.mxu0 %v3094
    %v3130 = vpop.f32.mrf.mxu0
    %v3131 = vadd.f32 0.0, %v3130
    %v3132 = vpop.f32.mrf.mxu0
    %v3133 = vpop.f32.mrf.mxu0
    %v3134 = vpop.f32.mrf.mxu0
    %3135 = vdwg.mxu0
    %v3136 = vadd.f32 %v3036, %v3131
    %v3137 = vmax.f32 %v3136, 0.0
    %v3138 = vpack.c.bf16 %v3137, %v3137
    %v3141 = vunpack.c.l.s4 1966171168
    %v3142 = vunpack.c.0.s8 %v3141
    %v3143 = vlaneseq
    %v3144 = vshrl.u32 %v3143, 7
    %v3145 = vsub.s32 %v3142, %v3144
    %v3146 = vrot.slane %v3138, %v3145
    %v3147 = vcombine.high %v3146, %v3146
    %v3149 = vunpack.c.l.s4 1966171168
    %v3150 = vunpack.c.0.s8 %v3149
    %v3151 = vlaneseq
    %v3152 = vshrl.u32 %v3151, 7
    %v3153 = vsub.s32 %v3150, %v3152
    %v3154 = vrot.slane %v3146, %v3153
    %v3156 = vunpack.c.l.s4 1966171168
    %v3157 = vunpack.c.0.s8 %v3156
    %v3158 = vlaneseq
    %v3159 = vshrl.u32 %v3158, 7
    %v3160 = vsub.s32 %v3157, %v3159
    %v3161 = vrot.slane %v3147, %v3160
    %v3162 = vcombine.high %v3154, %v3154
    %v3163 = vcombine.high %v3161, %v3161
    %v3164 = vld [vmem:[%s8] sm:$0xf]
    %v3166 = vlaneseq
    %v3167 = vshrl.u32 %v3166, 7
    %v3168 = vsub.s32 0, %v3167
    %v3169 = vrot.slane %v3164, %v3168
    %v3170 = vlaneseq
    %v3171 = vshrl.u32 %v3170, 7
    %v3172 = vsub.s32 1, %v3171
    %v3173 = vrot.slane %v3164, %v3172
    %v3174 = vlaneseq
    %v3175 = vshrl.u32 %v3174, 7
    %v3176 = vsub.s32 2, %v3175
    %v3177 = vrot.slane %v3164, %v3176
    %v3178 = vlaneseq
    %v3179 = vshrl.u32 %v3178, 7
    %v3180 = vsub.s32 3, %v3179
    %v3181 = vrot.slane %v3164, %v3180
    %v3186 = vld [vmem:[%s7] sm:$0xff]
    %v3187 = vld [vmem:[%s7 + $0x8] sm:$0xff]
    %v3188 = vld [vmem:[%s7 + $0x10] sm:$0xff]
    %v3189 = vld [vmem:[%s7 + $0x18] sm:$0xff]
    %v3190 = vld [vmem:[%s7 + $0x20] sm:$0xff]
    %v3191 = vld [vmem:[%s7 + $0x28] sm:$0xff]
    %v3192 = vld [vmem:[%s7 + $0x30] sm:$0xff]
    %v3193 = vld [vmem:[%s7 + $0x38] sm:$0xff]
    %v3194 = vld [vmem:[%s7 + $0x40] sm:$0xff]
    %v3195 = vld [vmem:[%s7 + $0x48] sm:$0xff]
    %v3196 = vld [vmem:[%s7 + $0x50] sm:$0xff]
    %v3197 = vld [vmem:[%s7 + $0x58] sm:$0xff]
    %v3198 = vld [vmem:[%s7 + $0x60] sm:$0xff]
    %v3199 = vld [vmem:[%s7 + $0x68] sm:$0xff]
    %v3200 = vld [vmem:[%s7 + $0x70] sm:$0xff]
    %v3201 = vld [vmem:[%s7 + $0x78] sm:$0xff]
    %v3203 = vunpack.c.l.s4 1966171168
    %v3204 = vunpack.c.0.s8 %v3203
    %v3205 = vlaneseq
    %v3206 = vshrl.u32 %v3205, 7
    %v3207 = vsub.s32 %v3204, %v3206
    %v3208 = vrot.slane %v3154, %v3207
    %v3210 = vunpack.c.l.s4 1966171168
    %v3211 = vunpack.c.0.s8 %v3210
    %v3212 = vlaneseq
    %v3213 = vshrl.u32 %v3212, 7
    %v3214 = vsub.s32 %v3211, %v3213
    %v3215 = vrot.slane %v3208, %v3214
    %v3217 = vunpack.c.l.s4 1966171168
    %v3218 = vunpack.c.0.s8 %v3217
    %v3219 = vlaneseq
    %v3220 = vshrl.u32 %v3219, 7
    %v3221 = vsub.s32 %v3218, %v3220
    %v3222 = vrot.slane %v3162, %v3221
    %v3224 = vunpack.c.l.s4 1966171168
    %v3225 = vunpack.c.0.s8 %v3224
    %v3226 = vlaneseq
    %v3227 = vshrl.u32 %v3226, 7
    %v3228 = vsub.s32 %v3225, %v3227
    %v3229 = vrot.slane %v3222, %v3228
    %v3230 = vunpack.c.l.b16 %v3215
    %v3231 = vunpack.c.l.b16 %v3229
    %v3232 = vrot.slane %v3231, 7
    %vm3233 = vcmask 1041409
    %v3234 = vsel %vm3233, %v3232, %v3230
    %v3235 = vpack.c.b16 %v3234, %v3234
    %v3252 = vunpack.c.l.b16 %v3186
    %v3253 = vunpack.c.h.b16 %v3186
    %v3254 = vunpack.c.l.b16 %v3187
    %v3255 = vunpack.c.h.b16 %v3187
    %v3256 = vunpack.c.l.b16 %v3188
    %v3257 = vunpack.c.h.b16 %v3188
    %v3258 = vunpack.c.l.b16 %v3189
    %v3259 = vunpack.c.h.b16 %v3189
    %v3260 = vunpack.c.l.b16 %v3190
    %v3261 = vunpack.c.h.b16 %v3190
    %v3262 = vunpack.c.l.b16 %v3191
    %v3263 = vunpack.c.h.b16 %v3191
    %v3264 = vunpack.c.l.b16 %v3192
    %v3265 = vunpack.c.h.b16 %v3192
    %v3266 = vunpack.c.l.b16 %v3193
    %v3267 = vunpack.c.h.b16 %v3193
    %v3268 = vunpack.c.l.b16 %v3194
    %v3269 = vunpack.c.h.b16 %v3194
    %v3270 = vunpack.c.l.b16 %v3195
    %v3271 = vunpack.c.h.b16 %v3195
    %v3272 = vunpack.c.l.b16 %v3196
    %v3273 = vunpack.c.h.b16 %v3196
    %v3274 = vunpack.c.l.b16 %v3197
    %v3275 = vunpack.c.h.b16 %v3197
    %v3276 = vunpack.c.l.b16 %v3198
    %v3277 = vunpack.c.h.b16 %v3198
    %v3278 = vunpack.c.l.b16 %v3199
    %v3279 = vunpack.c.h.b16 %v3199
    %v3280 = vunpack.c.l.b16 %v3200
    %v3281 = vunpack.c.h.b16 %v3200
    %v3282 = vunpack.c.l.b16 %v3201
    %v3283 = vunpack.c.h.b16 %v3201
    %v3284 = vpack.c.b16 %v3256, %v3252
    %v3285 = vpack.c.b16 %v3257, %v3253
    %v3286 = vpack.c.b16 %v3258, %v3254
    %v3287 = vpack.c.b16 %v3259, %v3255
    %v3288 = vpack.c.b16 %v3264, %v3260
    %v3289 = vpack.c.b16 %v3265, %v3261
    %v3290 = vpack.c.b16 %v3266, %v3262
    %v3291 = vpack.c.b16 %v3267, %v3263
    %v3292 = vpack.c.b16 %v3272, %v3268
    %v3293 = vpack.c.b16 %v3273, %v3269
    %v3294 = vpack.c.b16 %v3274, %v3270
    %v3295 = vpack.c.b16 %v3275, %v3271
    %v3296 = vpack.c.b16 %v3280, %v3276
    %v3297 = vpack.c.b16 %v3281, %v3277
    %v3298 = vpack.c.b16 %v3282, %v3278
    %v3299 = vpack.c.b16 %v3283, %v3279
    %v3317 = vsel %vm2141, %v3235, 0
    %3319 = vmatprep.subr.bf16.mxu0 0
    %3320 = vmatpush1.bf16.msra.mxu0 0
    %3321 = vmatprep.subr.bf16.mxu0 0
    %3322 = vmatpush1.bf16.msra.mxu0 0
    %3323 = vmatprep.subr.bf16.mxu0 0
    %3324 = vmatpush1.bf16.msra.mxu0 0
    %3325 = vmatprep.subr.bf16.mxu0 0
    %3326 = vmatpush1.bf16.msra.mxu0 0
    %3327 = vmatprep.subr.bf16.mxu0 %v3297
    %3328 = vmatpush1.bf16.msra.mxu0 %v3296
    %3329 = vmatprep.subr.bf16.mxu0 %v3293
    %3330 = vmatpush1.bf16.msra.mxu0 %v3292
    %3331 = vmatprep.subr.bf16.mxu0 %v3289
    %3332 = vmatpush1.bf16.msra.mxu0 %v3288
    %3333 = vmatprep.subr.bf16.mxu0 %v3285
    %3334 = vmatpush1.bf16.msra.mxu0 %v3284
    %3335 = vmatprep.subr.bf16.mxu0 0
    %3336 = vmatpush2.bf16.msra.mxu0 0
    %3337 = vmatprep.subr.bf16.mxu0 0
    %3338 = vmatpush2.bf16.msra.mxu0 0
    %3339 = vmatprep.subr.bf16.mxu0 0
    %3340 = vmatpush2.bf16.msra.mxu0 0
    %3341 = vmatprep.subr.bf16.mxu0 0
    %3342 = vmatpush2.bf16.msra.mxu0 0
    %3343 = vmatprep.subr.bf16.mxu0 0
    %3344 = vmatpush2.bf16.msra.mxu0 0
    %3345 = vmatprep.subr.bf16.mxu0 0
    %3346 = vmatpush2.bf16.msra.mxu0 0
    %3347 = vmatprep.subr.bf16.mxu0 0
    %3348 = vmatpush2.bf16.msra.mxu0 0
    %3349 = vmatprep.subr.bf16.mxu0 0
    %3350 = vmatpush2.bf16.msra.mxu0 0
    %3351 = vmatprep.mubr.bf16.mxu0 0
    %3352 = vmatmul.mubr.bf16.gmra.mxu0 %v3317
    %v3353 = vpop.f32.mrf.mxu0
    %v3354 = vadd.f32 0.0, %v3353
    %v3355 = vpop.f32.mrf.mxu0
    %v3356 = vadd.f32 0.0, %v3355
    %v3357 = vpop.f32.mrf.mxu0
    %v3358 = vpop.f32.mrf.mxu0
    %3359 = vdwg.mxu0
    %3360 = vmatprep.subr.bf16.mxu0 0
    %3361 = vmatpush1.bf16.msra.mxu0 0
    %3362 = vmatprep.subr.bf16.mxu0 0
    %3363 = vmatpush1.bf16.msra.mxu0 0
    %3364 = vmatprep.subr.bf16.mxu0 0
    %3365 = vmatpush1.bf16.msra.mxu0 0
    %3366 = vmatprep.subr.bf16.mxu0 0
    %3367 = vmatpush1.bf16.msra.mxu0 0
    %3368 = vmatprep.subr.bf16.mxu0 %v3299
    %3369 = vmatpush1.bf16.msra.mxu0 %v3298
    %3370 = vmatprep.subr.bf16.mxu0 %v3295
    %3371 = vmatpush1.bf16.msra.mxu0 %v3294
    %3372 = vmatprep.subr.bf16.mxu0 %v3291
    %3373 = vmatpush1.bf16.msra.mxu0 %v3290
    %3374 = vmatprep.subr.bf16.mxu0 %v3287
    %3375 = vmatpush1.bf16.msra.mxu0 %v3286
    %3376 = vmatprep.subr.bf16.mxu0 0
    %3377 = vmatpush2.bf16.msra.mxu0 0
    %3378 = vmatprep.subr.bf16.mxu0 0
    %3379 = vmatpush2.bf16.msra.mxu0 0
    %3380 = vmatprep.subr.bf16.mxu0 0
    %3381 = vmatpush2.bf16.msra.mxu0 0
    %3382 = vmatprep.subr.bf16.mxu0 0
    %3383 = vmatpush2.bf16.msra.mxu0 0
    %3384 = vmatprep.subr.bf16.mxu0 0
    %3385 = vmatpush2.bf16.msra.mxu0 0
    %3386 = vmatprep.subr.bf16.mxu0 0
    %3387 = vmatpush2.bf16.msra.mxu0 0
    %3388 = vmatprep.subr.bf16.mxu0 0
    %3389 = vmatpush2.bf16.msra.mxu0 0
    %3390 = vmatprep.subr.bf16.mxu0 0
    %3391 = vmatpush2.bf16.msra.mxu0 0
    %3392 = vmatprep.mubr.bf16.mxu0 0
    %3393 = vmatmul.mubr.bf16.gmra.mxu0 %v3317
    %v3394 = vpop.f32.mrf.mxu0
    %v3395 = vadd.f32 0.0, %v3394
    %v3396 = vpop.f32.mrf.mxu0
    %v3397 = vadd.f32 0.0, %v3396
    %v3398 = vpop.f32.mrf.mxu0
    %v3399 = vpop.f32.mrf.mxu0
    %3400 = vdwg.mxu0
    %v3401 = vadd.f32 %v3169, %v3354
    %v3402 = vadd.f32 %v3173, %v3356
    %v3403 = vadd.f32 %v3177, %v3395
    %v3404 = vadd.f32 %v3181, %v3397
    %v3405 = vld [vmem:[%s7 + $0x80] sm:$0xff]
    %v3406 = vld [vmem:[%s7 + $0x88] sm:$0xff]
    %v3407 = vld [vmem:[%s7 + $0x90] sm:$0xff]
    %v3408 = vld [vmem:[%s7 + $0x98] sm:$0xff]
    %v3409 = vld [vmem:[%s7 + $0xa0] sm:$0xff]
    %v3410 = vld [vmem:[%s7 + $0xa8] sm:$0xff]
    %v3411 = vld [vmem:[%s7 + $0xb0] sm:$0xff]
    %v3412 = vld [vmem:[%s7 + $0xb8] sm:$0xff]
    %v3413 = vld [vmem:[%s7 + $0xc0] sm:$0xff]
    %v3414 = vld [vmem:[%s7 + $0xc8] sm:$0xff]
    %v3415 = vld [vmem:[%s7 + $0xd0] sm:$0xff]
    %v3416 = vld [vmem:[%s7 + $0xd8] sm:$0xff]
    %v3417 = vld [vmem:[%s7 + $0xe0] sm:$0xff]
    %v3418 = vld [vmem:[%s7 + $0xe8] sm:$0xff]
    %v3419 = vld [vmem:[%s7 + $0xf0] sm:$0xff]
    %v3420 = vld [vmem:[%s7 + $0xf8] sm:$0xff]
    %v3421 = vrot.slane %v3230, 1
    %v3422 = vsel %vm3233, %v3231, %v3421
    %v3423 = vpack.c.b16 %v3422, %v3422
    %v3440 = vunpack.c.l.b16 %v3405
    %v3441 = vunpack.c.h.b16 %v3405
    %v3442 = vunpack.c.l.b16 %v3406
    %v3443 = vunpack.c.h.b16 %v3406
    %v3444 = vunpack.c.l.b16 %v3407
    %v3445 = vunpack.c.h.b16 %v3407
    %v3446 = vunpack.c.l.b16 %v3408
    %v3447 = vunpack.c.h.b16 %v3408
    %v3448 = vunpack.c.l.b16 %v3409
    %v3449 = vunpack.c.h.b16 %v3409
    %v3450 = vunpack.c.l.b16 %v3410
    %v3451 = vunpack.c.h.b16 %v3410
    %v3452 = vunpack.c.l.b16 %v3411
    %v3453 = vunpack.c.h.b16 %v3411
    %v3454 = vunpack.c.l.b16 %v3412
    %v3455 = vunpack.c.h.b16 %v3412
    %v3456 = vunpack.c.l.b16 %v3413
    %v3457 = vunpack.c.h.b16 %v3413
    %v3458 = vunpack.c.l.b16 %v3414
    %v3459 = vunpack.c.h.b16 %v3414
    %v3460 = vunpack.c.l.b16 %v3415
    %v3461 = vunpack.c.h.b16 %v3415
    %v3462 = vunpack.c.l.b16 %v3416
    %v3463 = vunpack.c.h.b16 %v3416
    %v3464 = vunpack.c.l.b16 %v3417
    %v3465 = vunpack.c.h.b16 %v3417
    %v3466 = vunpack.c.l.b16 %v3418
    %v3467 = vunpack.c.h.b16 %v3418
    %v3468 = vunpack.c.l.b16 %v3419
    %v3469 = vunpack.c.h.b16 %v3419
    %v3470 = vunpack.c.l.b16 %v3420
    %v3471 = vunpack.c.h.b16 %v3420
    %v3472 = vpack.c.b16 %v3444, %v3440
    %v3473 = vpack.c.b16 %v3445, %v3441
    %v3474 = vpack.c.b16 %v3446, %v3442
    %v3475 = vpack.c.b16 %v3447, %v3443
    %v3476 = vpack.c.b16 %v3452, %v3448
    %v3477 = vpack.c.b16 %v3453, %v3449
    %v3478 = vpack.c.b16 %v3454, %v3450
    %v3479 = vpack.c.b16 %v3455, %v3451
    %v3480 = vpack.c.b16 %v3460, %v3456
    %v3481 = vpack.c.b16 %v3461, %v3457
    %v3482 = vpack.c.b16 %v3462, %v3458
    %v3483 = vpack.c.b16 %v3463, %v3459
    %v3484 = vpack.c.b16 %v3468, %v3464
    %v3485 = vpack.c.b16 %v3469, %v3465
    %v3486 = vpack.c.b16 %v3470, %v3466
    %v3487 = vpack.c.b16 %v3471, %v3467
    %v3505 = vsel %vm2141, %v3423, 0
    %3507 = vmatprep.subr.bf16.mxu0 0
    %3508 = vmatpush1.bf16.msra.mxu0 0
    %3509 = vmatprep.subr.bf16.mxu0 0
    %3510 = vmatpush1.bf16.msra.mxu0 0
    %3511 = vmatprep.subr.bf16.mxu0 0
    %3512 = vmatpush1.bf16.msra.mxu0 0
    %3513 = vmatprep.subr.bf16.mxu0 0
    %3514 = vmatpush1.bf16.msra.mxu0 0
    %3515 = vmatprep.subr.bf16.mxu0 %v3485
    %3516 = vmatpush1.bf16.msra.mxu0 %v3484
    %3517 = vmatprep.subr.bf16.mxu0 %v3481
    %3518 = vmatpush1.bf16.msra.mxu0 %v3480
    %3519 = vmatprep.subr.bf16.mxu0 %v3477
    %3520 = vmatpush1.bf16.msra.mxu0 %v3476
    %3521 = vmatprep.subr.bf16.mxu0 %v3473
    %3522 = vmatpush1.bf16.msra.mxu0 %v3472
    %3523 = vmatprep.subr.bf16.mxu0 0
    %3524 = vmatpush2.bf16.msra.mxu0 0
    %3525 = vmatprep.subr.bf16.mxu0 0
    %3526 = vmatpush2.bf16.msra.mxu0 0
    %3527 = vmatprep.subr.bf16.mxu0 0
    %3528 = vmatpush2.bf16.msra.mxu0 0
    %3529 = vmatprep.subr.bf16.mxu0 0
    %3530 = vmatpush2.bf16.msra.mxu0 0
    %3531 = vmatprep.subr.bf16.mxu0 0
    %3532 = vmatpush2.bf16.msra.mxu0 0
    %3533 = vmatprep.subr.bf16.mxu0 0
    %3534 = vmatpush2.bf16.msra.mxu0 0
    %3535 = vmatprep.subr.bf16.mxu0 0
    %3536 = vmatpush2.bf16.msra.mxu0 0
    %3537 = vmatprep.subr.bf16.mxu0 0
    %3538 = vmatpush2.bf16.msra.mxu0 0
    %3539 = vmatprep.mubr.bf16.mxu0 0
    %3540 = vmatmul.mubr.bf16.gmra.mxu0 %v3505
    %v3541 = vpop.f32.mrf.mxu0
    %v3542 = vadd.f32 0.0, %v3541
    %v3543 = vpop.f32.mrf.mxu0
    %v3544 = vadd.f32 0.0, %v3543
    %v3545 = vpop.f32.mrf.mxu0
    %v3546 = vpop.f32.mrf.mxu0
    %3547 = vdwg.mxu0
    %3548 = vmatprep.subr.bf16.mxu0 0
    %3549 = vmatpush1.bf16.msra.mxu0 0
    %3550 = vmatprep.subr.bf16.mxu0 0
    %3551 = vmatpush1.bf16.msra.mxu0 0
    %3552 = vmatprep.subr.bf16.mxu0 0
    %3553 = vmatpush1.bf16.msra.mxu0 0
    %3554 = vmatprep.subr.bf16.mxu0 0
    %3555 = vmatpush1.bf16.msra.mxu0 0
    %3556 = vmatprep.subr.bf16.mxu0 %v3487
    %3557 = vmatpush1.bf16.msra.mxu0 %v3486
    %3558 = vmatprep.subr.bf16.mxu0 %v3483
    %3559 = vmatpush1.bf16.msra.mxu0 %v3482
    %3560 = vmatprep.subr.bf16.mxu0 %v3479
    %3561 = vmatpush1.bf16.msra.mxu0 %v3478
    %3562 = vmatprep.subr.bf16.mxu0 %v3475
    %3563 = vmatpush1.bf16.msra.mxu0 %v3474
    %3564 = vmatprep.subr.bf16.mxu0 0
    %3565 = vmatpush2.bf16.msra.mxu0 0
    %3566 = vmatprep.subr.bf16.mxu0 0
    %3567 = vmatpush2.bf16.msra.mxu0 0
    %3568 = vmatprep.subr.bf16.mxu0 0
    %3569 = vmatpush2.bf16.msra.mxu0 0
    %3570 = vmatprep.subr.bf16.mxu0 0
    %3571 = vmatpush2.bf16.msra.mxu0 0
    %3572 = vmatprep.subr.bf16.mxu0 0
    %3573 = vmatpush2.bf16.msra.mxu0 0
    %3574 = vmatprep.subr.bf16.mxu0 0
    %3575 = vmatpush2.bf16.msra.mxu0 0
    %3576 = vmatprep.subr.bf16.mxu0 0
    %3577 = vmatpush2.bf16.msra.mxu0 0
    %3578 = vmatprep.subr.bf16.mxu0 0
    %3579 = vmatpush2.bf16.msra.mxu0 0
    %3580 = vmatprep.mubr.bf16.mxu0 0
    %3581 = vmatmul.mubr.bf16.gmra.mxu0 %v3505
    %v3582 = vpop.f32.mrf.mxu0
    %v3583 = vadd.f32 0.0, %v3582
    %v3584 = vpop.f32.mrf.mxu0
    %v3585 = vadd.f32 0.0, %v3584
    %v3586 = vpop.f32.mrf.mxu0
    %v3587 = vpop.f32.mrf.mxu0
    %3588 = vdwg.mxu0
    %v3589 = vadd.f32 %v3401, %v3542
    %v3590 = vadd.f32 %v3402, %v3544
    %v3591 = vadd.f32 %v3403, %v3583
    %v3592 = vadd.f32 %v3404, %v3585
    %v3593 = vld [vmem:[%s7 + $0x100] sm:$0xff]
    %v3594 = vld [vmem:[%s7 + $0x108] sm:$0xff]
    %v3595 = vld [vmem:[%s7 + $0x110] sm:$0xff]
    %v3596 = vld [vmem:[%s7 + $0x118] sm:$0xff]
    %v3597 = vld [vmem:[%s7 + $0x120] sm:$0xff]
    %v3598 = vld [vmem:[%s7 + $0x128] sm:$0xff]
    %v3599 = vld [vmem:[%s7 + $0x130] sm:$0xff]
    %v3600 = vld [vmem:[%s7 + $0x138] sm:$0xff]
    %v3601 = vld [vmem:[%s7 + $0x140] sm:$0xff]
    %v3602 = vld [vmem:[%s7 + $0x148] sm:$0xff]
    %v3603 = vld [vmem:[%s7 + $0x150] sm:$0xff]
    %v3604 = vld [vmem:[%s7 + $0x158] sm:$0xff]
    %v3605 = vld [vmem:[%s7 + $0x160] sm:$0xff]
    %v3606 = vld [vmem:[%s7 + $0x168] sm:$0xff]
    %v3607 = vld [vmem:[%s7 + $0x170] sm:$0xff]
    %v3608 = vld [vmem:[%s7 + $0x178] sm:$0xff]
    %v3610 = vunpack.c.l.s4 1966171168
    %v3611 = vunpack.c.0.s8 %v3610
    %v3612 = vlaneseq
    %v3613 = vshrl.u32 %v3612, 7
    %v3614 = vsub.s32 %v3611, %v3613
    %v3615 = vrot.slane %v3161, %v3614
    %v3617 = vunpack.c.l.s4 1966171168
    %v3618 = vunpack.c.0.s8 %v3617
    %v3619 = vlaneseq
    %v3620 = vshrl.u32 %v3619, 7
    %v3621 = vsub.s32 %v3618, %v3620
    %v3622 = vrot.slane %v3615, %v3621
    %v3624 = vunpack.c.l.s4 1966171168
    %v3625 = vunpack.c.0.s8 %v3624
    %v3626 = vlaneseq
    %v3627 = vshrl.u32 %v3626, 7
    %v3628 = vsub.s32 %v3625, %v3627
    %v3629 = vrot.slane %v3163, %v3628
    %v3631 = vunpack.c.l.s4 1966171168
    %v3632 = vunpack.c.0.s8 %v3631
    %v3633 = vlaneseq
    %v3634 = vshrl.u32 %v3633, 7
    %v3635 = vsub.s32 %v3632, %v3634
    %v3636 = vrot.slane %v3629, %v3635
    %v3637 = vunpack.c.l.b16 %v3622
    %v3638 = vunpack.c.l.b16 %v3636
    %v3639 = vrot.slane %v3638, 7
    %v3640 = vsel %vm3233, %v3639, %v3637
    %v3641 = vpack.c.b16 %v3640, %v3640
    %v3658 = vunpack.c.l.b16 %v3593
    %v3659 = vunpack.c.h.b16 %v3593
    %v3660 = vunpack.c.l.b16 %v3594
    %v3661 = vunpack.c.h.b16 %v3594
    %v3662 = vunpack.c.l.b16 %v3595
    %v3663 = vunpack.c.h.b16 %v3595
    %v3664 = vunpack.c.l.b16 %v3596
    %v3665 = vunpack.c.h.b16 %v3596
    %v3666 = vunpack.c.l.b16 %v3597
    %v3667 = vunpack.c.h.b16 %v3597
    %v3668 = vunpack.c.l.b16 %v3598
    %v3669 = vunpack.c.h.b16 %v3598
    %v3670 = vunpack.c.l.b16 %v3599
    %v3671 = vunpack.c.h.b16 %v3599
    %v3672 = vunpack.c.l.b16 %v3600
    %v3673 = vunpack.c.h.b16 %v3600
    %v3674 = vunpack.c.l.b16 %v3601
    %v3675 = vunpack.c.h.b16 %v3601
    %v3676 = vunpack.c.l.b16 %v3602
    %v3677 = vunpack.c.h.b16 %v3602
    %v3678 = vunpack.c.l.b16 %v3603
    %v3679 = vunpack.c.h.b16 %v3603
    %v3680 = vunpack.c.l.b16 %v3604
    %v3681 = vunpack.c.h.b16 %v3604
    %v3682 = vunpack.c.l.b16 %v3605
    %v3683 = vunpack.c.h.b16 %v3605
    %v3684 = vunpack.c.l.b16 %v3606
    %v3685 = vunpack.c.h.b16 %v3606
    %v3686 = vunpack.c.l.b16 %v3607
    %v3687 = vunpack.c.h.b16 %v3607
    %v3688 = vunpack.c.l.b16 %v3608
    %v3689 = vunpack.c.h.b16 %v3608
    %v3690 = vpack.c.b16 %v3662, %v3658
    %v3691 = vpack.c.b16 %v3663, %v3659
    %v3692 = vpack.c.b16 %v3664, %v3660
    %v3693 = vpack.c.b16 %v3665, %v3661
    %v3694 = vpack.c.b16 %v3670, %v3666
    %v3695 = vpack.c.b16 %v3671, %v3667
    %v3696 = vpack.c.b16 %v3672, %v3668
    %v3697 = vpack.c.b16 %v3673, %v3669
    %v3698 = vpack.c.b16 %v3678, %v3674
    %v3699 = vpack.c.b16 %v3679, %v3675
    %v3700 = vpack.c.b16 %v3680, %v3676
    %v3701 = vpack.c.b16 %v3681, %v3677
    %v3702 = vpack.c.b16 %v3686, %v3682
    %v3703 = vpack.c.b16 %v3687, %v3683
    %v3704 = vpack.c.b16 %v3688, %v3684
    %v3705 = vpack.c.b16 %v3689, %v3685
    %v3723 = vsel %vm2141, %v3641, 0
    %3725 = vmatprep.subr.bf16.mxu0 0
    %3726 = vmatpush1.bf16.msra.mxu0 0
    %3727 = vmatprep.subr.bf16.mxu0 0
    %3728 = vmatpush1.bf16.msra.mxu0 0
    %3729 = vmatprep.subr.bf16.mxu0 0
    %3730 = vmatpush1.bf16.msra.mxu0 0
    %3731 = vmatprep.subr.bf16.mxu0 0
    %3732 = vmatpush1.bf16.msra.mxu0 0
    %3733 = vmatprep.subr.bf16.mxu0 %v3703
    %3734 = vmatpush1.bf16.msra.mxu0 %v3702
    %3735 = vmatprep.subr.bf16.mxu0 %v3699
    %3736 = vmatpush1.bf16.msra.mxu0 %v3698
    %3737 = vmatprep.subr.bf16.mxu0 %v3695
    %3738 = vmatpush1.bf16.msra.mxu0 %v3694
    %3739 = vmatprep.subr.bf16.mxu0 %v3691
    %3740 = vmatpush1.bf16.msra.mxu0 %v3690
    %3741 = vmatprep.subr.bf16.mxu0 0
    %3742 = vmatpush2.bf16.msra.mxu0 0
    %3743 = vmatprep.subr.bf16.mxu0 0
    %3744 = vmatpush2.bf16.msra.mxu0 0
    %3745 = vmatprep.subr.bf16.mxu0 0
    %3746 = vmatpush2.bf16.msra.mxu0 0
    %3747 = vmatprep.subr.bf16.mxu0 0
    %3748 = vmatpush2.bf16.msra.mxu0 0
    %3749 = vmatprep.subr.bf16.mxu0 0
    %3750 = vmatpush2.bf16.msra.mxu0 0
    %3751 = vmatprep.subr.bf16.mxu0 0
    %3752 = vmatpush2.bf16.msra.mxu0 0
    %3753 = vmatprep.subr.bf16.mxu0 0
    %3754 = vmatpush2.bf16.msra.mxu0 0
    %3755 = vmatprep.subr.bf16.mxu0 0
    %3756 = vmatpush2.bf16.msra.mxu0 0
    %3757 = vmatprep.mubr.bf16.mxu0 0
    %3758 = vmatmul.mubr.bf16.gmra.mxu0 %v3723
    %v3759 = vpop.f32.mrf.mxu0
    %v3760 = vadd.f32 0.0, %v3759
    %v3761 = vpop.f32.mrf.mxu0
    %v3762 = vadd.f32 0.0, %v3761
    %v3763 = vpop.f32.mrf.mxu0
    %v3764 = vpop.f32.mrf.mxu0
    %3765 = vdwg.mxu0
    %3766 = vmatprep.subr.bf16.mxu0 0
    %3767 = vmatpush1.bf16.msra.mxu0 0
    %3768 = vmatprep.subr.bf16.mxu0 0
    %3769 = vmatpush1.bf16.msra.mxu0 0
    %3770 = vmatprep.subr.bf16.mxu0 0
    %3771 = vmatpush1.bf16.msra.mxu0 0
    %3772 = vmatprep.subr.bf16.mxu0 0
    %3773 = vmatpush1.bf16.msra.mxu0 0
    %3774 = vmatprep.subr.bf16.mxu0 %v3705
    %3775 = vmatpush1.bf16.msra.mxu0 %v3704
    %3776 = vmatprep.subr.bf16.mxu0 %v3701
    %3777 = vmatpush1.bf16.msra.mxu0 %v3700
    %3778 = vmatprep.subr.bf16.mxu0 %v3697
    %3779 = vmatpush1.bf16.msra.mxu0 %v3696
    %3780 = vmatprep.subr.bf16.mxu0 %v3693
    %3781 = vmatpush1.bf16.msra.mxu0 %v3692
    %3782 = vmatprep.subr.bf16.mxu0 0
    %3783 = vmatpush2.bf16.msra.mxu0 0
    %3784 = vmatprep.subr.bf16.mxu0 0
    %3785 = vmatpush2.bf16.msra.mxu0 0
    %3786 = vmatprep.subr.bf16.mxu0 0
    %3787 = vmatpush2.bf16.msra.mxu0 0
    %3788 = vmatprep.subr.bf16.mxu0 0
    %3789 = vmatpush2.bf16.msra.mxu0 0
    %3790 = vmatprep.subr.bf16.mxu0 0
    %3791 = vmatpush2.bf16.msra.mxu0 0
    %3792 = vmatprep.subr.bf16.mxu0 0
    %3793 = vmatpush2.bf16.msra.mxu0 0
    %3794 = vmatprep.subr.bf16.mxu0 0
    %3795 = vmatpush2.bf16.msra.mxu0 0
    %3796 = vmatprep.subr.bf16.mxu0 0
    %3797 = vmatpush2.bf16.msra.mxu0 0
    %3798 = vmatprep.mubr.bf16.mxu0 0
    %3799 = vmatmul.mubr.bf16.gmra.mxu0 %v3723
    %v3800 = vpop.f32.mrf.mxu0
    %v3801 = vadd.f32 0.0, %v3800
    %v3802 = vpop.f32.mrf.mxu0
    %v3803 = vadd.f32 0.0, %v3802
    %v3804 = vpop.f32.mrf.mxu0
    %v3805 = vpop.f32.mrf.mxu0
    %3806 = vdwg.mxu0
    %v3807 = vadd.f32 %v3589, %v3760
    %v3808 = vadd.f32 %v3590, %v3762
    %v3809 = vadd.f32 %v3591, %v3801
    %v3810 = vadd.f32 %v3592, %v3803
    %v3811 = vld [vmem:[%s7 + $0x180] sm:$0xff]
    %v3812 = vld [vmem:[%s7 + $0x188] sm:$0xff]
    %v3813 = vld [vmem:[%s7 + $0x190] sm:$0xff]
    %v3814 = vld [vmem:[%s7 + $0x198] sm:$0xff]
    %v3815 = vld [vmem:[%s7 + $0x1a0] sm:$0xff]
    %v3816 = vld [vmem:[%s7 + $0x1a8] sm:$0xff]
    %v3817 = vld [vmem:[%s7 + $0x1b0] sm:$0xff]
    %v3818 = vld [vmem:[%s7 + $0x1b8] sm:$0xff]
    %v3819 = vld [vmem:[%s7 + $0x1c0] sm:$0xff]
    %v3820 = vld [vmem:[%s7 + $0x1c8] sm:$0xff]
    %v3821 = vld [vmem:[%s7 + $0x1d0] sm:$0xff]
    %v3822 = vld [vmem:[%s7 + $0x1d8] sm:$0xff]
    %v3823 = vld [vmem:[%s7 + $0x1e0] sm:$0xff]
    %v3824 = vld [vmem:[%s7 + $0x1e8] sm:$0xff]
    %v3825 = vld [vmem:[%s7 + $0x1f0] sm:$0xff]
    %v3826 = vld [vmem:[%s7 + $0x1f8] sm:$0xff]
    %v3827 = vrot.slane %v3637, 1
    %v3828 = vsel %vm3233, %v3638, %v3827
    %v3829 = vpack.c.b16 %v3828, %v3828
    %v3846 = vunpack.c.l.b16 %v3811
    %v3847 = vunpack.c.h.b16 %v3811
    %v3848 = vunpack.c.l.b16 %v3812
    %v3849 = vunpack.c.h.b16 %v3812
    %v3850 = vunpack.c.l.b16 %v3813
    %v3851 = vunpack.c.h.b16 %v3813
    %v3852 = vunpack.c.l.b16 %v3814
    %v3853 = vunpack.c.h.b16 %v3814
    %v3854 = vunpack.c.l.b16 %v3815
    %v3855 = vunpack.c.h.b16 %v3815
    %v3856 = vunpack.c.l.b16 %v3816
    %v3857 = vunpack.c.h.b16 %v3816
    %v3858 = vunpack.c.l.b16 %v3817
    %v3859 = vunpack.c.h.b16 %v3817
    %v3860 = vunpack.c.l.b16 %v3818
    %v3861 = vunpack.c.h.b16 %v3818
    %v3862 = vunpack.c.l.b16 %v3819
    %v3863 = vunpack.c.h.b16 %v3819
    %v3864 = vunpack.c.l.b16 %v3820
    %v3865 = vunpack.c.h.b16 %v3820
    %v3866 = vunpack.c.l.b16 %v3821
    %v3867 = vunpack.c.h.b16 %v3821
    %v3868 = vunpack.c.l.b16 %v3822
    %v3869 = vunpack.c.h.b16 %v3822
    %v3870 = vunpack.c.l.b16 %v3823
    %v3871 = vunpack.c.h.b16 %v3823
    %v3872 = vunpack.c.l.b16 %v3824
    %v3873 = vunpack.c.h.b16 %v3824
    %v3874 = vunpack.c.l.b16 %v3825
    %v3875 = vunpack.c.h.b16 %v3825
    %v3876 = vunpack.c.l.b16 %v3826
    %v3877 = vunpack.c.h.b16 %v3826
    %v3878 = vpack.c.b16 %v3850, %v3846
    %v3879 = vpack.c.b16 %v3851, %v3847
    %v3880 = vpack.c.b16 %v3852, %v3848
    %v3881 = vpack.c.b16 %v3853, %v3849
    %v3882 = vpack.c.b16 %v3858, %v3854
    %v3883 = vpack.c.b16 %v3859, %v3855
    %v3884 = vpack.c.b16 %v3860, %v3856
    %v3885 = vpack.c.b16 %v3861, %v3857
    %v3886 = vpack.c.b16 %v3866, %v3862
    %v3887 = vpack.c.b16 %v3867, %v3863
    %v3888 = vpack.c.b16 %v3868, %v3864
    %v3889 = vpack.c.b16 %v3869, %v3865
    %v3890 = vpack.c.b16 %v3874, %v3870
    %v3891 = vpack.c.b16 %v3875, %v3871
    %v3892 = vpack.c.b16 %v3876, %v3872
    %v3893 = vpack.c.b16 %v3877, %v3873
    %v3911 = vsel %vm2141, %v3829, 0
    %3913 = vmatprep.subr.bf16.mxu0 0
    %3914 = vmatpush1.bf16.msra.mxu0 0
    %3915 = vmatprep.subr.bf16.mxu0 0
    %3916 = vmatpush1.bf16.msra.mxu0 0
    %3917 = vmatprep.subr.bf16.mxu0 0
    %3918 = vmatpush1.bf16.msra.mxu0 0
    %3919 = vmatprep.subr.bf16.mxu0 0
    %3920 = vmatpush1.bf16.msra.mxu0 0
    %3921 = vmatprep.subr.bf16.mxu0 %v3891
    %3922 = vmatpush1.bf16.msra.mxu0 %v3890
    %3923 = vmatprep.subr.bf16.mxu0 %v3887
    %3924 = vmatpush1.bf16.msra.mxu0 %v3886
    %3925 = vmatprep.subr.bf16.mxu0 %v3883
    %3926 = vmatpush1.bf16.msra.mxu0 %v3882
    %3927 = vmatprep.subr.bf16.mxu0 %v3879
    %3928 = vmatpush1.bf16.msra.mxu0 %v3878
    %3929 = vmatprep.subr.bf16.mxu0 0
    %3930 = vmatpush2.bf16.msra.mxu0 0
    %3931 = vmatprep.subr.bf16.mxu0 0
    %3932 = vmatpush2.bf16.msra.mxu0 0
    %3933 = vmatprep.subr.bf16.mxu0 0
    %3934 = vmatpush2.bf16.msra.mxu0 0
    %3935 = vmatprep.subr.bf16.mxu0 0
    %3936 = vmatpush2.bf16.msra.mxu0 0
    %3937 = vmatprep.subr.bf16.mxu0 0
    %3938 = vmatpush2.bf16.msra.mxu0 0
    %3939 = vmatprep.subr.bf16.mxu0 0
    %3940 = vmatpush2.bf16.msra.mxu0 0
    %3941 = vmatprep.subr.bf16.mxu0 0
    %3942 = vmatpush2.bf16.msra.mxu0 0
    %3943 = vmatprep.subr.bf16.mxu0 0
    %3944 = vmatpush2.bf16.msra.mxu0 0
    %3945 = vmatprep.mubr.bf16.mxu0 0
    %3946 = vmatmul.mubr.bf16.gmra.mxu0 %v3911
    %v3947 = vpop.f32.mrf.mxu0
    %v3948 = vadd.f32 0.0, %v3947
    %v3949 = vpop.f32.mrf.mxu0
    %v3950 = vadd.f32 0.0, %v3949
    %v3951 = vpop.f32.mrf.mxu0
    %v3952 = vpop.f32.mrf.mxu0
    %3953 = vdwg.mxu0
    %3954 = vmatprep.subr.bf16.mxu0 0
    %3955 = vmatpush1.bf16.msra.mxu0 0
    %3956 = vmatprep.subr.bf16.mxu0 0
    %3957 = vmatpush1.bf16.msra.mxu0 0
    %3958 = vmatprep.subr.bf16.mxu0 0
    %3959 = vmatpush1.bf16.msra.mxu0 0
    %3960 = vmatprep.subr.bf16.mxu0 0
    %3961 = vmatpush1.bf16.msra.mxu0 0
    %3962 = vmatprep.subr.bf16.mxu0 %v3893
    %3963 = vmatpush1.bf16.msra.mxu0 %v3892
    %3964 = vmatprep.subr.bf16.mxu0 %v3889
    %3965 = vmatpush1.bf16.msra.mxu0 %v3888
    %3966 = vmatprep.subr.bf16.mxu0 %v3885
    %3967 = vmatpush1.bf16.msra.mxu0 %v3884
    %3968 = vmatprep.subr.bf16.mxu0 %v3881
    %3969 = vmatpush1.bf16.msra.mxu0 %v3880
    %3970 = vmatprep.subr.bf16.mxu0 0
    %3971 = vmatpush2.bf16.msra.mxu0 0
    %3972 = vmatprep.subr.bf16.mxu0 0
    %3973 = vmatpush2.bf16.msra.mxu0 0
    %3974 = vmatprep.subr.bf16.mxu0 0
    %3975 = vmatpush2.bf16.msra.mxu0 0
    %3976 = vmatprep.subr.bf16.mxu0 0
    %3977 = vmatpush2.bf16.msra.mxu0 0
    %3978 = vmatprep.subr.bf16.mxu0 0
    %3979 = vmatpush2.bf16.msra.mxu0 0
    %3980 = vmatprep.subr.bf16.mxu0 0
    %3981 = vmatpush2.bf16.msra.mxu0 0
    %3982 = vmatprep.subr.bf16.mxu0 0
    %3983 = vmatpush2.bf16.msra.mxu0 0
    %3984 = vmatprep.subr.bf16.mxu0 0
    %3985 = vmatpush2.bf16.msra.mxu0 0
    %3986 = vmatprep.mubr.bf16.mxu0 0
    %3987 = vmatmul.mubr.bf16.gmra.mxu0 %v3911
    %v3988 = vpop.f32.mrf.mxu0
    %v3989 = vadd.f32 0.0, %v3988
    %v3990 = vpop.f32.mrf.mxu0
    %v3991 = vadd.f32 0.0, %v3990
    %v3992 = vpop.f32.mrf.mxu0
    %v3993 = vpop.f32.mrf.mxu0
    %3994 = vdwg.mxu0
    %v3995 = vadd.f32 %v3807, %v3948
    %v3996 = vadd.f32 %v3808, %v3950
    %v3997 = vadd.f32 %v3809, %v3989
    %v3998 = vadd.f32 %v3810, %v3991
    %v3999 = vmax.f32 %v3995, 0.0
    %v4000 = vmax.f32 %v3996, 0.0
    %v4001 = vmax.f32 %v3997, 0.0
    %v4002 = vmax.f32 %v3998, 0.0
    %v4003 = vld [vmem:[%s9] sm:$0xff]
    %v4004 = vld [vmem:[%s9 + $0x8] sm:$0xff]
    %v4005 = vld [vmem:[%s9 + $0x10] sm:$0xff]
    %v4006 = vld [vmem:[%s9 + $0x18] sm:$0xff]
    %v4007 = vld [vmem:[%s9 + $0x20] sm:$0xff]
    %v4008 = vld [vmem:[%s9 + $0x28] sm:$0xff]
    %v4009 = vld [vmem:[%s9 + $0x30] sm:$0xff]
    %v4010 = vld [vmem:[%s9 + $0x38] sm:$0xff]
    %v4011 = vld [vmem:[%s9 + $0x40] sm:$0xff]
    %v4012 = vld [vmem:[%s9 + $0x48] sm:$0xff]
    %v4013 = vld [vmem:[%s9 + $0x50] sm:$0xff]
    %v4014 = vld [vmem:[%s9 + $0x58] sm:$0xff]
    %v4015 = vld [vmem:[%s9 + $0x60] sm:$0xff]
    %v4016 = vld [vmem:[%s9 + $0x68] sm:$0xff]
    %v4017 = vld [vmem:[%s9 + $0x70] sm:$0xff]
    %v4018 = vld [vmem:[%s9 + $0x78] sm:$0xff]
    %v4019 = vld [vmem:[%s9 + $0x80] sm:$0xff]
    %v4020 = vld [vmem:[%s9 + $0x88] sm:$0xff]
    %v4021 = vld [vmem:[%s9 + $0x90] sm:$0xff]
    %v4022 = vld [vmem:[%s9 + $0x98] sm:$0xff]
    %v4023 = vld [vmem:[%s9 + $0xa0] sm:$0xff]
    %v4024 = vld [vmem:[%s9 + $0xa8] sm:$0xff]
    %v4025 = vld [vmem:[%s9 + $0xb0] sm:$0xff]
    %v4026 = vld [vmem:[%s9 + $0xb8] sm:$0xff]
    %v4027 = vld [vmem:[%s9 + $0xc0] sm:$0xff]
    %v4028 = vld [vmem:[%s9 + $0xc8] sm:$0xff]
    %v4029 = vld [vmem:[%s9 + $0xd0] sm:$0xff]
    %v4030 = vld [vmem:[%s9 + $0xd8] sm:$0xff]
    %v4031 = vld [vmem:[%s9 + $0xe0] sm:$0xff]
    %v4032 = vld [vmem:[%s9 + $0xe8] sm:$0xff]
    %v4033 = vld [vmem:[%s9 + $0xf0] sm:$0xff]
    %v4034 = vld [vmem:[%s9 + $0xf8] sm:$0xff]
    %v4035 = vld [vmem:[%s9 + $0x100] sm:$0xff]
    %v4036 = vld [vmem:[%s9 + $0x108] sm:$0xff]
    %v4037 = vld [vmem:[%s9 + $0x110] sm:$0xff]
    %v4038 = vld [vmem:[%s9 + $0x118] sm:$0xff]
    %v4039 = vld [vmem:[%s9 + $0x120] sm:$0xff]
    %v4040 = vld [vmem:[%s9 + $0x128] sm:$0xff]
    %v4041 = vld [vmem:[%s9 + $0x130] sm:$0xff]
    %v4042 = vld [vmem:[%s9 + $0x138] sm:$0xff]
    %v4043 = vld [vmem:[%s9 + $0x140] sm:$0xff]
    %v4044 = vld [vmem:[%s9 + $0x148] sm:$0xff]
    %v4045 = vld [vmem:[%s9 + $0x150] sm:$0xff]
    %v4046 = vld [vmem:[%s9 + $0x158] sm:$0xff]
    %v4047 = vld [vmem:[%s9 + $0x160] sm:$0xff]
    %v4048 = vld [vmem:[%s9 + $0x168] sm:$0xff]
    %v4049 = vld [vmem:[%s9 + $0x170] sm:$0xff]
    %v4050 = vld [vmem:[%s9 + $0x178] sm:$0xff]
    %v4051 = vld [vmem:[%s9 + $0x180] sm:$0xff]
    %v4052 = vld [vmem:[%s9 + $0x188] sm:$0xff]
    %v4053 = vld [vmem:[%s9 + $0x190] sm:$0xff]
    %v4054 = vld [vmem:[%s9 + $0x198] sm:$0xff]
    %v4055 = vld [vmem:[%s9 + $0x1a0] sm:$0xff]
    %v4056 = vld [vmem:[%s9 + $0x1a8] sm:$0xff]
    %v4057 = vld [vmem:[%s9 + $0x1b0] sm:$0xff]
    %v4058 = vld [vmem:[%s9 + $0x1b8] sm:$0xff]
    %v4059 = vld [vmem:[%s9 + $0x1c0] sm:$0xff]
    %v4060 = vld [vmem:[%s9 + $0x1c8] sm:$0xff]
    %v4061 = vld [vmem:[%s9 + $0x1d0] sm:$0xff]
    %v4062 = vld [vmem:[%s9 + $0x1d8] sm:$0xff]
    %v4063 = vld [vmem:[%s9 + $0x1e0] sm:$0xff]
    %v4064 = vld [vmem:[%s9 + $0x1e8] sm:$0xff]
    %v4065 = vld [vmem:[%s9 + $0x1f0] sm:$0xff]
    %v4066 = vld [vmem:[%s9 + $0x1f8] sm:$0xff]
    %v4067 = vld [vmem:[%s10] sm:$0x1]
    %v4069 = vlaneseq
    %v4070 = vshrl.u32 %v4069, 7
    %v4071 = vsub.s32 0, %v4070
    %v4072 = vrot.slane %v4067, %v4071
    %4074 = vmatprep.subr.mxu0 0.0
    %4075 = vmatpush1.msra.mxu0 %v4018
    %4076 = vmatprep.subr.mxu0 0.0
    %4077 = vmatpush1.msra.mxu0 %v4017
    %4078 = vmatprep.subr.mxu0 0.0
    %4079 = vmatpush1.msra.mxu0 %v4016
    %4080 = vmatprep.subr.mxu0 0.0
    %4081 = vmatpush1.msra.mxu0 %v4015
    %4082 = vmatprep.subr.mxu0 0.0
    %4083 = vmatpush1.msra.mxu0 %v4014
    %4084 = vmatprep.subr.mxu0 0.0
    %4085 = vmatpush1.msra.mxu0 %v4013
    %4086 = vmatprep.subr.mxu0 0.0
    %4087 = vmatpush1.msra.mxu0 %v4012
    %4088 = vmatprep.subr.mxu0 0.0
    %4089 = vmatpush1.msra.mxu0 %v4011
    %4090 = vmatprep.subr.mxu0 0.0
    %4091 = vmatpush1.msra.mxu0 %v4010
    %4092 = vmatprep.subr.mxu0 0.0
    %4093 = vmatpush1.msra.mxu0 %v4009
    %4094 = vmatprep.subr.mxu0 0.0
    %4095 = vmatpush1.msra.mxu0 %v4008
    %4096 = vmatprep.subr.mxu0 0.0
    %4097 = vmatpush1.msra.mxu0 %v4007
    %4098 = vmatprep.subr.mxu0 0.0
    %4099 = vmatpush1.msra.mxu0 %v4006
    %4100 = vmatprep.subr.mxu0 0.0
    %4101 = vmatpush1.msra.mxu0 %v4005
    %4102 = vmatprep.subr.mxu0 0.0
    %4103 = vmatpush1.msra.mxu0 %v4004
    %4104 = vmatprep.subr.mxu0 0.0
    %4105 = vmatpush1.msra.mxu0 %v4003
    %4106 = vmatprep.subr.mxu0 0.0
    %4107 = vmatpush2.msra.mxu0 %v4034
    %4108 = vmatprep.subr.mxu0 0.0
    %4109 = vmatpush2.msra.mxu0 %v4033
    %4110 = vmatprep.subr.mxu0 0.0
    %4111 = vmatpush2.msra.mxu0 %v4032
    %4112 = vmatprep.subr.mxu0 0.0
    %4113 = vmatpush2.msra.mxu0 %v4031
    %4114 = vmatprep.subr.mxu0 0.0
    %4115 = vmatpush2.msra.mxu0 %v4030
    %4116 = vmatprep.subr.mxu0 0.0
    %4117 = vmatpush2.msra.mxu0 %v4029
    %4118 = vmatprep.subr.mxu0 0.0
    %4119 = vmatpush2.msra.mxu0 %v4028
    %4120 = vmatprep.subr.mxu0 0.0
    %4121 = vmatpush2.msra.mxu0 %v4027
    %4122 = vmatprep.subr.mxu0 0.0
    %4123 = vmatpush2.msra.mxu0 %v4026
    %4124 = vmatprep.subr.mxu0 0.0
    %4125 = vmatpush2.msra.mxu0 %v4025
    %4126 = vmatprep.subr.mxu0 0.0
    %4127 = vmatpush2.msra.mxu0 %v4024
    %4128 = vmatprep.subr.mxu0 0.0
    %4129 = vmatpush2.msra.mxu0 %v4023
    %4130 = vmatprep.subr.mxu0 0.0
    %4131 = vmatpush2.msra.mxu0 %v4022
    %4132 = vmatprep.subr.mxu0 0.0
    %4133 = vmatpush2.msra.mxu0 %v4021
    %4134 = vmatprep.subr.mxu0 0.0
    %4135 = vmatpush2.msra.mxu0 %v4020
    %4136 = vmatprep.subr.mxu0 0.0
    %4137 = vmatpush2.msra.mxu0 %v4019
    %4138 = vmatprep.mubr.f32.mxu0 %v4000
    %4139 = vmatmul.mubr.f32.gmra.mxu0 %v3999
    %v4140 = vpop.f32.mrf.mxu0
    %v4141 = vadd.f32 %v4072, %v4140
    %v4142 = vpop.f32.mrf.mxu0
    %4143 = vdwg.mxu0
    %4144 = vmatprep.subr.mxu0 0.0
    %4145 = vmatpush1.msra.mxu0 %v4050
    %4146 = vmatprep.subr.mxu0 0.0
    %4147 = vmatpush1.msra.mxu0 %v4049
    %4148 = vmatprep.subr.mxu0 0.0
    %4149 = vmatpush1.msra.mxu0 %v4048
    %4150 = vmatprep.subr.mxu0 0.0
    %4151 = vmatpush1.msra.mxu0 %v4047
    %4152 = vmatprep.subr.mxu0 0.0
    %4153 = vmatpush1.msra.mxu0 %v4046
    %4154 = vmatprep.subr.mxu0 0.0
    %4155 = vmatpush1.msra.mxu0 %v4045
    %4156 = vmatprep.subr.mxu0 0.0
    %4157 = vmatpush1.msra.mxu0 %v4044
    %4158 = vmatprep.subr.mxu0 0.0
    %4159 = vmatpush1.msra.mxu0 %v4043
    %4160 = vmatprep.subr.mxu0 0.0
    %4161 = vmatpush1.msra.mxu0 %v4042
    %4162 = vmatprep.subr.mxu0 0.0
    %4163 = vmatpush1.msra.mxu0 %v4041
    %4164 = vmatprep.subr.mxu0 0.0
    %4165 = vmatpush1.msra.mxu0 %v4040
    %4166 = vmatprep.subr.mxu0 0.0
    %4167 = vmatpush1.msra.mxu0 %v4039
    %4168 = vmatprep.subr.mxu0 0.0
    %4169 = vmatpush1.msra.mxu0 %v4038
    %4170 = vmatprep.subr.mxu0 0.0
    %4171 = vmatpush1.msra.mxu0 %v4037
    %4172 = vmatprep.subr.mxu0 0.0
    %4173 = vmatpush1.msra.mxu0 %v4036
    %4174 = vmatprep.subr.mxu0 0.0
    %4175 = vmatpush1.msra.mxu0 %v4035
    %4176 = vmatprep.subr.mxu0 0.0
    %4177 = vmatpush2.msra.mxu0 %v4066
    %4178 = vmatprep.subr.mxu0 0.0
    %4179 = vmatpush2.msra.mxu0 %v4065
    %4180 = vmatprep.subr.mxu0 0.0
    %4181 = vmatpush2.msra.mxu0 %v4064
    %4182 = vmatprep.subr.mxu0 0.0
    %4183 = vmatpush2.msra.mxu0 %v4063
    %4184 = vmatprep.subr.mxu0 0.0
    %4185 = vmatpush2.msra.mxu0 %v4062
    %4186 = vmatprep.subr.mxu0 0.0
    %4187 = vmatpush2.msra.mxu0 %v4061
    %4188 = vmatprep.subr.mxu0 0.0
    %4189 = vmatpush2.msra.mxu0 %v4060
    %4190 = vmatprep.subr.mxu0 0.0
    %4191 = vmatpush2.msra.mxu0 %v4059
    %4192 = vmatprep.subr.mxu0 0.0
    %4193 = vmatpush2.msra.mxu0 %v4058
    %4194 = vmatprep.subr.mxu0 0.0
    %4195 = vmatpush2.msra.mxu0 %v4057
    %4196 = vmatprep.subr.mxu0 0.0
    %4197 = vmatpush2.msra.mxu0 %v4056
    %4198 = vmatprep.subr.mxu0 0.0
    %4199 = vmatpush2.msra.mxu0 %v4055
    %4200 = vmatprep.subr.mxu0 0.0
    %4201 = vmatpush2.msra.mxu0 %v4054
    %4202 = vmatprep.subr.mxu0 0.0
    %4203 = vmatpush2.msra.mxu0 %v4053
    %4204 = vmatprep.subr.mxu0 0.0
    %4205 = vmatpush2.msra.mxu0 %v4052
    %4206 = vmatprep.subr.mxu0 0.0
    %4207 = vmatpush2.msra.mxu0 %v4051
    %4208 = vmatprep.mubr.f32.mxu0 %v4002
    %4209 = vmatmul.mubr.f32.gmra.mxu0 %v4001
    %v4210 = vpop.f32.mrf.mxu0
    %v4211 = vadd.f32 %v4141, %v4210
    %v4212 = vpop.f32.mrf.mxu0
    %4213 = vdwg.mxu0
    %4214 = vst [vmem:[#allocation2] sm:$0x3] %v4211
    // Predicated region
    $region46: #{simple_dqn_forward.1} parent=1 // pred_check
      _
    $region47: #{simple_dqn_forward.1} parent=1 // pred_check_branch
      %4216 = sbr.rel (0) target = $region49
    $region48: #{simple_dqn_forward.1} parent=1 // pred_region
      %s4218 = ssub.s32 32, 32
      %4219 = vsyncadd [#allocation3], %s4218
      %s4221 = sshll.u32 [#allocation2], 4
      %s4222 = int_to_ptr.vmem [resolvable:$true] %s4221
      %4224 = dma.vmem_to_hbm [thread:$0]  %s4222, 32, %s11, [#allocation3]
    $region49: #{simple_dqn_forward.1} parent=1 // pred_fallthru
      _
    // Predicated region
    $region50: #{simple_dqn_forward.1} parent=1 // pred_check
      _
    $region51: #{simple_dqn_forward.1} parent=1 // pred_check_branch
      %4226 = sbr.rel (0) target = $region53
    $region52: #{simple_dqn_forward.1} parent=1 // pred_region
      %4227 = dma.done [#allocation3], 32
    $region53: #{simple_dqn_forward.1} parent=1 // pred_fallthru
      _
    %4228 = vsyncpa [#allocation3], 1

</llo_original>
